<compile_context>
chip_gen: v7x
topology: tpu7x:2x2x1
jax: 0.10.0
libtpu: 0.0.40
codegen_flags: <defaults>
</compile_context>

<pallas_src>
import functools

import jax
import jax.numpy as jnp
import numpy as np
from jax.experimental import pallas as pl
from jax.experimental.pallas import tpu as pltpu

LEAKY_SLOPE = 0.2
BN_EPS = 1e-5
K = 4  # conv kernel size (4x4, stride 2, pad 1 throughout)

# Transposed-conv tap table.  Output rows 2m+qr only mix taps of one kh parity:
#   qr=0 (even out rows):  (rpad row offset 1, kh=1), (offset 0, kh=3)
#   qr=1 (odd  out rows):  (rpad row offset 2, kh=0), (offset 1, kh=2)
# The same table applies to columns / kw.
TAPS = (((1, 1), (0, 3)),
        ((2, 0), (1, 2)))


def _leaky_relu(x):
    return jnp.where(x >= 0, x, LEAKY_SLOPE * x)


# ---------------------------------------------------------------------------
# Kernel 1: LeakyReLU -> Conv(4,2,1) -> ReLU -> ConvTranspose(4,2,1)
#           + per-block BatchNorm partial sums.  Grid over batch blocks.
# ---------------------------------------------------------------------------
def _conv_block_kernel(xph_ref, wd_ref, wu_ref, u_ref, stats_ref, rpad_ref):
    # xph_ref  : (nb, 4, Ho+1, Wo+1, c_in) f32   zero-padded input, split into
    #            (row,col)-parity phases; phase index = 2*pr + pc.
    # wd_ref   : (16*c_in, c_mid)  compute dtype   down-conv weight, tap-major.
    # wu_ref   : (2, 2, 4*c_mid, c_out) compute dtype   per-output-phase up-conv
    #            weight with its 4 contributing taps stacked on the contraction dim.
    # u_ref    : (nb, 2, 2, Ho, Wo, c_out)   un-normalized up-conv output (phase-major).
    # stats_ref: (1, 2, c_out) f32   [sum(u), sum(u*u)] over this batch block.
    # rpad_ref : (nb, Ho+2, Wo+2, c_mid) compute dtype scratch (zero-padded ReLU out).
    nb, _, hp, wp, c_in = xph_ref.shape
    ho, wo = hp - 1, wp - 1
    c_mid = rpad_ref.shape[-1]
    c_out = u_ref.shape[-1]
    rows = nb * ho * wo
    cdt = rpad_ref.dtype

    # LeakyReLU once over the whole block (hoisted out of the tap loop), then
    # cast once to the MXU compute dtype.
    xa = _leaky_relu(xph_ref[...].astype(jnp.float32)).astype(cdt)

    # ---- down conv: fold the 16 taps into the contraction dim (im2col) so the
    # MXU sees one (rows, 16*c_in) @ (16*c_in, c_mid) matmul instead of 16
    # shallow ones.
    cols = []
    for kh in range(K):
        for kw in range(K):
            pr, sr = kh % 2, kh // 2
            pc, sc = kw % 2, kw // 2
            cols.append(
                xa[:, 2 * pr + pc, sr:sr + ho, sc:sc + wo, :].reshape(rows, c_in))
    im2col = jnp.concatenate(cols, axis=1)                       # (rows, 16*c_in)
    d = jnp.dot(im2col, wd_ref[...], preferred_element_type=jnp.float32)
    r = jnp.maximum(d, 0.0).astype(cdt)                          # the "uprelu"

    # Stage ReLU output in a zero-padded scratch so every transposed-conv tap
    # below is a contiguous static slice.  Only the thin 1-pixel border is
    # zeroed each step (cheap, and -- unlike a program_id==0 guard -- correct
    # under megacore grid sharding where a core may never see step 0).
    z_row = jnp.zeros((nb, 1, wo + 2, c_mid), cdt)
    z_col = jnp.zeros((nb, ho + 2, 1, c_mid), cdt)
    rpad_ref[:, 0:1, :, :] = z_row
    rpad_ref[:, ho + 1:ho + 2, :, :] = z_row
    rpad_ref[:, :, 0:1, :] = z_col
    rpad_ref[:, :, wo + 1:wo + 2, :] = z_col
    rpad_ref[:, 1:ho + 1, 1:wo + 1, :] = r.reshape(nb, ho, wo, c_mid)

    # Hoist the 9 distinct shifted windows of rpad (each slice materializes a
    # VMEM copy; the 4 phases reuse them).
    win = {}
    for orow in (0, 1, 2):
        for ocol in (0, 1, 2):
            win[(orow, ocol)] = rpad_ref[:, orow:orow + ho,
                                         ocol:ocol + wo, :].reshape(rows, c_mid)

    # ---- transposed conv: per output phase, concatenate its 4 taps on the
    # contraction dim -> one (rows, 4*c_mid) @ (4*c_mid, c_out) matmul.
    ssum = jnp.zeros((1, c_out), jnp.float32)
    ssq = jnp.zeros((1, c_out), jnp.float32)
    for qr in range(2):
        for qc in range(2):
            rcat = jnp.concatenate(
                [win[(orow, ocol)]
                 for (orow, _) in TAPS[qr] for (ocol, _) in TAPS[qc]], axis=1)
            u = jnp.dot(rcat, wu_ref[qr, qc],
                        preferred_element_type=jnp.float32)      # (rows, c_out)
            u_ref[:, qr:qr + 1, qc:qc + 1, :, :, :] = (
                u.reshape(nb, 1, 1, ho, wo, c_out).astype(u_ref.dtype))
            ssum = ssum + jnp.sum(u, axis=0, keepdims=True)
            ssq = ssq + jnp.sum(u * u, axis=0, keepdims=True)
    stats_ref[...] = jnp.concatenate([ssum, ssq], axis=0)[None]


# ---------------------------------------------------------------------------
# Kernel 2: BatchNorm apply (single scale/shift FMA) + skip concat.
#           Grid over batch blocks; x is re-read from the phase-split input.
# ---------------------------------------------------------------------------
def _bn_concat_kernel(xph_ref, u_ref, scale_ref, shift_ref, o_ref):
    # xph_ref : (nb, 4, Ho+1, Wo+1, c_in) f32   (reused skip-path source)
    # u_ref   : (nb, 2, 2, Ho, Wo, c_out)       un-normalized up-conv output
    # scale_ref, shift_ref : (1, c_out) f32     folded BN scale / shift
    # o_ref   : (nb, 2, 2, Ho, Wo, c_in+c_out) f32   phase-major concat output
    nb, _, hp, wp, c_in = xph_ref.shape
    ho, wo = hp - 1, wp - 1
    c_out = u_ref.shape[-1]
    scale = scale_ref[...].reshape(1, 1, 1, c_out)
    shift = shift_ref[...].reshape(1, 1, 1, c_out)
    xph = xph_ref[...]
    u = u_ref[...].astype(jnp.float32)
    for qr in range(2):
        for qc in range(2):
            # x[2i+qr, 2j+qc] lives in padded-phase (1-qr, 1-qc) at [i+qr, j+qc].
            ph = 2 * (1 - qr) + (1 - qc)
            x_q = xph[:, ph, qr:qr + ho, qc:qc + wo, :]
            u_q = u[:, qr, qc] * scale + shift
            o_ref[:, qr:qr + 1, qc:qc + 1, :, :, :] = (
                jnp.concatenate([x_q, u_q], axis=-1)
                .reshape(nb, 1, 1, ho, wo, c_in + c_out).astype(o_ref.dtype))


# ---------------------------------------------------------------------------
# Wrapper helpers.
# ---------------------------------------------------------------------------
def _pick_batch_block(n, rows_per_img, max_rows=4096):
    """Largest divisor nb of n with nb*rows_per_img <= max_rows that keeps at
    least two grid steps (pipelining + v7x's second TensorCore) when n >= 2."""
    nb = 1
    for cand in range(1, n + 1):
        if n % cand:
            continue
        if cand * rows_per_img > max_rows:
            break
        if n // cand >= 2 or n == 1:
            nb = cand
    return nb


def _k1_vmem_limit(nb, hp, wp, ho, wo, c_in, c_mid, c_out, cbytes):
    """Explicit per-step VMEM budget: double-buffered in/out blocks, resident
    weights, rpad scratch and live matmul temporaries, plus margin."""
    rows = nb * ho * wo
    inp = nb * 4 * hp * wp * c_in * 4                          # xph block (f32)
    wts = (16 * c_in * c_mid + 16 * c_mid * c_out) * cbytes    # wd + wu
    outp = nb * 4 * ho * wo * c_out * cbytes + 2 * c_out * 4   # u + stats
    scratch = nb * (ho + 2) * (wo + 2) * c_mid * cbytes
    temps = (rows * 16 * c_in + 9 * rows * c_mid + rows * 4 * c_mid) * cbytes \
            + rows * (c_mid + c_out) * 4                       # f32 accumulators
    est = 2 * (inp + outp) + 2 * wts + scratch + temps
    # TODO(synk): re-derive the cap per generation (64 MiB physical on v7x).
    return int(min(max(2 * est + (8 << 20), 32 << 20), 100 << 20))


def unet_skip_block_forward(x_nchw, params, compute_dtype=jnp.bfloat16):
    """Innermost UnetSkipConnectionBlock forward.

    x_nchw: (N, input_nc, H, W) float32.
    Returns (N, input_nc + outer_nc, H, W) float32  ==  cat([x, model(x)], 1).
    """
    wd_taps, wu_taps, gamma, beta = params
    n, c_in, h, w = x_nchw.shape
    c_mid = wd_taps.shape[2]
    c_out = wu_taps.shape[2]
    assert h % 2 == 0 and w % 2 == 0
    ho, wo = h // 2, w // 2
    hp, wp = ho + 1, wo + 1
    cbytes = jnp.dtype(compute_dtype).itemsize

    # Channels-last, zero-padded, split into (row,col)-parity phases so every
    # stride-2 conv tap in the kernel is a contiguous static slice.  Composed
    # as one expression so XLA fuses the layout work; xph is also reused as the
    # skip-path source in kernel 2 (no separate x_ph rebuild / re-read).
    x_pad = jnp.pad(jnp.transpose(x_nchw, (0, 2, 3, 1)),
                    ((0, 0), (1, 1), (1, 1), (0, 0)))
    xph = jnp.stack([x_pad[:, pr::2, pc::2, :]
                     for pr in range(2) for pc in range(2)], axis=1)
    # xph: (N, 4, Ho+1, Wo+1, C_in)

    # Weights with taps folded into the contraction dimension (MXU-deep matmuls).
    wd_flat = wd_taps.reshape(K * K * c_in, c_mid).astype(compute_dtype)
    wu_ph = jnp.stack([
        jnp.stack([
            jnp.concatenate([wu_taps[K * kh + kw]
                             for (_, kh) in TAPS[qr] for (_, kw) in TAPS[qc]],
                            axis=0)
            for qc in range(2)], axis=0)
        for qr in range(2)], axis=0).astype(compute_dtype)   # (2, 2, 4*c_mid, c_out)

    nb = _pick_batch_block(n, ho * wo)
    n_blk = n // nb

    # TODO(synk): for large feature maps add an output-row tile grid axis (with
    # a 1-row halo on rpad) so per-step blocks fit v7x's 64 MiB VMEM.
    # TODO(synk): verify via pl.lower_as_mlir whether the constant-index weight
    # blocks are double-buffered; if so request pl.Buffered(1) on them.
    u_phase, stats = pl.pallas_call(
        _conv_block_kernel,
        grid=(n_blk,),
        in_specs=[
            pl.BlockSpec((nb, 4, hp, wp, c_in), lambda i: (i, 0, 0, 0, 0)),
            pl.BlockSpec((K * K * c_in, c_mid), lambda i: (0, 0)),
            pl.BlockSpec((2, 2, K * c_mid, c_out), lambda i: (0, 0, 0, 0)),
        ],
        out_specs=[
            pl.BlockSpec((nb, 2, 2, ho, wo, c_out),
                         lambda i: (i, 0, 0, 0, 0, 0)),
            pl.BlockSpec((1, 2, c_out), lambda i: (i, 0, 0)),
        ],
        out_shape=[
            jax.ShapeDtypeStruct((n, 2, 2, ho, wo, c_out), compute_dtype),
            jax.ShapeDtypeStruct((n_blk, 2, c_out), jnp.float32),
        ],
        scratch_shapes=[pltpu.VMEM((nb, ho + 2, wo + 2, c_mid), compute_dtype)],
        compiler_params=pltpu.CompilerParams(
            dimension_semantics=("parallel",),
            vmem_limit_bytes=_k1_vmem_limit(nb, hp, wp, ho, wo,
                                            c_in, c_mid, c_out, cbytes)),
    )(xph, wd_flat, wu_ph)

    # Global (training-mode) BatchNorm statistics over N*H*W, folded into one
    # per-channel scale/shift FMA.
    # TODO(synk): E[x^2]-E[x]^2 in f32 can cancel for very large activations;
    # switch to per-block centered sums if used at production scale.
    m_total = float(n * h * w)
    total = jnp.sum(stats[:, 0, :], axis=0, keepdims=True)      # (1, c_out)
    total_sq = jnp.sum(stats[:, 1, :], axis=0, keepdims=True)
    mean = total / m_total
    var = jnp.maximum(total_sq / m_total - mean * mean, 0.0)    # biased variance
    scale = (gamma * jax.lax.rsqrt(var + BN_EPS)).astype(jnp.float32)
    shift = (beta - mean * scale).astype(jnp.float32)

    out_ph = pl.pallas_call(
        _bn_concat_kernel,
        grid=(n_blk,),
        in_specs=[
            pl.BlockSpec((nb, 4, hp, wp, c_in), lambda i: (i, 0, 0, 0, 0)),
            pl.BlockSpec((nb, 2, 2, ho, wo, c_out),
                         lambda i: (i, 0, 0, 0, 0, 0)),
            pl.BlockSpec((1, c_out), lambda i: (0, 0)),
            pl.BlockSpec((1, c_out), lambda i: (0, 0)),
        ],
        out_specs=pl.BlockSpec((nb, 2, 2, ho, wo, c_in + c_out),
                               lambda i: (i, 0, 0, 0, 0, 0)),
        out_shape=jax.ShapeDtypeStruct((n, 2, 2, ho, wo, c_in + c_out),
                                       jnp.float32),
        compiler_params=pltpu.CompilerParams(
            dimension_semantics=("parallel",),
            vmem_limit_bytes=32 << 20),
    )(xph, u_phase, scale, shift)

    # Phase-major channel-last -> NCHW with one fused transpose.
    # TODO(synk): a fused multi-level UNet should keep the channel-last
    # phase-major layout between blocks and skip this transpose entirely.
    out = out_ph.transpose(0, 5, 3, 1, 4, 2).reshape(n, c_in + c_out, h, w)
    return out


# ---------------------------------------------------------------------------
# Parameters and pure-JAX reference (independent: uses lax convolutions).
# ---------------------------------------------------------------------------
def make_params(key, input_nc, inner_nc, outer_nc=None):
    if outer_nc is None:
        outer_nc = input_nc          # PyTorch default: input_nc = outer_nc
    kd, ku, kg, kb = jax.random.split(key, 4)
    sd = 1.0 / np.sqrt(input_nc * K * K)
    su = 1.0 / np.sqrt(inner_nc * K * K)
    # Tap-major layouts used by the kernel:
    #   wd_taps[4*kh+kw][ci, cm] = Conv2d.weight[cm, ci, kh, kw]
    #   wu_taps[4*kh+kw][ci, co] = ConvTranspose2d.weight[ci, co, kh, kw]
    wd_taps = jax.random.uniform(kd, (K * K, input_nc, inner_nc), jnp.float32, -sd, sd)
    wu_taps = jax.random.uniform(ku, (K * K, inner_nc, outer_nc), jnp.float32, -su, su)
    gamma = jax.random.uniform(kg, (1, outer_nc), jnp.float32, 0.5, 1.5)
    beta = jax.random.uniform(kb, (1, outer_nc), jnp.float32, -0.5, 0.5)
    return (wd_taps, wu_taps, gamma, beta)


def reference_forward(x_nchw, params):
    wd_taps, wu_taps, gamma, beta = params
    c_in, c_mid = wd_taps.shape[1], wd_taps.shape[2]
    c_out = wu_taps.shape[2]
    hi = jax.lax.Precision.HIGHEST

    # Rebuild standard conv weight layouts from the tap-major kernel layout.
    wd_oihw = wd_taps.reshape(K, K, c_in, c_mid).transpose(3, 2, 0, 1)   # (O,I,kh,kw)
    wu_iokk = wu_taps.reshape(K, K, c_mid, c_out).transpose(2, 3, 0, 1)  # (I,O,kh,kw)

    y = _leaky_relu(x_nchw)
    d = jax.lax.conv_general_dilated(
        y, wd_oihw, window_strides=(2, 2), padding=((1, 1), (1, 1)),
        dimension_numbers=("NCHW", "OIHW", "NCHW"), precision=hi)
    r = jnp.maximum(d, 0.0)
    # ConvTranspose2d(k=4, s=2, p=1) == conv with spatially-flipped kernel,
    # swapped in/out channels, input dilation 2 and padding k-1-p = 2.
    wu_oihw = wu_iokk.transpose(1, 0, 2, 3)[:, :, ::-1, ::-1]
    u = jax.lax.conv_general_dilated(
        r, wu_oihw, window_strides=(1, 1), padding=((2, 2), (2, 2)),
        lhs_dilation=(2, 2), dimension_numbers=("NCHW", "OIHW", "NCHW"),
        precision=hi)
    mean = jnp.mean(u, axis=(0, 2, 3), keepdims=True)
    var = jnp.mean((u - mean) ** 2, axis=(0, 2, 3), keepdims=True)
    g = gamma.reshape(1, c_out, 1, 1)
    b = beta.reshape(1, c_out, 1, 1)
    u_bn = (u - mean) * jax.lax.rsqrt(var + BN_EPS) * g + b
    return jnp.concatenate([x_nchw, u_bn], axis=1)


if __name__ == "__main__":
    key = jax.random.PRNGKey(0)
    kx, kp = jax.random.split(key)

    N, outer_nc, inner_nc, H, W = 2, 4, 8, 16, 16
    x = jax.random.normal(kx, (N, outer_nc, H, W), jnp.float32)
    params = make_params(kp, outer_nc, inner_nc)

    y_ref = reference_forward(x, params)

    # bf16 MXU path (production path) -- tolerance sized for bf16 rounding.
    fwd_bf16 = jax.jit(functools.partial(unet_skip_block_forward,
                                         compute_dtype=jnp.bfloat16))
    y = fwd_bf16(x, params)
    jax.block_until_ready(y)
    assert y.shape == (N, 2 * outer_nc, H, W), y.shape
    np.testing.assert_allclose(np.asarray(y), np.asarray(y_ref),
                               rtol=5e-2, atol=5e-2)

    # f32 path -- tight tolerance against the high-precision XLA reference.
    fwd_f32 = jax.jit(functools.partial(unet_skip_block_forward,
                                        compute_dtype=jnp.float32))
    y32 = fwd_f32(x, params)
    jax.block_until_ready(y32)
    np.testing.assert_allclose(np.asarray(y32), np.asarray(y_ref),
                               rtol=3e-3, atol=3e-3)

    print("KERNEL_OK")
</pallas_src>

<mosaic_0001>
module attributes {stable_mosaic.version = 11 : i64} {
  func.func @_conv_block_kernel(%arg0: i32, %arg1: memref<1x4x9x9x4xf32, #tpu.memory_space<vmem>>, %arg2: memref<64x8xbf16, #tpu.memory_space<vmem>>, %arg3: memref<2x2x32x4xbf16, #tpu.memory_space<vmem>>, %arg4: memref<1x2x2x8x8x4xbf16, #tpu.memory_space<vmem>>, %arg5: memref<1x2x4xf32, #tpu.memory_space<vmem>>, %arg6: memref<1x10x10x8xbf16, #tpu.memory_space<vmem>>) attributes {dimension_semantics = [#tpu.dimension_semantics<parallel>], iteration_bounds = array<i64: 2>, scalar_prefetch = 0 : i64, scratch_operands = 1 : i64, tpu.core_type = #tpu.core_type<tc>, window_params = [{transform_indices = @transform_0, window_bounds = array<i64: 1, 4, 9, 9, 4>}, {pipeline_mode = #tpu.pipeline_mode<synchronous>, transform_indices = @transform_1, window_bounds = array<i64: 64, 8>}, {pipeline_mode = #tpu.pipeline_mode<synchronous>, transform_indices = @transform_2, window_bounds = array<i64: 2, 2, 32, 4>}, {transform_indices = @transform_3, window_bounds = array<i64: 1, 2, 2, 8, 8, 4>}, {transform_indices = @transform_4, window_bounds = array<i64: 1, 2, 4>}]} {
    %c0 = arith.constant 0 : index
    %c0_0 = arith.constant 0 : index
    %c0_1 = arith.constant 0 : index
    %c0_2 = arith.constant 0 : index
    %c0_3 = arith.constant 0 : index
    %0 = vector.load %arg1[%c0, %c0_0, %c0_1, %c0_2, %c0_3] : memref<1x4x9x9x4xf32, #tpu.memory_space<vmem>>, vector<1x4x9x9x4xf32>
    %cst = arith.constant 0.000000e+00 : f32
    %1 = vector.broadcast %cst : f32 to vector<1x4x9x9x4xf32>
    %2 = arith.cmpf oge, %0, %1 : vector<1x4x9x9x4xf32>
    %cst_4 = arith.constant 2.000000e-01 : f32
    %3 = vector.broadcast %cst_4 : f32 to vector<1x4x9x9x4xf32>
    %4 = arith.mulf %3, %0 : vector<1x4x9x9x4xf32>
    %5 = arith.select %2, %0, %4 : vector<1x4x9x9x4xi1>, vector<1x4x9x9x4xf32>
    %6 = arith.truncf %5 : vector<1x4x9x9x4xf32> to vector<1x4x9x9x4xbf16>
    %7 = vector.extract_strided_slice %6 {offsets = [0, 0, 0, 0, 0], sizes = [1, 1, 8, 8, 4], strides = [1, 1, 1, 1, 1]} : vector<1x4x9x9x4xbf16> to vector<1x1x8x8x4xbf16>
    %8 = vector.shape_cast %7 : vector<1x1x8x8x4xbf16> to vector<1x8x8x4xbf16>
    %9 = vector.shape_cast %8 : vector<1x8x8x4xbf16> to vector<64x4xbf16>
    %10 = vector.extract_strided_slice %6 {offsets = [0, 1, 0, 0, 0], sizes = [1, 1, 8, 8, 4], strides = [1, 1, 1, 1, 1]} : vector<1x4x9x9x4xbf16> to vector<1x1x8x8x4xbf16>
    %11 = vector.shape_cast %10 : vector<1x1x8x8x4xbf16> to vector<1x8x8x4xbf16>
    %12 = vector.shape_cast %11 : vector<1x8x8x4xbf16> to vector<64x4xbf16>
    %13 = vector.extract_strided_slice %6 {offsets = [0, 0, 0, 1, 0], sizes = [1, 1, 8, 8, 4], strides = [1, 1, 1, 1, 1]} : vector<1x4x9x9x4xbf16> to vector<1x1x8x8x4xbf16>
    %14 = vector.shape_cast %13 : vector<1x1x8x8x4xbf16> to vector<1x8x8x4xbf16>
    %15 = vector.shape_cast %14 : vector<1x8x8x4xbf16> to vector<64x4xbf16>
    %16 = vector.extract_strided_slice %6 {offsets = [0, 1, 0, 1, 0], sizes = [1, 1, 8, 8, 4], strides = [1, 1, 1, 1, 1]} : vector<1x4x9x9x4xbf16> to vector<1x1x8x8x4xbf16>
    %17 = vector.shape_cast %16 : vector<1x1x8x8x4xbf16> to vector<1x8x8x4xbf16>
    %18 = vector.shape_cast %17 : vector<1x8x8x4xbf16> to vector<64x4xbf16>
    %19 = vector.extract_strided_slice %6 {offsets = [0, 2, 0, 0, 0], sizes = [1, 1, 8, 8, 4], strides = [1, 1, 1, 1, 1]} : vector<1x4x9x9x4xbf16> to vector<1x1x8x8x4xbf16>
    %20 = vector.shape_cast %19 : vector<1x1x8x8x4xbf16> to vector<1x8x8x4xbf16>
    %21 = vector.shape_cast %20 : vector<1x8x8x4xbf16> to vector<64x4xbf16>
    %22 = vector.extract_strided_slice %6 {offsets = [0, 3, 0, 0, 0], sizes = [1, 1, 8, 8, 4], strides = [1, 1, 1, 1, 1]} : vector<1x4x9x9x4xbf16> to vector<1x1x8x8x4xbf16>
    %23 = vector.shape_cast %22 : vector<1x1x8x8x4xbf16> to vector<1x8x8x4xbf16>
    %24 = vector.shape_cast %23 : vector<1x8x8x4xbf16> to vector<64x4xbf16>
    %25 = vector.extract_strided_slice %6 {offsets = [0, 2, 0, 1, 0], sizes = [1, 1, 8, 8, 4], strides = [1, 1, 1, 1, 1]} : vector<1x4x9x9x4xbf16> to vector<1x1x8x8x4xbf16>
    %26 = vector.shape_cast %25 : vector<1x1x8x8x4xbf16> to vector<1x8x8x4xbf16>
    %27 = vector.shape_cast %26 : vector<1x8x8x4xbf16> to vector<64x4xbf16>
    %28 = vector.extract_strided_slice %6 {offsets = [0, 3, 0, 1, 0], sizes = [1, 1, 8, 8, 4], strides = [1, 1, 1, 1, 1]} : vector<1x4x9x9x4xbf16> to vector<1x1x8x8x4xbf16>
    %29 = vector.shape_cast %28 : vector<1x1x8x8x4xbf16> to vector<1x8x8x4xbf16>
    %30 = vector.shape_cast %29 : vector<1x8x8x4xbf16> to vector<64x4xbf16>
    %31 = vector.extract_strided_slice %6 {offsets = [0, 0, 1, 0, 0], sizes = [1, 1, 8, 8, 4], strides = [1, 1, 1, 1, 1]} : vector<1x4x9x9x4xbf16> to vector<1x1x8x8x4xbf16>
    %32 = vector.shape_cast %31 : vector<1x1x8x8x4xbf16> to vector<1x8x8x4xbf16>
    %33 = vector.shape_cast %32 : vector<1x8x8x4xbf16> to vector<64x4xbf16>
    %34 = vector.extract_strided_slice %6 {offsets = [0, 1, 1, 0, 0], sizes = [1, 1, 8, 8, 4], strides = [1, 1, 1, 1, 1]} : vector<1x4x9x9x4xbf16> to vector<1x1x8x8x4xbf16>
    %35 = vector.shape_cast %34 : vector<1x1x8x8x4xbf16> to vector<1x8x8x4xbf16>
    %36 = vector.shape_cast %35 : vector<1x8x8x4xbf16> to vector<64x4xbf16>
    %37 = vector.extract_strided_slice %6 {offsets = [0, 0, 1, 1, 0], sizes = [1, 1, 8, 8, 4], strides = [1, 1, 1, 1, 1]} : vector<1x4x9x9x4xbf16> to vector<1x1x8x8x4xbf16>
    %38 = vector.shape_cast %37 : vector<1x1x8x8x4xbf16> to vector<1x8x8x4xbf16>
    %39 = vector.shape_cast %38 : vector<1x8x8x4xbf16> to vector<64x4xbf16>
    %40 = vector.extract_strided_slice %6 {offsets = [0, 1, 1, 1, 0], sizes = [1, 1, 8, 8, 4], strides = [1, 1, 1, 1, 1]} : vector<1x4x9x9x4xbf16> to vector<1x1x8x8x4xbf16>
    %41 = vector.shape_cast %40 : vector<1x1x8x8x4xbf16> to vector<1x8x8x4xbf16>
    %42 = vector.shape_cast %41 : vector<1x8x8x4xbf16> to vector<64x4xbf16>
    %43 = vector.extract_strided_slice %6 {offsets = [0, 2, 1, 0, 0], sizes = [1, 1, 8, 8, 4], strides = [1, 1, 1, 1, 1]} : vector<1x4x9x9x4xbf16> to vector<1x1x8x8x4xbf16>
    %44 = vector.shape_cast %43 : vector<1x1x8x8x4xbf16> to vector<1x8x8x4xbf16>
    %45 = vector.shape_cast %44 : vector<1x8x8x4xbf16> to vector<64x4xbf16>
    %46 = vector.extract_strided_slice %6 {offsets = [0, 3, 1, 0, 0], sizes = [1, 1, 8, 8, 4], strides = [1, 1, 1, 1, 1]} : vector<1x4x9x9x4xbf16> to vector<1x1x8x8x4xbf16>
    %47 = vector.shape_cast %46 : vector<1x1x8x8x4xbf16> to vector<1x8x8x4xbf16>
    %48 = vector.shape_cast %47 : vector<1x8x8x4xbf16> to vector<64x4xbf16>
    %49 = vector.extract_strided_slice %6 {offsets = [0, 2, 1, 1, 0], sizes = [1, 1, 8, 8, 4], strides = [1, 1, 1, 1, 1]} : vector<1x4x9x9x4xbf16> to vector<1x1x8x8x4xbf16>
    %50 = vector.shape_cast %49 : vector<1x1x8x8x4xbf16> to vector<1x8x8x4xbf16>
    %51 = vector.shape_cast %50 : vector<1x8x8x4xbf16> to vector<64x4xbf16>
    %52 = vector.extract_strided_slice %6 {offsets = [0, 3, 1, 1, 0], sizes = [1, 1, 8, 8, 4], strides = [1, 1, 1, 1, 1]} : vector<1x4x9x9x4xbf16> to vector<1x1x8x8x4xbf16>
    %53 = vector.shape_cast %52 : vector<1x1x8x8x4xbf16> to vector<1x8x8x4xbf16>
    %54 = vector.shape_cast %53 : vector<1x8x8x4xbf16> to vector<64x4xbf16>
    %55 = tpu.concatenate %9, %12, %15, %18, %21, %24, %27, %30, %33, %36, %39, %42, %45, %48, %51, %54 in 1 : vector<64x4xbf16>, vector<64x4xbf16>, vector<64x4xbf16>, vector<64x4xbf16>, vector<64x4xbf16>, vector<64x4xbf16>, vector<64x4xbf16>, vector<64x4xbf16>, vector<64x4xbf16>, vector<64x4xbf16>, vector<64x4xbf16>, vector<64x4xbf16>, vector<64x4xbf16>, vector<64x4xbf16>, vector<64x4xbf16>, vector<64x4xbf16> -> vector<64x64xbf16>
    %c0_5 = arith.constant 0 : index
    %c0_6 = arith.constant 0 : index
    %56 = vector.load %arg2[%c0_5, %c0_6] : memref<64x8xbf16, #tpu.memory_space<vmem>>, vector<64x8xbf16>
    %cst_7 = arith.constant dense<0.000000e+00> : vector<64x8xf32>
    %57 = tpu.matmul %55, %56, %cst_7 {dimension_numbers = #tpu.dot_dimension_numbers<[1], [0], [0], [1], [0, 0, 1, 1], [], []>} : vector<64x64xbf16>, vector<64x8xbf16>, vector<64x8xf32> -> vector<64x8xf32>
    %cst_8 = arith.constant 0.000000e+00 : f32
    %58 = vector.broadcast %cst_8 : f32 to vector<64x8xf32>
    %59 = arith.maximumf %57, %58 : vector<64x8xf32>
    %60 = arith.truncf %59 : vector<64x8xf32> to vector<64x8xbf16>
    %cst_9 = arith.constant 0.000000e+00 : bf16
    %61 = vector.broadcast %cst_9 : bf16 to vector<1x1x10x8xbf16>
    %cst_10 = arith.constant 0.000000e+00 : bf16
    %62 = vector.broadcast %cst_10 : bf16 to vector<1x10x1x8xbf16>
    %c0_11 = arith.constant 0 : index
    %c0_12 = arith.constant 0 : index
    %c0_13 = arith.constant 0 : index
    %c0_14 = arith.constant 0 : index
    %63 = vector.load %arg6[%c0_11, %c0_12, %c0_13, %c0_14] : memref<1x10x10x8xbf16, #tpu.memory_space<vmem>>, vector<1x1x10x8xbf16>
    tpu.vector_store %arg6[%c0_11, %c0_12, %c0_13, %c0_14], %61 {strides = array<i32>} : memref<1x10x10x8xbf16, #tpu.memory_space<vmem>>, vector<1x1x10x8xbf16>,
    %c0_15 = arith.constant 0 : index
    %c9 = arith.constant 9 : index
    %c0_16 = arith.constant 0 : index
    %c0_17 = arith.constant 0 : index
    %64 = vector.load %arg6[%c0_15, %c9, %c0_16, %c0_17] : memref<1x10x10x8xbf16, #tpu.memory_space<vmem>>, vector<1x1x10x8xbf16>
    tpu.vector_store %arg6[%c0_15, %c9, %c0_16, %c0_17], %61 {strides = array<i32>} : memref<1x10x10x8xbf16, #tpu.memory_space<vmem>>, vector<1x1x10x8xbf16>,
    %c0_18 = arith.constant 0 : index
    %c0_19 = arith.constant 0 : index
    %c0_20 = arith.constant 0 : index
    %c0_21 = arith.constant 0 : index
    %65 = vector.load %arg6[%c0_18, %c0_19, %c0_20, %c0_21] : memref<1x10x10x8xbf16, #tpu.memory_space<vmem>>, vector<1x10x1x8xbf16>
    tpu.vector_store %arg6[%c0_18, %c0_19, %c0_20, %c0_21], %62 {strides = array<i32>} : memref<1x10x10x8xbf16, #tpu.memory_space<vmem>>, vector<1x10x1x8xbf16>,
    %c0_22 = arith.constant 0 : index
    %c0_23 = arith.constant 0 : index
    %c9_24 = arith.constant 9 : index
    %c0_25 = arith.constant 0 : index
    %66 = vector.load %arg6[%c0_22, %c0_23, %c9_24, %c0_25] : memref<1x10x10x8xbf16, #tpu.memory_space<vmem>>, vector<1x10x1x8xbf16>
    tpu.vector_store %arg6[%c0_22, %c0_23, %c9_24, %c0_25], %62 {strides = array<i32>} : memref<1x10x10x8xbf16, #tpu.memory_space<vmem>>, vector<1x10x1x8xbf16>,
    %67 = vector.shape_cast %60 : vector<64x8xbf16> to vector<1x8x8x8xbf16>
    %c0_26 = arith.constant 0 : index
    %c1 = arith.constant 1 : index
    %c1_27 = arith.constant 1 : index
    %c0_28 = arith.constant 0 : index
    %68 = vector.load %arg6[%c0_26, %c1, %c1_27, %c0_28] : memref<1x10x10x8xbf16, #tpu.memory_space<vmem>>, vector<1x8x8x8xbf16>
    tpu.vector_store %arg6[%c0_26, %c1, %c1_27, %c0_28], %67 {strides = array<i32>} : memref<1x10x10x8xbf16, #tpu.memory_space<vmem>>, vector<1x8x8x8xbf16>,
    %c0_29 = arith.constant 0 : index
    %c0_30 = arith.constant 0 : index
    %c0_31 = arith.constant 0 : index
    %c0_32 = arith.constant 0 : index
    %69 = vector.load %arg6[%c0_29, %c0_30, %c0_31, %c0_32] : memref<1x10x10x8xbf16, #tpu.memory_space<vmem>>, vector<1x8x8x8xbf16>
    %70 = vector.shape_cast %69 : vector<1x8x8x8xbf16> to vector<64x8xbf16>
    %c0_33 = arith.constant 0 : index
    %c0_34 = arith.constant 0 : index
    %c1_35 = arith.constant 1 : index
    %c0_36 = arith.constant 0 : index
    %71 = vector.load %arg6[%c0_33, %c0_34, %c1_35, %c0_36] : memref<1x10x10x8xbf16, #tpu.memory_space<vmem>>, vector<1x8x8x8xbf16>
    %72 = vector.shape_cast %71 : vector<1x8x8x8xbf16> to vector<64x8xbf16>
    %c0_37 = arith.constant 0 : index
    %c0_38 = arith.constant 0 : index
    %c2 = arith.constant 2 : index
    %c0_39 = arith.constant 0 : index
    %73 = vector.load %arg6[%c0_37, %c0_38, %c2, %c0_39] : memref<1x10x10x8xbf16, #tpu.memory_space<vmem>>, vector<1x8x8x8xbf16>
    %74 = vector.shape_cast %73 : vector<1x8x8x8xbf16> to vector<64x8xbf16>
    %c0_40 = arith.constant 0 : index
    %c1_41 = arith.constant 1 : index
    %c0_42 = arith.constant 0 : index
    %c0_43 = arith.constant 0 : index
    %75 = vector.load %arg6[%c0_40, %c1_41, %c0_42, %c0_43] : memref<1x10x10x8xbf16, #tpu.memory_space<vmem>>, vector<1x8x8x8xbf16>
    %76 = vector.shape_cast %75 : vector<1x8x8x8xbf16> to vector<64x8xbf16>
    %c0_44 = arith.constant 0 : index
    %c1_45 = arith.constant 1 : index
    %c1_46 = arith.constant 1 : index
    %c0_47 = arith.constant 0 : index
    %77 = vector.load %arg6[%c0_44, %c1_45, %c1_46, %c0_47] : memref<1x10x10x8xbf16, #tpu.memory_space<vmem>>, vector<1x8x8x8xbf16>
    %78 = vector.shape_cast %77 : vector<1x8x8x8xbf16> to vector<64x8xbf16>
    %c0_48 = arith.constant 0 : index
    %c1_49 = arith.constant 1 : index
    %c2_50 = arith.constant 2 : index
    %c0_51 = arith.constant 0 : index
    %79 = vector.load %arg6[%c0_48, %c1_49, %c2_50, %c0_51] : memref<1x10x10x8xbf16, #tpu.memory_space<vmem>>, vector<1x8x8x8xbf16>
    %80 = vector.shape_cast %79 : vector<1x8x8x8xbf16> to vector<64x8xbf16>
    %c0_52 = arith.constant 0 : index
    %c2_53 = arith.constant 2 : index
    %c0_54 = arith.constant 0 : index
    %c0_55 = arith.constant 0 : index
    %81 = vector.load %arg6[%c0_52, %c2_53, %c0_54, %c0_55] : memref<1x10x10x8xbf16, #tpu.memory_space<vmem>>, vector<1x8x8x8xbf16>
    %82 = vector.shape_cast %81 : vector<1x8x8x8xbf16> to vector<64x8xbf16>
    %c0_56 = arith.constant 0 : index
    %c2_57 = arith.constant 2 : index
    %c1_58 = arith.constant 1 : index
    %c0_59 = arith.constant 0 : index
    %83 = vector.load %arg6[%c0_56, %c2_57, %c1_58, %c0_59] : memref<1x10x10x8xbf16, #tpu.memory_space<vmem>>, vector<1x8x8x8xbf16>
    %84 = vector.shape_cast %83 : vector<1x8x8x8xbf16> to vector<64x8xbf16>
    %c0_60 = arith.constant 0 : index
    %c2_61 = arith.constant 2 : index
    %c2_62 = arith.constant 2 : index
    %c0_63 = arith.constant 0 : index
    %85 = vector.load %arg6[%c0_60, %c2_61, %c2_62, %c0_63] : memref<1x10x10x8xbf16, #tpu.memory_space<vmem>>, vector<1x8x8x8xbf16>
    %86 = vector.shape_cast %85 : vector<1x8x8x8xbf16> to vector<64x8xbf16>
    %cst_64 = arith.constant 0.000000e+00 : f32
    %87 = vector.broadcast %cst_64 : f32 to vector<1x4xf32>
    %cst_65 = arith.constant 0.000000e+00 : f32
    %88 = vector.broadcast %cst_65 : f32 to vector<1x4xf32>
    %89 = tpu.concatenate %78, %76, %72, %70 in 1 : vector<64x8xbf16>, vector<64x8xbf16>, vector<64x8xbf16>, vector<64x8xbf16> -> vector<64x32xbf16>
    %c0_66 = arith.constant 0 : index
    %c0_67 = arith.constant 0 : index
    %c0_68 = arith.constant 0 : index
    %c0_69 = arith.constant 0 : index
    %90 = vector.load %arg3[%c0_66, %c0_67, %c0_68, %c0_69] : memref<2x2x32x4xbf16, #tpu.memory_space<vmem>>, vector<1x1x32x4xbf16>
    %91 = vector.shape_cast %90 : vector<1x1x32x4xbf16> to vector<32x4xbf16>
    %cst_70 = arith.constant dense<0.000000e+00> : vector<64x4xf32>
    %92 = tpu.matmul %89, %91, %cst_70 {dimension_numbers = #tpu.dot_dimension_numbers<[1], [0], [0], [1], [0, 0, 1, 1], [], []>} : vector<64x32xbf16>, vector<32x4xbf16>, vector<64x4xf32> -> vector<64x4xf32>
    %93 = vector.shape_cast %92 : vector<64x4xf32> to vector<1x1x1x8x8x4xf32>
    %94 = arith.truncf %93 : vector<1x1x1x8x8x4xf32> to vector<1x1x1x8x8x4xbf16>
    %c0_71 = arith.constant 0 : index
    %c0_72 = arith.constant 0 : index
    %c0_73 = arith.constant 0 : index
    %c0_74 = arith.constant 0 : index
    %c0_75 = arith.constant 0 : index
    %c0_76 = arith.constant 0 : index
    %95 = vector.load %arg4[%c0_71, %c0_72, %c0_73, %c0_74, %c0_75, %c0_76] : memref<1x2x2x8x8x4xbf16, #tpu.memory_space<vmem>>, vector<1x1x1x8x8x4xbf16>
    tpu.vector_store %arg4[%c0_71, %c0_72, %c0_73, %c0_74, %c0_75, %c0_76], %94 {strides = array<i32>} : memref<1x2x2x8x8x4xbf16, #tpu.memory_space<vmem>>, vector<1x1x1x8x8x4xbf16>,
    %cst_77 = arith.constant dense<0.000000e+00> : vector<4xf32>
    %96 = vector.multi_reduction <add>, %92, %cst_77 [0] : vector<64x4xf32> to vector<4xf32>
    %97 = vector.shape_cast %96 : vector<4xf32> to vector<1x4xf32>
    %98 = arith.addf %87, %97 : vector<1x4xf32>
    %99 = arith.mulf %92, %92 : vector<64x4xf32>
    %cst_78 = arith.constant dense<0.000000e+00> : vector<4xf32>
    %100 = vector.multi_reduction <add>, %99, %cst_78 [0] : vector<64x4xf32> to vector<4xf32>
    %101 = vector.shape_cast %100 : vector<4xf32> to vector<1x4xf32>
    %102 = arith.addf %88, %101 : vector<1x4xf32>
    %103 = tpu.concatenate %80, %78, %74, %72 in 1 : vector<64x8xbf16>, vector<64x8xbf16>, vector<64x8xbf16>, vector<64x8xbf16> -> vector<64x32xbf16>
    %c0_79 = arith.constant 0 : index
    %c1_80 = arith.constant 1 : index
    %c0_81 = arith.constant 0 : index
    %c0_82 = arith.constant 0 : index
    %104 = vector.load %arg3[%c0_79, %c1_80, %c0_81, %c0_82] : memref<2x2x32x4xbf16, #tpu.memory_space<vmem>>, vector<1x1x32x4xbf16>
    %105 = vector.shape_cast %104 : vector<1x1x32x4xbf16> to vector<32x4xbf16>
    %cst_83 = arith.constant dense<0.000000e+00> : vector<64x4xf32>
    %106 = tpu.matmul %103, %105, %cst_83 {dimension_numbers = #tpu.dot_dimension_numbers<[1], [0], [0], [1], [0, 0, 1, 1], [], []>} : vector<64x32xbf16>, vector<32x4xbf16>, vector<64x4xf32> -> vector<64x4xf32>
    %107 = vector.shape_cast %106 : vector<64x4xf32> to vector<1x1x1x8x8x4xf32>
    %108 = arith.truncf %107 : vector<1x1x1x8x8x4xf32> to vector<1x1x1x8x8x4xbf16>
    %c0_84 = arith.constant 0 : index
    %c0_85 = arith.constant 0 : index
    %c1_86 = arith.constant 1 : index
    %c0_87 = arith.constant 0 : index
    %c0_88 = arith.constant 0 : index
    %c0_89 = arith.constant 0 : index
    %109 = vector.load %arg4[%c0_84, %c0_85, %c1_86, %c0_87, %c0_88, %c0_89] : memref<1x2x2x8x8x4xbf16, #tpu.memory_space<vmem>>, vector<1x1x1x8x8x4xbf16>
    tpu.vector_store %arg4[%c0_84, %c0_85, %c1_86, %c0_87, %c0_88, %c0_89], %108 {strides = array<i32>} : memref<1x2x2x8x8x4xbf16, #tpu.memory_space<vmem>>, vector<1x1x1x8x8x4xbf16>,
    %cst_90 = arith.constant dense<0.000000e+00> : vector<4xf32>
    %110 = vector.multi_reduction <add>, %106, %cst_90 [0] : vector<64x4xf32> to vector<4xf32>
    %111 = vector.shape_cast %110 : vector<4xf32> to vector<1x4xf32>
    %112 = arith.addf %98, %111 : vector<1x4xf32>
    %113 = arith.mulf %106, %106 : vector<64x4xf32>
    %cst_91 = arith.constant dense<0.000000e+00> : vector<4xf32>
    %114 = vector.multi_reduction <add>, %113, %cst_91 [0] : vector<64x4xf32> to vector<4xf32>
    %115 = vector.shape_cast %114 : vector<4xf32> to vector<1x4xf32>
    %116 = arith.addf %102, %115 : vector<1x4xf32>
    %117 = tpu.concatenate %84, %82, %78, %76 in 1 : vector<64x8xbf16>, vector<64x8xbf16>, vector<64x8xbf16>, vector<64x8xbf16> -> vector<64x32xbf16>
    %c1_92 = arith.constant 1 : index
    %c0_93 = arith.constant 0 : index
    %c0_94 = arith.constant 0 : index
    %c0_95 = arith.constant 0 : index
    %118 = vector.load %arg3[%c1_92, %c0_93, %c0_94, %c0_95] : memref<2x2x32x4xbf16, #tpu.memory_space<vmem>>, vector<1x1x32x4xbf16>
    %119 = vector.shape_cast %118 : vector<1x1x32x4xbf16> to vector<32x4xbf16>
    %cst_96 = arith.constant dense<0.000000e+00> : vector<64x4xf32>
    %120 = tpu.matmul %117, %119, %cst_96 {dimension_numbers = #tpu.dot_dimension_numbers<[1], [0], [0], [1], [0, 0, 1, 1], [], []>} : vector<64x32xbf16>, vector<32x4xbf16>, vector<64x4xf32> -> vector<64x4xf32>
    %121 = vector.shape_cast %120 : vector<64x4xf32> to vector<1x1x1x8x8x4xf32>
    %122 = arith.truncf %121 : vector<1x1x1x8x8x4xf32> to vector<1x1x1x8x8x4xbf16>
    %c0_97 = arith.constant 0 : index
    %c1_98 = arith.constant 1 : index
    %c0_99 = arith.constant 0 : index
    %c0_100 = arith.constant 0 : index
    %c0_101 = arith.constant 0 : index
    %c0_102 = arith.constant 0 : index
    %123 = vector.load %arg4[%c0_97, %c1_98, %c0_99, %c0_100, %c0_101, %c0_102] : memref<1x2x2x8x8x4xbf16, #tpu.memory_space<vmem>>, vector<1x1x1x8x8x4xbf16>
    tpu.vector_store %arg4[%c0_97, %c1_98, %c0_99, %c0_100, %c0_101, %c0_102], %122 {strides = array<i32>} : memref<1x2x2x8x8x4xbf16, #tpu.memory_space<vmem>>, vector<1x1x1x8x8x4xbf16>,
    %cst_103 = arith.constant dense<0.000000e+00> : vector<4xf32>
    %124 = vector.multi_reduction <add>, %120, %cst_103 [0] : vector<64x4xf32> to vector<4xf32>
    %125 = vector.shape_cast %124 : vector<4xf32> to vector<1x4xf32>
    %126 = arith.addf %112, %125 : vector<1x4xf32>
    %127 = arith.mulf %120, %120 : vector<64x4xf32>
    %cst_104 = arith.constant dense<0.000000e+00> : vector<4xf32>
    %128 = vector.multi_reduction <add>, %127, %cst_104 [0] : vector<64x4xf32> to vector<4xf32>
    %129 = vector.shape_cast %128 : vector<4xf32> to vector<1x4xf32>
    %130 = arith.addf %116, %129 : vector<1x4xf32>
    %131 = tpu.concatenate %86, %84, %80, %78 in 1 : vector<64x8xbf16>, vector<64x8xbf16>, vector<64x8xbf16>, vector<64x8xbf16> -> vector<64x32xbf16>
    %c1_105 = arith.constant 1 : index
    %c1_106 = arith.constant 1 : index
    %c0_107 = arith.constant 0 : index
    %c0_108 = arith.constant 0 : index
    %132 = vector.load %arg3[%c1_105, %c1_106, %c0_107, %c0_108] : memref<2x2x32x4xbf16, #tpu.memory_space<vmem>>, vector<1x1x32x4xbf16>
    %133 = vector.shape_cast %132 : vector<1x1x32x4xbf16> to vector<32x4xbf16>
    %cst_109 = arith.constant dense<0.000000e+00> : vector<64x4xf32>
    %134 = tpu.matmul %131, %133, %cst_109 {dimension_numbers = #tpu.dot_dimension_numbers<[1], [0], [0], [1], [0, 0, 1, 1], [], []>} : vector<64x32xbf16>, vector<32x4xbf16>, vector<64x4xf32> -> vector<64x4xf32>
    %135 = vector.shape_cast %134 : vector<64x4xf32> to vector<1x1x1x8x8x4xf32>
    %136 = arith.truncf %135 : vector<1x1x1x8x8x4xf32> to vector<1x1x1x8x8x4xbf16>
    %c0_110 = arith.constant 0 : index
    %c1_111 = arith.constant 1 : index
    %c1_112 = arith.constant 1 : index
    %c0_113 = arith.constant 0 : index
    %c0_114 = arith.constant 0 : index
    %c0_115 = arith.constant 0 : index
    %137 = vector.load %arg4[%c0_110, %c1_111, %c1_112, %c0_113, %c0_114, %c0_115] : memref<1x2x2x8x8x4xbf16, #tpu.memory_space<vmem>>, vector<1x1x1x8x8x4xbf16>
    tpu.vector_store %arg4[%c0_110, %c1_111, %c1_112, %c0_113, %c0_114, %c0_115], %136 {strides = array<i32>} : memref<1x2x2x8x8x4xbf16, #tpu.memory_space<vmem>>, vector<1x1x1x8x8x4xbf16>,
    %cst_116 = arith.constant dense<0.000000e+00> : vector<4xf32>
    %138 = vector.multi_reduction <add>, %134, %cst_116 [0] : vector<64x4xf32> to vector<4xf32>
    %139 = vector.shape_cast %138 : vector<4xf32> to vector<1x4xf32>
    %140 = arith.addf %126, %139 : vector<1x4xf32>
    %141 = arith.mulf %134, %134 : vector<64x4xf32>
    %cst_117 = arith.constant dense<0.000000e+00> : vector<4xf32>
    %142 = vector.multi_reduction <add>, %141, %cst_117 [0] : vector<64x4xf32> to vector<4xf32>
    %143 = vector.shape_cast %142 : vector<4xf32> to vector<1x4xf32>
    %144 = arith.addf %130, %143 : vector<1x4xf32>
    %145 = tpu.concatenate %140, %144 in 0 : vector<1x4xf32>, vector<1x4xf32> -> vector<2x4xf32>
    %146 = vector.shape_cast %145 : vector<2x4xf32> to vector<1x2x4xf32>
    %c0_118 = arith.constant 0 : index
    %c0_119 = arith.constant 0 : index
    %c0_120 = arith.constant 0 : index
    %147 = vector.load %arg5[%c0_118, %c0_119, %c0_120] : memref<1x2x4xf32, #tpu.memory_space<vmem>>, vector<1x2x4xf32>
    tpu.vector_store %arg5[%c0_118, %c0_119, %c0_120], %146 {strides = array<i32>} : memref<1x2x4xf32, #tpu.memory_space<vmem>>, vector<1x2x4xf32>,
    return
  }
  func.func @transform_0(%arg0: i32) -> (i32, i32, i32, i32, i32) {
    %c0_i32 = arith.constant 0 : i32
    %c0_i32_0 = arith.constant 0 : i32
    %c0_i32_1 = arith.constant 0 : i32
    %c0_i32_2 = arith.constant 0 : i32
    %c0_i32_3 = arith.constant 0 : i32
    return %arg0, %c0_i32, %c0_i32_0, %c0_i32_1, %c0_i32_2 : i32, i32, i32, i32, i32
  }
  func.func @transform_1(%arg0: i32) -> (i32, i32) {
    %c0_i32 = arith.constant 0 : i32
    %c0_i32_0 = arith.constant 0 : i32
    %c0_i32_1 = arith.constant 0 : i32
    return %c0_i32, %c0_i32_0 : i32, i32
  }
  func.func @transform_2(%arg0: i32) -> (i32, i32, i32, i32) {
    %c0_i32 = arith.constant 0 : i32
    %c0_i32_0 = arith.constant 0 : i32
    %c0_i32_1 = arith.constant 0 : i32
    %c0_i32_2 = arith.constant 0 : i32
    %c0_i32_3 = arith.constant 0 : i32
    return %c0_i32, %c0_i32_0, %c0_i32_1, %c0_i32_2 : i32, i32, i32, i32
  }
  func.func @transform_3(%arg0: i32) -> (i32, i32, i32, i32, i32, i32) {
    %c0_i32 = arith.constant 0 : i32
    %c0_i32_0 = arith.constant 0 : i32
    %c0_i32_1 = arith.constant 0 : i32
    %c0_i32_2 = arith.constant 0 : i32
    %c0_i32_3 = arith.constant 0 : i32
    %c0_i32_4 = arith.constant 0 : i32
    return %arg0, %c0_i32, %c0_i32_0, %c0_i32_1, %c0_i32_2, %c0_i32_3 : i32, i32, i32, i32, i32, i32
  }
  func.func @transform_4(%arg0: i32) -> (i32, i32, i32) {
    %c0_i32 = arith.constant 0 : i32
    %c0_i32_0 = arith.constant 0 : i32
    %c0_i32_1 = arith.constant 0 : i32
    return %arg0, %c0_i32, %c0_i32_0 : i32, i32, i32
  }
}

module attributes {stable_mosaic.version = 11 : i64} {
  func.func @_bn_concat_kernel(%arg0: i32, %arg1: memref<1x4x9x9x4xf32, #tpu.memory_space<vmem>>, %arg2: memref<1x2x2x8x8x4xbf16, #tpu.memory_space<vmem>>, %arg3: memref<1x4xf32, #tpu.memory_space<vmem>>, %arg4: memref<1x4xf32, #tpu.memory_space<vmem>>, %arg5: memref<1x2x2x8x8x8xf32, #tpu.memory_space<vmem>>) attributes {dimension_semantics = [#tpu.dimension_semantics<parallel>], iteration_bounds = array<i64: 2>, scalar_prefetch = 0 : i64, scratch_operands = 0 : i64, tpu.core_type = #tpu.core_type<tc>, window_params = [{transform_indices = @transform_0, window_bounds = array<i64: 1, 4, 9, 9, 4>}, {transform_indices = @transform_1, window_bounds = array<i64: 1, 2, 2, 8, 8, 4>}, {pipeline_mode = #tpu.pipeline_mode<synchronous>, transform_indices = @transform_2, window_bounds = array<i64: 1, 4>}, {pipeline_mode = #tpu.pipeline_mode<synchronous>, transform_indices = @transform_3, window_bounds = array<i64: 1, 4>}, {transform_indices = @transform_4, window_bounds = array<i64: 1, 2, 2, 8, 8, 8>}]} {
    %c0 = arith.constant 0 : index
    %c0_0 = arith.constant 0 : index
    %0 = vector.load %arg3[%c0, %c0_0] : memref<1x4xf32, #tpu.memory_space<vmem>>, vector<1x4xf32>
    %1 = vector.shape_cast %0 : vector<1x4xf32> to vector<1x1x1x4xf32>
    %c0_1 = arith.constant 0 : index
    %c0_2 = arith.constant 0 : index
    %2 = vector.load %arg4[%c0_1, %c0_2] : memref<1x4xf32, #tpu.memory_space<vmem>>, vector<1x4xf32>
    %3 = vector.shape_cast %2 : vector<1x4xf32> to vector<1x1x1x4xf32>
    %c0_3 = arith.constant 0 : index
    %c0_4 = arith.constant 0 : index
    %c0_5 = arith.constant 0 : index
    %c0_6 = arith.constant 0 : index
    %c0_7 = arith.constant 0 : index
    %4 = vector.load %arg1[%c0_3, %c0_4, %c0_5, %c0_6, %c0_7] : memref<1x4x9x9x4xf32, #tpu.memory_space<vmem>>, vector<1x4x9x9x4xf32>
    %c0_8 = arith.constant 0 : index
    %c0_9 = arith.constant 0 : index
    %c0_10 = arith.constant 0 : index
    %c0_11 = arith.constant 0 : index
    %c0_12 = arith.constant 0 : index
    %c0_13 = arith.constant 0 : index
    %5 = vector.load %arg2[%c0_8, %c0_9, %c0_10, %c0_11, %c0_12, %c0_13] : memref<1x2x2x8x8x4xbf16, #tpu.memory_space<vmem>>, vector<1x2x2x8x8x4xbf16>
    %6 = arith.extf %5 : vector<1x2x2x8x8x4xbf16> to vector<1x2x2x8x8x4xf32>
    %7 = vector.extract_strided_slice %4 {offsets = [0, 3, 0, 0, 0], sizes = [1, 1, 8, 8, 4], strides = [1, 1, 1, 1, 1]} : vector<1x4x9x9x4xf32> to vector<1x1x8x8x4xf32>
    %8 = vector.shape_cast %7 : vector<1x1x8x8x4xf32> to vector<1x8x8x4xf32>
    %9 = vector.extract_strided_slice %6 {offsets = [0, 0, 0, 0, 0, 0], sizes = [1, 1, 1, 8, 8, 4], strides = [1, 1, 1, 1, 1, 1]} : vector<1x2x2x8x8x4xf32> to vector<1x1x1x8x8x4xf32>
    %10 = vector.shape_cast %9 : vector<1x1x1x8x8x4xf32> to vector<1x8x8x4xf32>
    %11 = vector.broadcast %1 : vector<1x1x1x4xf32> to vector<1x8x8x4xf32>
    %12 = arith.mulf %10, %11 : vector<1x8x8x4xf32>
    %13 = vector.broadcast %3 : vector<1x1x1x4xf32> to vector<1x8x8x4xf32>
    %14 = arith.addf %12, %13 : vector<1x8x8x4xf32>
    %15 = tpu.concatenate %8, %14 in 3 : vector<1x8x8x4xf32>, vector<1x8x8x4xf32> -> vector<1x8x8x8xf32>
    %16 = vector.shape_cast %15 : vector<1x8x8x8xf32> to vector<1x1x1x8x8x8xf32>
    %c0_14 = arith.constant 0 : index
    %c0_15 = arith.constant 0 : index
    %c0_16 = arith.constant 0 : index
    %c0_17 = arith.constant 0 : index
    %c0_18 = arith.constant 0 : index
    %c0_19 = arith.constant 0 : index
    %17 = vector.load %arg5[%c0_14, %c0_15, %c0_16, %c0_17, %c0_18, %c0_19] : memref<1x2x2x8x8x8xf32, #tpu.memory_space<vmem>>, vector<1x1x1x8x8x8xf32>
    tpu.vector_store %arg5[%c0_14, %c0_15, %c0_16, %c0_17, %c0_18, %c0_19], %16 {strides = array<i32>} : memref<1x2x2x8x8x8xf32, #tpu.memory_space<vmem>>, vector<1x1x1x8x8x8xf32>,
    %18 = vector.extract_strided_slice %4 {offsets = [0, 2, 0, 1, 0], sizes = [1, 1, 8, 8, 4], strides = [1, 1, 1, 1, 1]} : vector<1x4x9x9x4xf32> to vector<1x1x8x8x4xf32>
    %19 = vector.shape_cast %18 : vector<1x1x8x8x4xf32> to vector<1x8x8x4xf32>
    %20 = vector.extract_strided_slice %6 {offsets = [0, 0, 1, 0, 0, 0], sizes = [1, 1, 1, 8, 8, 4], strides = [1, 1, 1, 1, 1, 1]} : vector<1x2x2x8x8x4xf32> to vector<1x1x1x8x8x4xf32>
    %21 = vector.shape_cast %20 : vector<1x1x1x8x8x4xf32> to vector<1x8x8x4xf32>
    %22 = vector.broadcast %1 : vector<1x1x1x4xf32> to vector<1x8x8x4xf32>
    %23 = arith.mulf %21, %22 : vector<1x8x8x4xf32>
    %24 = vector.broadcast %3 : vector<1x1x1x4xf32> to vector<1x8x8x4xf32>
    %25 = arith.addf %23, %24 : vector<1x8x8x4xf32>
    %26 = tpu.concatenate %19, %25 in 3 : vector<1x8x8x4xf32>, vector<1x8x8x4xf32> -> vector<1x8x8x8xf32>
    %27 = vector.shape_cast %26 : vector<1x8x8x8xf32> to vector<1x1x1x8x8x8xf32>
    %c0_20 = arith.constant 0 : index
    %c0_21 = arith.constant 0 : index
    %c1 = arith.constant 1 : index
    %c0_22 = arith.constant 0 : index
    %c0_23 = arith.constant 0 : index
    %c0_24 = arith.constant 0 : index
    %28 = vector.load %arg5[%c0_20, %c0_21, %c1, %c0_22, %c0_23, %c0_24] : memref<1x2x2x8x8x8xf32, #tpu.memory_space<vmem>>, vector<1x1x1x8x8x8xf32>
    tpu.vector_store %arg5[%c0_20, %c0_21, %c1, %c0_22, %c0_23, %c0_24], %27 {strides = array<i32>} : memref<1x2x2x8x8x8xf32, #tpu.memory_space<vmem>>, vector<1x1x1x8x8x8xf32>,
    %29 = vector.extract_strided_slice %4 {offsets = [0, 1, 1, 0, 0], sizes = [1, 1, 8, 8, 4], strides = [1, 1, 1, 1, 1]} : vector<1x4x9x9x4xf32> to vector<1x1x8x8x4xf32>
    %30 = vector.shape_cast %29 : vector<1x1x8x8x4xf32> to vector<1x8x8x4xf32>
    %31 = vector.extract_strided_slice %6 {offsets = [0, 1, 0, 0, 0, 0], sizes = [1, 1, 1, 8, 8, 4], strides = [1, 1, 1, 1, 1, 1]} : vector<1x2x2x8x8x4xf32> to vector<1x1x1x8x8x4xf32>
    %32 = vector.shape_cast %31 : vector<1x1x1x8x8x4xf32> to vector<1x8x8x4xf32>
    %33 = vector.broadcast %1 : vector<1x1x1x4xf32> to vector<1x8x8x4xf32>
    %34 = arith.mulf %32, %33 : vector<1x8x8x4xf32>
    %35 = vector.broadcast %3 : vector<1x1x1x4xf32> to vector<1x8x8x4xf32>
    %36 = arith.addf %34, %35 : vector<1x8x8x4xf32>
    %37 = tpu.concatenate %30, %36 in 3 : vector<1x8x8x4xf32>, vector<1x8x8x4xf32> -> vector<1x8x8x8xf32>
    %38 = vector.shape_cast %37 : vector<1x8x8x8xf32> to vector<1x1x1x8x8x8xf32>
    %c0_25 = arith.constant 0 : index
    %c1_26 = arith.constant 1 : index
    %c0_27 = arith.constant 0 : index
    %c0_28 = arith.constant 0 : index
    %c0_29 = arith.constant 0 : index
    %c0_30 = arith.constant 0 : index
    %39 = vector.load %arg5[%c0_25, %c1_26, %c0_27, %c0_28, %c0_29, %c0_30] : memref<1x2x2x8x8x8xf32, #tpu.memory_space<vmem>>, vector<1x1x1x8x8x8xf32>
    tpu.vector_store %arg5[%c0_25, %c1_26, %c0_27, %c0_28, %c0_29, %c0_30], %38 {strides = array<i32>} : memref<1x2x2x8x8x8xf32, #tpu.memory_space<vmem>>, vector<1x1x1x8x8x8xf32>,
    %40 = vector.extract_strided_slice %4 {offsets = [0, 0, 1, 1, 0], sizes = [1, 1, 8, 8, 4], strides = [1, 1, 1, 1, 1]} : vector<1x4x9x9x4xf32> to vector<1x1x8x8x4xf32>
    %41 = vector.shape_cast %40 : vector<1x1x8x8x4xf32> to vector<1x8x8x4xf32>
    %42 = vector.extract_strided_slice %6 {offsets = [0, 1, 1, 0, 0, 0], sizes = [1, 1, 1, 8, 8, 4], strides = [1, 1, 1, 1, 1, 1]} : vector<1x2x2x8x8x4xf32> to vector<1x1x1x8x8x4xf32>
    %43 = vector.shape_cast %42 : vector<1x1x1x8x8x4xf32> to vector<1x8x8x4xf32>
    %44 = vector.broadcast %1 : vector<1x1x1x4xf32> to vector<1x8x8x4xf32>
    %45 = arith.mulf %43, %44 : vector<1x8x8x4xf32>
    %46 = vector.broadcast %3 : vector<1x1x1x4xf32> to vector<1x8x8x4xf32>
    %47 = arith.addf %45, %46 : vector<1x8x8x4xf32>
    %48 = tpu.concatenate %41, %47 in 3 : vector<1x8x8x4xf32>, vector<1x8x8x4xf32> -> vector<1x8x8x8xf32>
    %49 = vector.shape_cast %48 : vector<1x8x8x8xf32> to vector<1x1x1x8x8x8xf32>
    %c0_31 = arith.constant 0 : index
    %c1_32 = arith.constant 1 : index
    %c1_33 = arith.constant 1 : index
    %c0_34 = arith.constant 0 : index
    %c0_35 = arith.constant 0 : index
    %c0_36 = arith.constant 0 : index
    %50 = vector.load %arg5[%c0_31, %c1_32, %c1_33, %c0_34, %c0_35, %c0_36] : memref<1x2x2x8x8x8xf32, #tpu.memory_space<vmem>>, vector<1x1x1x8x8x8xf32>
    tpu.vector_store %arg5[%c0_31, %c1_32, %c1_33, %c0_34, %c0_35, %c0_36], %49 {strides = array<i32>} : memref<1x2x2x8x8x8xf32, #tpu.memory_space<vmem>>, vector<1x1x1x8x8x8xf32>,
    return
  }
  func.func @transform_0(%arg0: i32) -> (i32, i32, i32, i32, i32) {
    %c0_i32 = arith.constant 0 : i32
    %c0_i32_0 = arith.constant 0 : i32
    %c0_i32_1 = arith.constant 0 : i32
    %c0_i32_2 = arith.constant 0 : i32
    %c0_i32_3 = arith.constant 0 : i32
    return %arg0, %c0_i32, %c0_i32_0, %c0_i32_1, %c0_i32_2 : i32, i32, i32, i32, i32
  }
  func.func @transform_1(%arg0: i32) -> (i32, i32, i32, i32, i32, i32) {
    %c0_i32 = arith.constant 0 : i32
    %c0_i32_0 = arith.constant 0 : i32
    %c0_i32_1 = arith.constant 0 : i32
    %c0_i32_2 = arith.constant 0 : i32
    %c0_i32_3 = arith.constant 0 : i32
    %c0_i32_4 = arith.constant 0 : i32
    return %arg0, %c0_i32, %c0_i32_0, %c0_i32_1, %c0_i32_2, %c0_i32_3 : i32, i32, i32, i32, i32, i32
  }
  func.func @transform_2(%arg0: i32) -> (i32, i32) {
    %c0_i32 = arith.constant 0 : i32
    %c0_i32_0 = arith.constant 0 : i32
    %c0_i32_1 = arith.constant 0 : i32
    return %c0_i32, %c0_i32_0 : i32, i32
  }
  func.func @transform_3(%arg0: i32) -> (i32, i32) {
    %c0_i32 = arith.constant 0 : i32
    %c0_i32_0 = arith.constant 0 : i32
    %c0_i32_1 = arith.constant 0 : i32
    return %c0_i32, %c0_i32_0 : i32, i32
  }
  func.func @transform_4(%arg0: i32) -> (i32, i32, i32, i32, i32, i32) {
    %c0_i32 = arith.constant 0 : i32
    %c0_i32_0 = arith.constant 0 : i32
    %c0_i32_1 = arith.constant 0 : i32
    %c0_i32_2 = arith.constant 0 : i32
    %c0_i32_3 = arith.constant 0 : i32
    %c0_i32_4 = arith.constant 0 : i32
    return %arg0, %c0_i32, %c0_i32_0, %c0_i32_1, %c0_i32_2, %c0_i32_3 : i32, i32, i32, i32, i32, i32
  }
}

</mosaic_0001>

<llo_original>
// kernel: unet_skip_block_forward.3
$region0: #{unet_skip_block_forward.3}
  #allocation0 [shape = 'u32[]', space=smem, size = 0x4, offset = 0x4, fixed_abs, tag = 'smem constant byte address 0x4 - core index']
  #allocation1 [shape = 'u32[144,128]{1,0:T(1,128)}', space=vmem, size = 0x12000, scoped, tag = 'internal scratch']
  %s0 = inlined_call_operand.vmem [shape: f32[2,4,9,9,4], index: 0, kind: input, shape index: {}]
  %s1 = inlined_call_operand.vmem [shape: bf16[2,2,2,8,8,4], index: 1, kind: input, shape index: {}]
  %s2 = inlined_call_operand.vmem [shape: f32[1,4], index: 2, kind: input, shape index: {}]
  %s3 = inlined_call_operand.vmem [shape: f32[1,4], index: 3, kind: input, shape index: {}]
  %s4 = inlined_call_operand.vmem [shape: f32[2,2,2,8,8,8], index: 4, kind: output, shape index: {}]
  %s5 = sld [smem:[#allocation0]]
  $region49: #{unet_skip_block_forward.3} parent=0
    _
  %s7 = ssub.s32 1, %s5
  %s8 = scalar_select 0, %s7, %s5
  loop: start=0, step=1, limit=4
  $region2: #{unet_skip_block_forward.3} parent=0 // loop_pre_header
    _
  $region3: #{unet_skip_block_forward.3} parent=0 // loop_header
    %s10 = sphi 0, %s14
    %p11 = scmp.ge.s32.totalorder %s10, 4
    %s20 = sphi 0, %s22
    %s23 = sphi 0, %s20
    %s24 = sphi 0, %s23
    %s40 = sphi 0, %s24
    %s46 = sphi 0, %s48
    %s49 = sphi 0, %s46
    %s50 = sphi 0, %s49
    %s66 = sphi 0, %s50
    %s70 = sphi 0, %s70
    %s72 = sphi 0, %s70
    %s73 = sphi 0, %s72
    %s87 = sphi 0, %s73
    %s91 = sphi 0, %s91
    %s93 = sphi 0, %s91
    %s94 = sphi 0, %s93
    %s108 = sphi 0, %s94
    %s114 = sphi 0, %s116
    %s117 = sphi 0, %s114
    %s118 = sphi 0, %s117
    %s134 = sphi 0, %s118
  $region4: #{unet_skip_block_forward.3} parent=0 // loop_header_branch
    %13 = sbr.rel (%p11) target = $region8
  $region5: #{unet_skip_block_forward.3} parent=0 // loop_body
    %s15 = ssub.s32 %s10, 1
    %s16 = ssub.s32 %s10, 2
    %s17 = sadd.s32 %s10, 1
    %s18 = ssub.s32 %s10, %s17
    %p19 = scmp.eq.s32.totalorder %s18, 0
    %s21 = sadd.s32 %s20, 1
    %s22 = scalar_select %p19, %s20, %s21
    %p25 = pneg %p19
    %p26 = scmp.eq.s32.totalorder %s10, 1
    %p27 = por %p25, %p26
    %p28 = scmp.ne.s32.totalorder %s20, %s23
    %p29 = scmp.eq.s32.totalorder %s10, 0
    %p30 = por %p28, %p29
    %p31 = scmp.ne.s32.totalorder %s20, %s23
    %p32 = scmp.eq.s32.totalorder %s15, 1
    %p33 = por %p31, %p32
    %p34 = scmp.ne.s32.totalorder %s23, %s24
    %p35 = scmp.eq.s32.totalorder %s15, 0
    %p36 = por %p34, %p35
    %p37 = scmp.ne.s32.totalorder %s23, %s24
    %p38 = scmp.eq.s32.totalorder %s16, 1
    %p39 = por %p37, %p38
    %p41 = scmp.ne.s32.totalorder %s24, %s40
    %p42 = scmp.eq.s32.totalorder %s16, 0
    %p43 = por %p41, %p42
    %s44 = ssub.s32 %s10, %s17
    %p45 = scmp.eq.s32.totalorder %s44, 0
    %s47 = sadd.s32 %s46, 1
    %s48 = scalar_select %p45, %s46, %s47
    %p51 = pneg %p45
    %p52 = scmp.eq.s32.totalorder %s10, 1
    %p53 = por %p51, %p52
    %p54 = scmp.ne.s32.totalorder %s46, %s49
    %p55 = scmp.eq.s32.totalorder %s10, 0
    %p56 = por %p54, %p55
    %p57 = scmp.ne.s32.totalorder %s46, %s49
    %p58 = scmp.eq.s32.totalorder %s15, 1
    %p59 = por %p57, %p58
    %p60 = scmp.ne.s32.totalorder %s49, %s50
    %p61 = scmp.eq.s32.totalorder %s15, 0
    %p62 = por %p60, %p61
    %p63 = scmp.ne.s32.totalorder %s49, %s50
    %p64 = scmp.eq.s32.totalorder %s16, 1
    %p65 = por %p63, %p64
    %p67 = scmp.ne.s32.totalorder %s50, %s66
    %p68 = scmp.eq.s32.totalorder %s16, 0
    %p69 = por %p67, %p68
    %s71 = sadd.s32 %s70, 1
    %p74 = scmp.eq.s32.totalorder %s10, 1
    %p75 = scmp.ne.s32.totalorder %s70, %s72
    %p76 = scmp.eq.s32.totalorder %s10, 0
    %p77 = por %p75, %p76
    %p78 = scmp.ne.s32.totalorder %s70, %s72
    %p79 = scmp.eq.s32.totalorder %s15, 1
    %p80 = por %p78, %p79
    %p81 = scmp.ne.s32.totalorder %s72, %s73
    %p82 = scmp.eq.s32.totalorder %s15, 0
    %p83 = por %p81, %p82
    %p84 = scmp.ne.s32.totalorder %s72, %s73
    %p85 = scmp.eq.s32.totalorder %s16, 1
    %p86 = por %p84, %p85
    %p88 = scmp.ne.s32.totalorder %s73, %s87
    %p89 = scmp.eq.s32.totalorder %s16, 0
    %p90 = por %p88, %p89
    %s92 = sadd.s32 %s91, 1
    %p95 = scmp.eq.s32.totalorder %s10, 1
    %p96 = scmp.ne.s32.totalorder %s91, %s93
    %p97 = scmp.eq.s32.totalorder %s10, 0
    %p98 = por %p96, %p97
    %p99 = scmp.ne.s32.totalorder %s91, %s93
    %p100 = scmp.eq.s32.totalorder %s15, 1
    %p101 = por %p99, %p100
    %p102 = scmp.ne.s32.totalorder %s93, %s94
    %p103 = scmp.eq.s32.totalorder %s15, 0
    %p104 = por %p102, %p103
    %p105 = scmp.ne.s32.totalorder %s93, %s94
    %p106 = scmp.eq.s32.totalorder %s16, 1
    %p107 = por %p105, %p106
    %p109 = scmp.ne.s32.totalorder %s94, %s108
    %p110 = scmp.eq.s32.totalorder %s16, 0
    %p111 = por %p109, %p110
    %s112 = ssub.s32 %s10, %s17
    %p113 = scmp.eq.s32.totalorder %s112, 0
    %s115 = sadd.s32 %s114, 1
    %s116 = scalar_select %p113, %s114, %s115
    %p119 = pneg %p113
    %p120 = scmp.eq.s32.totalorder %s10, 1
    %p121 = por %p119, %p120
    %p122 = scmp.ne.s32.totalorder %s114, %s117
    %p123 = scmp.eq.s32.totalorder %s10, 0
    %p124 = por %p122, %p123
    %p125 = scmp.ne.s32.totalorder %s114, %s117
    %p126 = scmp.eq.s32.totalorder %s15, 1
    %p127 = por %p125, %p126
    %p128 = scmp.ne.s32.totalorder %s117, %s118
    %p129 = scmp.eq.s32.totalorder %s15, 0
    %p130 = por %p128, %p129
    %p131 = scmp.ne.s32.totalorder %s117, %s118
    %p132 = scmp.eq.s32.totalorder %s16, 1
    %p133 = por %p131, %p132
    %p135 = scmp.ne.s32.totalorder %s118, %s134
    %p136 = scmp.eq.s32.totalorder %s16, 0
    %p137 = por %p135, %p136
    %p138 = scmp.le.s32.totalorder 1, %s10
    %p139 = scmp.lt.s32.totalorder %s10, 3
    %p140 = pnand %p138, %p139
    %p141 = pneg %p140
    // Predicated region
    $region9: #{unet_skip_block_forward.3} parent=5 // pred_check
      _
    $region10: #{unet_skip_block_forward.3} parent=5 // pred_check_branch
      %143 = sbr.rel (%p140) target = $region12
    $region11: #{unet_skip_block_forward.3} parent=5 // pred_region
      %s144 = ssub.s32 %s10, 1
      // Predicated region
      $region13: #{unet_skip_block_forward.3} parent=11 // pred_check
        %p145 = pneg %p83
      $region14: #{unet_skip_block_forward.3} parent=11 // pred_check_branch
        %147 = sbr.rel (%p145) target = $region16
      $region15: #{unet_skip_block_forward.3} parent=11 // pred_region
        _
      $region16: #{unet_skip_block_forward.3} parent=11 // pred_fallthru
        _
      // Predicated region
      $region17: #{unet_skip_block_forward.3} parent=11 // pred_check
        %p148 = pneg %p104
      $region18: #{unet_skip_block_forward.3} parent=11 // pred_check_branch
        %150 = sbr.rel (%p148) target = $region20
      $region19: #{unet_skip_block_forward.3} parent=11 // pred_region
        _
      $region20: #{unet_skip_block_forward.3} parent=11 // pred_fallthru
        _
    $region12: #{unet_skip_block_forward.3} parent=5 // pred_fallthru
      _
    %p151 = scmp.lt.s32.totalorder %s10, 2
    // Predicated region
    $region21: #{unet_skip_block_forward.3} parent=5 // pred_check
      %p152 = pneg %p151
    $region22: #{unet_skip_block_forward.3} parent=5 // pred_check_branch
      %154 = sbr.rel (%p152) target = $region24
    $region23: #{unet_skip_block_forward.3} parent=5 // pred_region
      // Predicated region
      $region25: #{unet_skip_block_forward.3} parent=23 // pred_check
        %p155 = pneg %p30
      $region26: #{unet_skip_block_forward.3} parent=23 // pred_check_branch
        %157 = sbr.rel (%p155) target = $region28
      $region27: #{unet_skip_block_forward.3} parent=23 // pred_region
        %p158 = scmp.lt.s32.totalorder %s10, 1
        %s159 = scalar_select %p158, %s10, 1
        %s160 = smul.addr %s159, 72
        %s161 = smul.addr %s160, 8
        %s162 = scalar_lea.vmem %s0, %s161
      $region28: #{unet_skip_block_forward.3} parent=23 // pred_fallthru
        _
      // Predicated region
      $region29: #{unet_skip_block_forward.3} parent=23 // pred_check
        %p163 = pneg %p56
      $region30: #{unet_skip_block_forward.3} parent=23 // pred_check_branch
        %165 = sbr.rel (%p163) target = $region32
      $region31: #{unet_skip_block_forward.3} parent=23 // pred_region
        %p166 = scmp.lt.s32.totalorder %s10, 1
        %s167 = scalar_select %p166, %s10, 1
        %s168 = smul.addr %s167, 32
        %s169 = smul.addr %s168, 4
        %s170 = scalar_lea.vmem %s1, %s169
      $region32: #{unet_skip_block_forward.3} parent=23 // pred_fallthru
        _
    $region24: #{unet_skip_block_forward.3} parent=5 // pred_fallthru
      _
    %p171 = scmp.le.s32.totalorder 1, %s10
    %p172 = scmp.lt.s32.totalorder %s10, 3
    %p173 = pnand %p171, %p172
    %p174 = pneg %p173
    // Predicated region
    $region33: #{unet_skip_block_forward.3} parent=5 // pred_check
      _
    $region34: #{unet_skip_block_forward.3} parent=5 // pred_check_branch
      %176 = sbr.rel (%p173) target = $region36
    $region35: #{unet_skip_block_forward.3} parent=5 // pred_region
      %s177 = ssub.s32 %s10, 1
      %p178 = scmp.lt.s32.totalorder %s15, 1
      %s179 = scalar_select %p178, %s15, 1
      %s180 = smul.addr %s179, 72
      %s181 = smul.addr %s180, 8
      %s182 = scalar_lea.vmem %s0, %s181
      %p183 = pneg %p36
      %p184 = pneg %p33
      %p185 = scmp.lt.s32.totalorder %s15, 1
      %s186 = scalar_select %p185, %s15, 1
      %s187 = smul.addr %s186, 32
      %s188 = smul.addr %s187, 4
      %s189 = scalar_lea.vmem %s1, %s188
      %p190 = pneg %p62
      %p191 = pneg %p59
      %p192 = pneg %p83
      %p193 = pneg %p80
      %p194 = pneg %p104
      %p195 = pneg %p101
      %p196 = pneg %p130
      %p197 = pneg %p127
      %p198 = scmp.lt.s32.totalorder %s15, 1
      %s199 = scalar_select %p198, %s15, 1
      %s200 = smul.addr %s199, 32
      %s201 = smul.addr %s200, 8
      %s202 = scalar_lea.vmem %s4, %s201
      %p203 = scmp.lt.s32.totalorder %s15, 1
      %s204 = scalar_select %p203, %s15, 1
      %s205 = smul.addr %s204, 72
      %s206 = smul.addr %s205, 8
      %s207 = scalar_lea.vmem %s0, %s206
      %p208 = scmp.lt.s32.totalorder %s15, 1
      %s209 = scalar_select %p208, %s15, 1
      %s210 = smul.addr %s209, 32
      %s211 = smul.addr %s210, 4
      %s212 = scalar_lea.vmem %s1, %s211
      %p213 = scmp.lt.s32.totalorder %s15, 1
      %s214 = scalar_select %p213, %s15, 1
      %s215 = smul.addr %s214, 32
      %s216 = smul.addr %s215, 8
      %s217 = scalar_lea.vmem %s4, %s216
      %v218 = vld [vmem:[%s2] sm:$0x1]
      %v219 = vld [vmem:[%s3] sm:$0x1]
      %v220 = vld [vmem:[%s207 + $0x10] sm:$0xff]
      %v221 = vld [vmem:[%s207 + $0x18] sm:$0x1]
      %v222 = vld [vmem:[%s207 + $0x20] sm:$0xff]
      %v223 = vld [vmem:[%s207 + $0x28] sm:$0x1]
      %v224 = vld [vmem:[%s207 + $0x30] sm:$0xff]
      %v225 = vld [vmem:[%s207 + $0x38] sm:$0x1]
      %v226 = vld [vmem:[%s207 + $0x40] sm:$0xff]
      %v227 = vld [vmem:[%s207 + $0x48] sm:$0x1]
      %v228 = vld [vmem:[%s207 + $0x50] sm:$0xff]
      %v229 = vld [vmem:[%s207 + $0x58] sm:$0x1]
      %v230 = vld [vmem:[%s207 + $0x60] sm:$0xff]
      %v231 = vld [vmem:[%s207 + $0x68] sm:$0x1]
      %v232 = vld [vmem:[%s207 + $0x70] sm:$0xff]
      %v233 = vld [vmem:[%s207 + $0x78] sm:$0x1]
      %v234 = vld [vmem:[%s207 + $0x80] sm:$0xff]
      %v235 = vld [vmem:[%s207 + $0x88] sm:$0x1]
      %v236 = vld [vmem:[%s207 + $0xa0] sm:$0xff]
      %v237 = vld [vmem:[%s207 + $0xb0] sm:$0xff]
      %v238 = vld [vmem:[%s207 + $0xc0] sm:$0xff]
      %v239 = vld [vmem:[%s207 + $0xd0] sm:$0xff]
      %v240 = vld [vmem:[%s207 + $0xe0] sm:$0xff]
      %v241 = vld [vmem:[%s207 + $0xf0] sm:$0xff]
      %v242 = vld [vmem:[%s207 + $0x100] sm:$0xff]
      %v243 = vld [vmem:[%s207 + $0x110] sm:$0xff]
      %v244 = vld [vmem:[%s207 + $0x120] sm:$0xff]
      %v245 = vld [vmem:[%s207 + $0x128] sm:$0x1]
      %v246 = vld [vmem:[%s207 + $0x130] sm:$0xff]
      %v247 = vld [vmem:[%s207 + $0x138] sm:$0x1]
      %v248 = vld [vmem:[%s207 + $0x140] sm:$0xff]
      %v249 = vld [vmem:[%s207 + $0x148] sm:$0x1]
      %v250 = vld [vmem:[%s207 + $0x150] sm:$0xff]
      %v251 = vld [vmem:[%s207 + $0x158] sm:$0x1]
      %v252 = vld [vmem:[%s207 + $0x160] sm:$0xff]
      %v253 = vld [vmem:[%s207 + $0x168] sm:$0x1]
      %v254 = vld [vmem:[%s207 + $0x170] sm:$0xff]
      %v255 = vld [vmem:[%s207 + $0x178] sm:$0x1]
      %v256 = vld [vmem:[%s207 + $0x180] sm:$0xff]
      %v257 = vld [vmem:[%s207 + $0x188] sm:$0x1]
      %v258 = vld [vmem:[%s207 + $0x190] sm:$0xff]
      %v259 = vld [vmem:[%s207 + $0x198] sm:$0x1]
      %v260 = vld [vmem:[%s207 + $0x1b0] sm:$0xff]
      %v261 = vld [vmem:[%s207 + $0x1c0] sm:$0xff]
      %v262 = vld [vmem:[%s207 + $0x1d0] sm:$0xff]
      %v263 = vld [vmem:[%s207 + $0x1e0] sm:$0xff]
      %v264 = vld [vmem:[%s207 + $0x1f0] sm:$0xff]
      %v265 = vld [vmem:[%s207 + $0x200] sm:$0xff]
      %v266 = vld [vmem:[%s207 + $0x210] sm:$0xff]
      %v267 = vld [vmem:[%s207 + $0x220] sm:$0xff]
      %v268 = vld [vmem:[%s212] sm:$0xf]
      %v269 = vld [vmem:[%s212 + $0x4] sm:$0xf]
      %v270 = vld [vmem:[%s212 + $0x8] sm:$0xf]
      %v271 = vld [vmem:[%s212 + $0xc] sm:$0xf]
      %v272 = vld [vmem:[%s212 + $0x10] sm:$0xf]
      %v273 = vld [vmem:[%s212 + $0x14] sm:$0xf]
      %v274 = vld [vmem:[%s212 + $0x18] sm:$0xf]
      %v275 = vld [vmem:[%s212 + $0x1c] sm:$0xf]
      %v276 = vld [vmem:[%s212 + $0x20] sm:$0xf]
      %v277 = vld [vmem:[%s212 + $0x24] sm:$0xf]
      %v278 = vld [vmem:[%s212 + $0x28] sm:$0xf]
      %v279 = vld [vmem:[%s212 + $0x2c] sm:$0xf]
      %v280 = vld [vmem:[%s212 + $0x30] sm:$0xf]
      %v281 = vld [vmem:[%s212 + $0x34] sm:$0xf]
      %v282 = vld [vmem:[%s212 + $0x38] sm:$0xf]
      %v283 = vld [vmem:[%s212 + $0x3c] sm:$0xf]
      %v284 = vld [vmem:[%s212 + $0x40] sm:$0xf]
      %v285 = vld [vmem:[%s212 + $0x44] sm:$0xf]
      %v286 = vld [vmem:[%s212 + $0x48] sm:$0xf]
      %v287 = vld [vmem:[%s212 + $0x4c] sm:$0xf]
      %v288 = vld [vmem:[%s212 + $0x50] sm:$0xf]
      %v289 = vld [vmem:[%s212 + $0x54] sm:$0xf]
      %v290 = vld [vmem:[%s212 + $0x58] sm:$0xf]
      %v291 = vld [vmem:[%s212 + $0x5c] sm:$0xf]
      %v292 = vld [vmem:[%s212 + $0x60] sm:$0xf]
      %v293 = vld [vmem:[%s212 + $0x64] sm:$0xf]
      %v294 = vld [vmem:[%s212 + $0x68] sm:$0xf]
      %v295 = vld [vmem:[%s212 + $0x6c] sm:$0xf]
      %v296 = vld [vmem:[%s212 + $0x70] sm:$0xf]
      %v297 = vld [vmem:[%s212 + $0x74] sm:$0xf]
      %v298 = vld [vmem:[%s212 + $0x78] sm:$0xf]
      %v299 = vld [vmem:[%s212 + $0x7c] sm:$0xf]
      %v300 = vunpack.c.l.bf16 %v268
      %v301 = vunpack.c.l.bf16 %v269
      %v302 = vunpack.c.l.bf16 %v270
      %v303 = vunpack.c.l.bf16 %v271
      %v304 = vunpack.c.l.bf16 %v272
      %v305 = vunpack.c.l.bf16 %v273
      %v306 = vunpack.c.l.bf16 %v274
      %v307 = vunpack.c.l.bf16 %v275
      %v308 = vunpack.c.l.bf16 %v276
      %v309 = vunpack.c.l.bf16 %v277
      %v310 = vunpack.c.l.bf16 %v278
      %v311 = vunpack.c.l.bf16 %v279
      %v312 = vunpack.c.l.bf16 %v280
      %v313 = vunpack.c.l.bf16 %v281
      %v314 = vunpack.c.l.bf16 %v282
      %v315 = vunpack.c.l.bf16 %v283
      %v316 = vunpack.c.l.bf16 %v284
      %v317 = vunpack.c.l.bf16 %v285
      %v318 = vunpack.c.l.bf16 %v286
      %v319 = vunpack.c.l.bf16 %v287
      %v320 = vunpack.c.l.bf16 %v288
      %v321 = vunpack.c.l.bf16 %v289
      %v322 = vunpack.c.l.bf16 %v290
      %v323 = vunpack.c.l.bf16 %v291
      %v324 = vunpack.c.l.bf16 %v292
      %v325 = vunpack.c.l.bf16 %v293
      %v326 = vunpack.c.l.bf16 %v294
      %v327 = vunpack.c.l.bf16 %v295
      %v328 = vunpack.c.l.bf16 %v296
      %v329 = vunpack.c.l.bf16 %v297
      %v330 = vunpack.c.l.bf16 %v298
      %v331 = vunpack.c.l.bf16 %v299
      %v333 = vlaneseq
      %v334 = vshrl.u32 %v333, 7
      %v335 = vsub.s32 0, %v334
      %v336 = vrot.slane %v218, %v335
      %v338 = vmul.f32 %v300, %v336
      %v339 = vmul.f32 %v301, %v336
      %v340 = vmul.f32 %v302, %v336
      %v341 = vmul.f32 %v303, %v336
      %v342 = vmul.f32 %v304, %v336
      %v343 = vmul.f32 %v305, %v336
      %v344 = vmul.f32 %v306, %v336
      %v345 = vmul.f32 %v307, %v336
      %v347 = vlaneseq
      %v348 = vshrl.u32 %v347, 7
      %v349 = vsub.s32 0, %v348
      %v350 = vrot.slane %v219, %v349
      %v352 = vadd.f32 %v338, %v350
      %v353 = vadd.f32 %v339, %v350
      %v354 = vadd.f32 %v340, %v350
      %v355 = vadd.f32 %v341, %v350
      %v356 = vadd.f32 %v342, %v350
      %v357 = vadd.f32 %v343, %v350
      %v358 = vadd.f32 %v344, %v350
      %v359 = vadd.f32 %v345, %v350
      %368 = vrot.lane.b32.xlu0 %v352, 4
      %v369 = vpop.permute.xlu0 %368
      %370 = vrot.lane.b32.xlu0 %v353, 4
      %v371 = vpop.permute.xlu0 %370
      %372 = vrot.lane.b32.xlu0 %v354, 4
      %v373 = vpop.permute.xlu0 %372
      %374 = vrot.lane.b32.xlu0 %v355, 4
      %v375 = vpop.permute.xlu0 %374
      %376 = vrot.lane.b32.xlu0 %v356, 4
      %v377 = vpop.permute.xlu0 %376
      %378 = vrot.lane.b32.xlu0 %v357, 4
      %v379 = vpop.permute.xlu0 %378
      %380 = vrot.lane.b32.xlu0 %v358, 4
      %v381 = vpop.permute.xlu0 %380
      %382 = vrot.lane.b32.xlu0 %v359, 4
      %v383 = vpop.permute.xlu0 %382
      %vm392 = vcmask 31744
      %v393 = vsel %vm392, %v260, %v369
      %v394 = vsel %vm392, %v261, %v371
      %v395 = vsel %vm392, %v262, %v373
      %v396 = vsel %vm392, %v263, %v375
      %v397 = vsel %vm392, %v264, %v377
      %v398 = vsel %vm392, %v265, %v379
      %v399 = vsel %vm392, %v266, %v381
      %v400 = vsel %vm392, %v267, %v383
      %vm401 = vcmask 64512
      %402 = vst.msk [vmem:[%s217] sm:$0xff] %vm401, %v393
      %403 = vst.msk [vmem:[%s217 + $0x8] sm:$0xff] %vm401, %v394
      %404 = vst.msk [vmem:[%s217 + $0x10] sm:$0xff] %vm401, %v395
      %405 = vst.msk [vmem:[%s217 + $0x18] sm:$0xff] %vm401, %v396
      %406 = vst.msk [vmem:[%s217 + $0x20] sm:$0xff] %vm401, %v397
      %407 = vst.msk [vmem:[%s217 + $0x28] sm:$0xff] %vm401, %v398
      %408 = vst.msk [vmem:[%s217 + $0x30] sm:$0xff] %vm401, %v399
      %409 = vst.msk [vmem:[%s217 + $0x38] sm:$0xff] %vm401, %v400
      %v410 = vmul.f32 %v308, %v336
      %v411 = vmul.f32 %v309, %v336
      %v412 = vmul.f32 %v310, %v336
      %v413 = vmul.f32 %v311, %v336
      %v414 = vmul.f32 %v312, %v336
      %v415 = vmul.f32 %v313, %v336
      %v416 = vmul.f32 %v314, %v336
      %v417 = vmul.f32 %v315, %v336
      %v418 = vadd.f32 %v410, %v350
      %v419 = vadd.f32 %v411, %v350
      %v420 = vadd.f32 %v412, %v350
      %v421 = vadd.f32 %v413, %v350
      %v422 = vadd.f32 %v414, %v350
      %v423 = vadd.f32 %v415, %v350
      %v424 = vadd.f32 %v416, %v350
      %v425 = vadd.f32 %v417, %v350
      %v434 = vrot.slane %v418, 7
      %v435 = vrot.slane %v419, 7
      %v436 = vrot.slane %v420, 7
      %v437 = vrot.slane %v421, 7
      %v438 = vrot.slane %v422, 7
      %v439 = vrot.slane %v423, 7
      %v440 = vrot.slane %v424, 7
      %v441 = vrot.slane %v425, 7
      %442 = vrot.lane.b32.xlu0 %v434, 4
      %v443 = vpop.permute.xlu0 %442
      %444 = vrot.lane.b32.xlu0 %v435, 4
      %v445 = vpop.permute.xlu0 %444
      %446 = vrot.lane.b32.xlu0 %v436, 4
      %v447 = vpop.permute.xlu0 %446
      %448 = vrot.lane.b32.xlu0 %v437, 4
      %v449 = vpop.permute.xlu0 %448
      %450 = vrot.lane.b32.xlu0 %v438, 4
      %v451 = vpop.permute.xlu0 %450
      %452 = vrot.lane.b32.xlu0 %v439, 4
      %v453 = vpop.permute.xlu0 %452
      %454 = vrot.lane.b32.xlu0 %v440, 4
      %v455 = vpop.permute.xlu0 %454
      %456 = vrot.lane.b32.xlu0 %v441, 4
      %v457 = vpop.permute.xlu0 %456
      %v466 = vsel %vm392, %v244, %v443
      %v467 = vsel %vm392, %v245, %v443
      %v468 = vsel %vm392, %v246, %v445
      %v469 = vsel %vm392, %v247, %v445
      %v470 = vsel %vm392, %v248, %v447
      %v471 = vsel %vm392, %v249, %v447
      %v472 = vsel %vm392, %v250, %v449
      %v473 = vsel %vm392, %v251, %v449
      %v474 = vsel %vm392, %v252, %v451
      %v475 = vsel %vm392, %v253, %v451
      %v476 = vsel %vm392, %v254, %v453
      %v477 = vsel %vm392, %v255, %v453
      %v478 = vsel %vm392, %v256, %v455
      %v479 = vsel %vm392, %v257, %v455
      %v480 = vsel %vm392, %v258, %v457
      %v481 = vsel %vm392, %v259, %v457
      %s482 = scalar_lea.vmem %s217, 64
      %vm483 = vcmask 64513
      %484 = vst.msk [vmem:[%s482 - $0x1] sm:$0xfe] %vm483, %v466
      %vm485 = vcmask 57344
      %486 = vst.msk [vmem:[%s482 + $0x7] sm:$0x1] %vm485, %v467
      %487 = vst.msk [vmem:[%s482 + $0x7] sm:$0xfe] %vm483, %v468
      %488 = vst.msk [vmem:[%s482 + $0xf] sm:$0x1] %vm485, %v469
      %489 = vst.msk [vmem:[%s482 + $0xf] sm:$0xfe] %vm483, %v470
      %490 = vst.msk [vmem:[%s482 + $0x17] sm:$0x1] %vm485, %v471
      %491 = vst.msk [vmem:[%s482 + $0x17] sm:$0xfe] %vm483, %v472
      %492 = vst.msk [vmem:[%s482 + $0x1f] sm:$0x1] %vm485, %v473
      %493 = vst.msk [vmem:[%s482 + $0x1f] sm:$0xfe] %vm483, %v474
      %494 = vst.msk [vmem:[%s482 + $0x27] sm:$0x1] %vm485, %v475
      %495 = vst.msk [vmem:[%s482 + $0x27] sm:$0xfe] %vm483, %v476
      %496 = vst.msk [vmem:[%s482 + $0x2f] sm:$0x1] %vm485, %v477
      %497 = vst.msk [vmem:[%s482 + $0x2f] sm:$0xfe] %vm483, %v478
      %498 = vst.msk [vmem:[%s482 + $0x37] sm:$0x1] %vm485, %v479
      %499 = vst.msk [vmem:[%s482 + $0x37] sm:$0xfe] %vm483, %v480
      %500 = vst.msk [vmem:[%s482 + $0x3f] sm:$0x1] %vm485, %v481
      %v501 = vmul.f32 %v316, %v336
      %v502 = vmul.f32 %v317, %v336
      %v503 = vmul.f32 %v318, %v336
      %v504 = vmul.f32 %v319, %v336
      %v505 = vmul.f32 %v320, %v336
      %v506 = vmul.f32 %v321, %v336
      %v507 = vmul.f32 %v322, %v336
      %v508 = vmul.f32 %v323, %v336
      %v509 = vadd.f32 %v501, %v350
      %v510 = vadd.f32 %v502, %v350
      %v511 = vadd.f32 %v503, %v350
      %v512 = vadd.f32 %v504, %v350
      %v513 = vadd.f32 %v505, %v350
      %v514 = vadd.f32 %v506, %v350
      %v515 = vadd.f32 %v507, %v350
      %v516 = vadd.f32 %v508, %v350
      %525 = vrot.lane.b32.xlu0 %v509, 4
      %v526 = vpop.permute.xlu0 %525
      %527 = vrot.lane.b32.xlu0 %v510, 4
      %v528 = vpop.permute.xlu0 %527
      %529 = vrot.lane.b32.xlu0 %v511, 4
      %v530 = vpop.permute.xlu0 %529
      %531 = vrot.lane.b32.xlu0 %v512, 4
      %v532 = vpop.permute.xlu0 %531
      %533 = vrot.lane.b32.xlu0 %v513, 4
      %v534 = vpop.permute.xlu0 %533
      %535 = vrot.lane.b32.xlu0 %v514, 4
      %v536 = vpop.permute.xlu0 %535
      %537 = vrot.lane.b32.xlu0 %v515, 4
      %v538 = vpop.permute.xlu0 %537
      %539 = vrot.lane.b32.xlu0 %v516, 4
      %v540 = vpop.permute.xlu0 %539
      %v549 = vsel %vm392, %v236, %v526
      %v550 = vsel %vm392, %v237, %v528
      %v551 = vsel %vm392, %v238, %v530
      %v552 = vsel %vm392, %v239, %v532
      %v553 = vsel %vm392, %v240, %v534
      %v554 = vsel %vm392, %v241, %v536
      %v555 = vsel %vm392, %v242, %v538
      %v556 = vsel %vm392, %v243, %v540
      %s557 = scalar_lea.vmem %s217, 128
      %558 = vst.msk [vmem:[%s557] sm:$0xff] %vm401, %v549
      %559 = vst.msk [vmem:[%s557 + $0x8] sm:$0xff] %vm401, %v550
      %560 = vst.msk [vmem:[%s557 + $0x10] sm:$0xff] %vm401, %v551
      %561 = vst.msk [vmem:[%s557 + $0x18] sm:$0xff] %vm401, %v552
      %562 = vst.msk [vmem:[%s557 + $0x20] sm:$0xff] %vm401, %v553
      %563 = vst.msk [vmem:[%s557 + $0x28] sm:$0xff] %vm401, %v554
      %564 = vst.msk [vmem:[%s557 + $0x30] sm:$0xff] %vm401, %v555
      %565 = vst.msk [vmem:[%s557 + $0x38] sm:$0xff] %vm401, %v556
      %v566 = vmul.f32 %v324, %v336
      %v567 = vmul.f32 %v325, %v336
      %v568 = vmul.f32 %v326, %v336
      %v569 = vmul.f32 %v327, %v336
      %v570 = vmul.f32 %v328, %v336
      %v571 = vmul.f32 %v329, %v336
      %v572 = vmul.f32 %v330, %v336
      %v573 = vmul.f32 %v331, %v336
      %v574 = vadd.f32 %v566, %v350
      %v575 = vadd.f32 %v567, %v350
      %v576 = vadd.f32 %v568, %v350
      %v577 = vadd.f32 %v569, %v350
      %v578 = vadd.f32 %v570, %v350
      %v579 = vadd.f32 %v571, %v350
      %v580 = vadd.f32 %v572, %v350
      %v581 = vadd.f32 %v573, %v350
      %v590 = vrot.slane %v574, 7
      %v591 = vrot.slane %v575, 7
      %v592 = vrot.slane %v576, 7
      %v593 = vrot.slane %v577, 7
      %v594 = vrot.slane %v578, 7
      %v595 = vrot.slane %v579, 7
      %v596 = vrot.slane %v580, 7
      %v597 = vrot.slane %v581, 7
      %598 = vrot.lane.b32.xlu0 %v590, 4
      %v599 = vpop.permute.xlu0 %598
      %600 = vrot.lane.b32.xlu0 %v591, 4
      %v601 = vpop.permute.xlu0 %600
      %602 = vrot.lane.b32.xlu0 %v592, 4
      %v603 = vpop.permute.xlu0 %602
      %604 = vrot.lane.b32.xlu0 %v593, 4
      %v605 = vpop.permute.xlu0 %604
      %606 = vrot.lane.b32.xlu0 %v594, 4
      %v607 = vpop.permute.xlu0 %606
      %608 = vrot.lane.b32.xlu0 %v595, 4
      %v609 = vpop.permute.xlu0 %608
      %610 = vrot.lane.b32.xlu0 %v596, 4
      %v611 = vpop.permute.xlu0 %610
      %612 = vrot.lane.b32.xlu0 %v597, 4
      %v613 = vpop.permute.xlu0 %612
      %v622 = vsel %vm392, %v220, %v599
      %v623 = vsel %vm392, %v221, %v599
      %v624 = vsel %vm392, %v222, %v601
      %v625 = vsel %vm392, %v223, %v601
      %v626 = vsel %vm392, %v224, %v603
      %v627 = vsel %vm392, %v225, %v603
      %v628 = vsel %vm392, %v226, %v605
      %v629 = vsel %vm392, %v227, %v605
      %v630 = vsel %vm392, %v228, %v607
      %v631 = vsel %vm392, %v229, %v607
      %v632 = vsel %vm392, %v230, %v609
      %v633 = vsel %vm392, %v231, %v609
      %v634 = vsel %vm392, %v232, %v611
      %v635 = vsel %vm392, %v233, %v611
      %v636 = vsel %vm392, %v234, %v613
      %v637 = vsel %vm392, %v235, %v613
      %s638 = scalar_lea.vmem %s217, 192
      %639 = vst.msk [vmem:[%s638 - $0x1] sm:$0xfe] %vm483, %v622
      %640 = vst.msk [vmem:[%s638 + $0x7] sm:$0x1] %vm485, %v623
      %641 = vst.msk [vmem:[%s638 + $0x7] sm:$0xfe] %vm483, %v624
      %642 = vst.msk [vmem:[%s638 + $0xf] sm:$0x1] %vm485, %v625
      %643 = vst.msk [vmem:[%s638 + $0xf] sm:$0xfe] %vm483, %v626
      %644 = vst.msk [vmem:[%s638 + $0x17] sm:$0x1] %vm485, %v627
      %645 = vst.msk [vmem:[%s638 + $0x17] sm:$0xfe] %vm483, %v628
      %646 = vst.msk [vmem:[%s638 + $0x1f] sm:$0x1] %vm485, %v629
      %647 = vst.msk [vmem:[%s638 + $0x1f] sm:$0xfe] %vm483, %v630
      %648 = vst.msk [vmem:[%s638 + $0x27] sm:$0x1] %vm485, %v631
      %649 = vst.msk [vmem:[%s638 + $0x27] sm:$0xfe] %vm483, %v632
      %650 = vst.msk [vmem:[%s638 + $0x2f] sm:$0x1] %vm485, %v633
      %651 = vst.msk [vmem:[%s638 + $0x2f] sm:$0xfe] %vm483, %v634
      %652 = vst.msk [vmem:[%s638 + $0x37] sm:$0x1] %vm485, %v635
      %653 = vst.msk [vmem:[%s638 + $0x37] sm:$0xfe] %vm483, %v636
      %654 = vst.msk [vmem:[%s638 + $0x3f] sm:$0x1] %vm485, %v637
      %p655 = scmp.lt.s32.totalorder %s15, 1
      %s656 = scalar_select %p655, %s15, 1
      %s657 = smul.addr %s656, 32
      %s658 = smul.addr %s657, 8
      %s659 = scalar_lea.vmem %s4, %s658
      // Predicated region
      $region37: #{unet_skip_block_forward.3} parent=35 // pred_check
        %p660 = pneg %p127
      $region38: #{unet_skip_block_forward.3} parent=35 // pred_check_branch
        %662 = sbr.rel (%p660) target = $region40
      $region39: #{unet_skip_block_forward.3} parent=35 // pred_region
        _
      $region40: #{unet_skip_block_forward.3} parent=35 // pred_fallthru
        _
    $region36: #{unet_skip_block_forward.3} parent=5 // pred_fallthru
      _
    %p663 = scmp.le.s32.totalorder 2, %s10
    // Predicated region
    $region41: #{unet_skip_block_forward.3} parent=5 // pred_check
      %p664 = pneg %p663
    $region42: #{unet_skip_block_forward.3} parent=5 // pred_check_branch
      %666 = sbr.rel (%p664) target = $region44
    $region43: #{unet_skip_block_forward.3} parent=5 // pred_region
      %s667 = ssub.s32 %s10, 2
      // Predicated region
      $region45: #{unet_skip_block_forward.3} parent=43 // pred_check
        %p668 = pneg %p133
      $region46: #{unet_skip_block_forward.3} parent=43 // pred_check_branch
        %670 = sbr.rel (%p668) target = $region48
      $region47: #{unet_skip_block_forward.3} parent=43 // pred_region
        %p671 = scmp.lt.s32.totalorder %s16, 1
        %s672 = scalar_select %p671, %s16, 1
        %s673 = smul.addr %s672, 32
        %s674 = smul.addr %s673, 8
        %s675 = scalar_lea.vmem %s4, %s674
      $region48: #{unet_skip_block_forward.3} parent=43 // pred_fallthru
        _
    $region44: #{unet_skip_block_forward.3} parent=5 // pred_fallthru
      _
  $region6: #{unet_skip_block_forward.3} parent=0 // loop_footer
    %s14 = sadd.s32 1, %s10
  $region7: #{unet_skip_block_forward.3} parent=0 // loop_footer_branch
    %9 = sbr.rel target = $region3
  $region8: #{unet_skip_block_forward.3} parent=0 // loop_exit
    _

// kernel: unet_skip_block_forward.2
$region0: #{unet_skip_block_forward.2}
  #allocation0 [shape = 'u32[]', space=smem, size = 0x4, offset = 0x4, fixed_abs, tag = 'smem constant byte address 0x4 - core index']
  #allocation1 [shape = 'u32[144,128]{1,0:T(1,128)}', space=vmem, size = 0x12000, scoped, tag = 'internal scratch']
  #allocation2 [shape = 'bf16[1,10,10,8]{3,2,1,0:T(8,128)(2,1)}', space=vmem, size = 0xa000, scoped, tag = 'scratch operand']
  %s0 = inlined_call_operand.vmem [shape: f32[2,4,9,9,4], index: 0, kind: input, shape index: {}]
  %s1 = inlined_call_operand.vmem [shape: bf16[64,8], index: 1, kind: input, shape index: {}]
  %s2 = inlined_call_operand.vmem [shape: bf16[2,2,32,4], index: 2, kind: input, shape index: {}]
  %s3 = inlined_call_operand.vmem [shape: bf16[2,2,2,8,8,4], index: 3, kind: output, shape index: {0}]
  %s4 = inlined_call_operand.vmem [shape: f32[2,2,4], index: 4, kind: output, shape index: {1}]
  %5 = xla_tuple %s3, %s4
  %s6 = sld [smem:[#allocation0]]
  $region53: #{unet_skip_block_forward.2} parent=0
    _
  %s8 = ssub.s32 1, %s6
  %s9 = scalar_select 0, %s8, %s6
  loop: start=0, step=1, limit=4
  $region2: #{unet_skip_block_forward.2} parent=0 // loop_pre_header
    _
  $region3: #{unet_skip_block_forward.2} parent=0 // loop_header
    %s11 = sphi 0, %s15
    %p12 = scmp.ge.s32.totalorder %s11, 4
    %s21 = sphi 0, %s23
    %s24 = sphi 0, %s21
    %s25 = sphi 0, %s24
    %s41 = sphi 0, %s25
    %s45 = sphi 0, %s45
    %s47 = sphi 0, %s45
    %s48 = sphi 0, %s47
    %s62 = sphi 0, %s48
    %s66 = sphi 0, %s66
    %s68 = sphi 0, %s66
    %s69 = sphi 0, %s68
    %s83 = sphi 0, %s69
    %s89 = sphi 0, %s91
    %s92 = sphi 0, %s89
    %s93 = sphi 0, %s92
    %s109 = sphi 0, %s93
    %s115 = sphi 0, %s117
    %s118 = sphi 0, %s115
    %s119 = sphi 0, %s118
    %s135 = sphi 0, %s119
  $region4: #{unet_skip_block_forward.2} parent=0 // loop_header_branch
    %14 = sbr.rel (%p12) target = $region8
  $region5: #{unet_skip_block_forward.2} parent=0 // loop_body
    %s16 = ssub.s32 %s11, 1
    %s17 = ssub.s32 %s11, 2
    %s18 = sadd.s32 %s11, 1
    %s19 = ssub.s32 %s11, %s18
    %p20 = scmp.eq.s32.totalorder %s19, 0
    %s22 = sadd.s32 %s21, 1
    %s23 = scalar_select %p20, %s21, %s22
    %p26 = pneg %p20
    %p27 = scmp.eq.s32.totalorder %s11, 1
    %p28 = por %p26, %p27
    %p29 = scmp.ne.s32.totalorder %s21, %s24
    %p30 = scmp.eq.s32.totalorder %s11, 0
    %p31 = por %p29, %p30
    %p32 = scmp.ne.s32.totalorder %s21, %s24
    %p33 = scmp.eq.s32.totalorder %s16, 1
    %p34 = por %p32, %p33
    %p35 = scmp.ne.s32.totalorder %s24, %s25
    %p36 = scmp.eq.s32.totalorder %s16, 0
    %p37 = por %p35, %p36
    %p38 = scmp.ne.s32.totalorder %s24, %s25
    %p39 = scmp.eq.s32.totalorder %s17, 1
    %p40 = por %p38, %p39
    %p42 = scmp.ne.s32.totalorder %s25, %s41
    %p43 = scmp.eq.s32.totalorder %s17, 0
    %p44 = por %p42, %p43
    %s46 = sadd.s32 %s45, 1
    %p49 = scmp.eq.s32.totalorder %s11, 1
    %p50 = scmp.ne.s32.totalorder %s45, %s47
    %p51 = scmp.eq.s32.totalorder %s11, 0
    %p52 = por %p50, %p51
    %p53 = scmp.ne.s32.totalorder %s45, %s47
    %p54 = scmp.eq.s32.totalorder %s16, 1
    %p55 = por %p53, %p54
    %p56 = scmp.ne.s32.totalorder %s47, %s48
    %p57 = scmp.eq.s32.totalorder %s16, 0
    %p58 = por %p56, %p57
    %p59 = scmp.ne.s32.totalorder %s47, %s48
    %p60 = scmp.eq.s32.totalorder %s17, 1
    %p61 = por %p59, %p60
    %p63 = scmp.ne.s32.totalorder %s48, %s62
    %p64 = scmp.eq.s32.totalorder %s17, 0
    %p65 = por %p63, %p64
    %s67 = sadd.s32 %s66, 1
    %p70 = scmp.eq.s32.totalorder %s11, 1
    %p71 = scmp.ne.s32.totalorder %s66, %s68
    %p72 = scmp.eq.s32.totalorder %s11, 0
    %p73 = por %p71, %p72
    %p74 = scmp.ne.s32.totalorder %s66, %s68
    %p75 = scmp.eq.s32.totalorder %s16, 1
    %p76 = por %p74, %p75
    %p77 = scmp.ne.s32.totalorder %s68, %s69
    %p78 = scmp.eq.s32.totalorder %s16, 0
    %p79 = por %p77, %p78
    %p80 = scmp.ne.s32.totalorder %s68, %s69
    %p81 = scmp.eq.s32.totalorder %s17, 1
    %p82 = por %p80, %p81
    %p84 = scmp.ne.s32.totalorder %s69, %s83
    %p85 = scmp.eq.s32.totalorder %s17, 0
    %p86 = por %p84, %p85
    %s87 = ssub.s32 %s11, %s18
    %p88 = scmp.eq.s32.totalorder %s87, 0
    %s90 = sadd.s32 %s89, 1
    %s91 = scalar_select %p88, %s89, %s90
    %p94 = pneg %p88
    %p95 = scmp.eq.s32.totalorder %s11, 1
    %p96 = por %p94, %p95
    %p97 = scmp.ne.s32.totalorder %s89, %s92
    %p98 = scmp.eq.s32.totalorder %s11, 0
    %p99 = por %p97, %p98
    %p100 = scmp.ne.s32.totalorder %s89, %s92
    %p101 = scmp.eq.s32.totalorder %s16, 1
    %p102 = por %p100, %p101
    %p103 = scmp.ne.s32.totalorder %s92, %s93
    %p104 = scmp.eq.s32.totalorder %s16, 0
    %p105 = por %p103, %p104
    %p106 = scmp.ne.s32.totalorder %s92, %s93
    %p107 = scmp.eq.s32.totalorder %s17, 1
    %p108 = por %p106, %p107
    %p110 = scmp.ne.s32.totalorder %s93, %s109
    %p111 = scmp.eq.s32.totalorder %s17, 0
    %p112 = por %p110, %p111
    %s113 = ssub.s32 %s11, %s18
    %p114 = scmp.eq.s32.totalorder %s113, 0
    %s116 = sadd.s32 %s115, 1
    %s117 = scalar_select %p114, %s115, %s116
    %p120 = pneg %p114
    %p121 = scmp.eq.s32.totalorder %s11, 1
    %p122 = por %p120, %p121
    %p123 = scmp.ne.s32.totalorder %s115, %s118
    %p124 = scmp.eq.s32.totalorder %s11, 0
    %p125 = por %p123, %p124
    %p126 = scmp.ne.s32.totalorder %s115, %s118
    %p127 = scmp.eq.s32.totalorder %s16, 1
    %p128 = por %p126, %p127
    %p129 = scmp.ne.s32.totalorder %s118, %s119
    %p130 = scmp.eq.s32.totalorder %s16, 0
    %p131 = por %p129, %p130
    %p132 = scmp.ne.s32.totalorder %s118, %s119
    %p133 = scmp.eq.s32.totalorder %s17, 1
    %p134 = por %p132, %p133
    %p136 = scmp.ne.s32.totalorder %s119, %s135
    %p137 = scmp.eq.s32.totalorder %s17, 0
    %p138 = por %p136, %p137
    %p139 = scmp.le.s32.totalorder 1, %s11
    %p140 = scmp.lt.s32.totalorder %s11, 3
    %p141 = pnand %p139, %p140
    %p142 = pneg %p141
    // Predicated region
    $region9: #{unet_skip_block_forward.2} parent=5 // pred_check
      _
    $region10: #{unet_skip_block_forward.2} parent=5 // pred_check_branch
      %144 = sbr.rel (%p141) target = $region12
    $region11: #{unet_skip_block_forward.2} parent=5 // pred_region
      %s145 = ssub.s32 %s11, 1
      // Predicated region
      $region13: #{unet_skip_block_forward.2} parent=11 // pred_check
        %p146 = pneg %p58
      $region14: #{unet_skip_block_forward.2} parent=11 // pred_check_branch
        %148 = sbr.rel (%p146) target = $region16
      $region15: #{unet_skip_block_forward.2} parent=11 // pred_region
        _
      $region16: #{unet_skip_block_forward.2} parent=11 // pred_fallthru
        _
      // Predicated region
      $region17: #{unet_skip_block_forward.2} parent=11 // pred_check
        %p149 = pneg %p79
      $region18: #{unet_skip_block_forward.2} parent=11 // pred_check_branch
        %151 = sbr.rel (%p149) target = $region20
      $region19: #{unet_skip_block_forward.2} parent=11 // pred_region
        _
      $region20: #{unet_skip_block_forward.2} parent=11 // pred_fallthru
        _
    $region12: #{unet_skip_block_forward.2} parent=5 // pred_fallthru
      _
    %p152 = scmp.lt.s32.totalorder %s11, 2
    // Predicated region
    $region21: #{unet_skip_block_forward.2} parent=5 // pred_check
      %p153 = pneg %p152
    $region22: #{unet_skip_block_forward.2} parent=5 // pred_check_branch
      %155 = sbr.rel (%p153) target = $region24
    $region23: #{unet_skip_block_forward.2} parent=5 // pred_region
      // Predicated region
      $region25: #{unet_skip_block_forward.2} parent=23 // pred_check
        %p156 = pneg %p31
      $region26: #{unet_skip_block_forward.2} parent=23 // pred_check_branch
        %158 = sbr.rel (%p156) target = $region28
      $region27: #{unet_skip_block_forward.2} parent=23 // pred_region
        %p159 = scmp.lt.s32.totalorder %s11, 1
        %s160 = scalar_select %p159, %s11, 1
        %s161 = smul.addr %s160, 72
        %s162 = smul.addr %s161, 8
        %s163 = scalar_lea.vmem %s0, %s162
      $region28: #{unet_skip_block_forward.2} parent=23 // pred_fallthru
        _
    $region24: #{unet_skip_block_forward.2} parent=5 // pred_fallthru
      _
    %p164 = scmp.le.s32.totalorder 1, %s11
    %p165 = scmp.lt.s32.totalorder %s11, 3
    %p166 = pnand %p164, %p165
    %p167 = pneg %p166
    // Predicated region
    $region29: #{unet_skip_block_forward.2} parent=5 // pred_check
      _
    $region30: #{unet_skip_block_forward.2} parent=5 // pred_check_branch
      %169 = sbr.rel (%p166) target = $region32
    $region31: #{unet_skip_block_forward.2} parent=5 // pred_region
      %s170 = ssub.s32 %s11, 1
      %p171 = scmp.lt.s32.totalorder %s16, 1
      %s172 = scalar_select %p171, %s16, 1
      %s173 = smul.addr %s172, 72
      %s174 = smul.addr %s173, 8
      %s175 = scalar_lea.vmem %s0, %s174
      %p176 = pneg %p37
      %p177 = pneg %p34
      %p178 = pneg %p58
      %p179 = pneg %p55
      %p180 = pneg %p79
      %p181 = pneg %p76
      %p182 = pneg %p105
      %p183 = pneg %p102
      %p184 = scmp.lt.s32.totalorder %s16, 1
      %s185 = scalar_select %p184, %s16, 1
      %s186 = smul.addr %s185, 32
      %s187 = smul.addr %s186, 4
      %s188 = scalar_lea.vmem %s3, %s187
      %p189 = pneg %p131
      %p190 = pneg %p128
      %p191 = scmp.lt.s32.totalorder %s16, 1
      %s192 = scalar_select %p191, %s16, 1
      %s193 = smul.addr %s192, 2
      %s194 = scalar_lea.vmem %s4, %s193
      %p195 = scmp.lt.s32.totalorder %s16, 1
      %s196 = scalar_select %p195, %s16, 1
      %s197 = smul.addr %s196, 72
      %s198 = smul.addr %s197, 8
      %s199 = scalar_lea.vmem %s0, %s198
      %p200 = scmp.lt.s32.totalorder %s16, 1
      %s201 = scalar_select %p200, %s16, 1
      %s202 = smul.addr %s201, 32
      %s203 = smul.addr %s202, 4
      %s204 = scalar_lea.vmem %s3, %s203
      %p205 = scmp.lt.s32.totalorder %s16, 1
      %s206 = scalar_select %p205, %s16, 1
      %s207 = smul.addr %s206, 2
      %s208 = scalar_lea.vmem %s4, %s207
      %v210 = vld [vmem:[%s199] sm:$0xff]
      %v211 = vld [vmem:[%s199 + $0x8] sm:$0x1]
      %v212 = vld [vmem:[%s199 + $0x10] sm:$0xff]
      %v213 = vld [vmem:[%s199 + $0x18] sm:$0x1]
      %v214 = vld [vmem:[%s199 + $0x20] sm:$0xff]
      %v215 = vld [vmem:[%s199 + $0x28] sm:$0x1]
      %v216 = vld [vmem:[%s199 + $0x30] sm:$0xff]
      %v217 = vld [vmem:[%s199 + $0x38] sm:$0x1]
      %v218 = vld [vmem:[%s199 + $0x40] sm:$0xff]
      %v219 = vld [vmem:[%s199 + $0x48] sm:$0x1]
      %v220 = vld [vmem:[%s199 + $0x50] sm:$0xff]
      %v221 = vld [vmem:[%s199 + $0x58] sm:$0x1]
      %v222 = vld [vmem:[%s199 + $0x60] sm:$0xff]
      %v223 = vld [vmem:[%s199 + $0x68] sm:$0x1]
      %v224 = vld [vmem:[%s199 + $0x70] sm:$0xff]
      %v225 = vld [vmem:[%s199 + $0x78] sm:$0x1]
      %v226 = vld [vmem:[%s199 + $0x80] sm:$0xff]
      %v227 = vld [vmem:[%s199 + $0x88] sm:$0x1]
      %v228 = vld [vmem:[%s199 + $0x90] sm:$0xff]
      %v229 = vld [vmem:[%s199 + $0x98] sm:$0x1]
      %v230 = vld [vmem:[%s199 + $0xa0] sm:$0xff]
      %v231 = vld [vmem:[%s199 + $0xa8] sm:$0x1]
      %v232 = vld [vmem:[%s199 + $0xb0] sm:$0xff]
      %v233 = vld [vmem:[%s199 + $0xb8] sm:$0x1]
      %v234 = vld [vmem:[%s199 + $0xc0] sm:$0xff]
      %v235 = vld [vmem:[%s199 + $0xc8] sm:$0x1]
      %v236 = vld [vmem:[%s199 + $0xd0] sm:$0xff]
      %v237 = vld [vmem:[%s199 + $0xd8] sm:$0x1]
      %v238 = vld [vmem:[%s199 + $0xe0] sm:$0xff]
      %v239 = vld [vmem:[%s199 + $0xe8] sm:$0x1]
      %v240 = vld [vmem:[%s199 + $0xf0] sm:$0xff]
      %v241 = vld [vmem:[%s199 + $0xf8] sm:$0x1]
      %v242 = vld [vmem:[%s199 + $0x100] sm:$0xff]
      %v243 = vld [vmem:[%s199 + $0x108] sm:$0x1]
      %v244 = vld [vmem:[%s199 + $0x110] sm:$0xff]
      %v245 = vld [vmem:[%s199 + $0x118] sm:$0x1]
      %v246 = vld [vmem:[%s199 + $0x120] sm:$0xff]
      %v247 = vld [vmem:[%s199 + $0x128] sm:$0x1]
      %v248 = vld [vmem:[%s199 + $0x130] sm:$0xff]
      %v249 = vld [vmem:[%s199 + $0x138] sm:$0x1]
      %v250 = vld [vmem:[%s199 + $0x140] sm:$0xff]
      %v251 = vld [vmem:[%s199 + $0x148] sm:$0x1]
      %v252 = vld [vmem:[%s199 + $0x150] sm:$0xff]
      %v253 = vld [vmem:[%s199 + $0x158] sm:$0x1]
      %v254 = vld [vmem:[%s199 + $0x160] sm:$0xff]
      %v255 = vld [vmem:[%s199 + $0x168] sm:$0x1]
      %v256 = vld [vmem:[%s199 + $0x170] sm:$0xff]
      %v257 = vld [vmem:[%s199 + $0x178] sm:$0x1]
      %v258 = vld [vmem:[%s199 + $0x180] sm:$0xff]
      %v259 = vld [vmem:[%s199 + $0x188] sm:$0x1]
      %v260 = vld [vmem:[%s199 + $0x190] sm:$0xff]
      %v261 = vld [vmem:[%s199 + $0x198] sm:$0x1]
      %v262 = vld [vmem:[%s199 + $0x1a0] sm:$0xff]
      %v263 = vld [vmem:[%s199 + $0x1a8] sm:$0x1]
      %v264 = vld [vmem:[%s199 + $0x1b0] sm:$0xff]
      %v265 = vld [vmem:[%s199 + $0x1b8] sm:$0x1]
      %v266 = vld [vmem:[%s199 + $0x1c0] sm:$0xff]
      %v267 = vld [vmem:[%s199 + $0x1c8] sm:$0x1]
      %v268 = vld [vmem:[%s199 + $0x1d0] sm:$0xff]
      %v269 = vld [vmem:[%s199 + $0x1d8] sm:$0x1]
      %v270 = vld [vmem:[%s199 + $0x1e0] sm:$0xff]
      %v271 = vld [vmem:[%s199 + $0x1e8] sm:$0x1]
      %v272 = vld [vmem:[%s199 + $0x1f0] sm:$0xff]
      %v273 = vld [vmem:[%s199 + $0x1f8] sm:$0x1]
      %v274 = vld [vmem:[%s199 + $0x200] sm:$0xff]
      %v275 = vld [vmem:[%s199 + $0x208] sm:$0x1]
      %v276 = vld [vmem:[%s199 + $0x210] sm:$0xff]
      %v277 = vld [vmem:[%s199 + $0x218] sm:$0x1]
      %v278 = vld [vmem:[%s199 + $0x220] sm:$0xff]
      %v279 = vld [vmem:[%s199 + $0x228] sm:$0x1]
      %v280 = vld [vmem:[%s199 + $0x230] sm:$0xff]
      %v281 = vld [vmem:[%s199 + $0x238] sm:$0x1]
      %vm282 = vcmp.ge.f32.partialorder %v210, 0.0
      %vm283 = vcmp.ge.f32.partialorder %v211, 0.0
      %vm284 = vcmp.ge.f32.partialorder %v212, 0.0
      %vm285 = vcmp.ge.f32.partialorder %v213, 0.0
      %vm286 = vcmp.ge.f32.partialorder %v214, 0.0
      %vm287 = vcmp.ge.f32.partialorder %v215, 0.0
      %vm288 = vcmp.ge.f32.partialorder %v216, 0.0
      %vm289 = vcmp.ge.f32.partialorder %v217, 0.0
      %vm290 = vcmp.ge.f32.partialorder %v218, 0.0
      %vm291 = vcmp.ge.f32.partialorder %v219, 0.0
      %vm292 = vcmp.ge.f32.partialorder %v220, 0.0
      %vm293 = vcmp.ge.f32.partialorder %v221, 0.0
      %vm294 = vcmp.ge.f32.partialorder %v222, 0.0
      %vm295 = vcmp.ge.f32.partialorder %v223, 0.0
      %vm296 = vcmp.ge.f32.partialorder %v224, 0.0
      %vm297 = vcmp.ge.f32.partialorder %v225, 0.0
      %vm298 = vcmp.ge.f32.partialorder %v226, 0.0
      %vm299 = vcmp.ge.f32.partialorder %v227, 0.0
      %vm300 = vcmp.ge.f32.partialorder %v228, 0.0
      %vm301 = vcmp.ge.f32.partialorder %v229, 0.0
      %vm302 = vcmp.ge.f32.partialorder %v230, 0.0
      %vm303 = vcmp.ge.f32.partialorder %v231, 0.0
      %vm304 = vcmp.ge.f32.partialorder %v232, 0.0
      %vm305 = vcmp.ge.f32.partialorder %v233, 0.0
      %vm306 = vcmp.ge.f32.partialorder %v234, 0.0
      %vm307 = vcmp.ge.f32.partialorder %v235, 0.0
      %vm308 = vcmp.ge.f32.partialorder %v236, 0.0
      %vm309 = vcmp.ge.f32.partialorder %v237, 0.0
      %vm310 = vcmp.ge.f32.partialorder %v238, 0.0
      %vm311 = vcmp.ge.f32.partialorder %v239, 0.0
      %vm312 = vcmp.ge.f32.partialorder %v240, 0.0
      %vm313 = vcmp.ge.f32.partialorder %v241, 0.0
      %vm314 = vcmp.ge.f32.partialorder %v242, 0.0
      %vm315 = vcmp.ge.f32.partialorder %v243, 0.0
      %vm316 = vcmp.ge.f32.partialorder %v244, 0.0
      %vm317 = vcmp.ge.f32.partialorder %v245, 0.0
      %vm318 = vcmp.ge.f32.partialorder %v246, 0.0
      %vm319 = vcmp.ge.f32.partialorder %v247, 0.0
      %vm320 = vcmp.ge.f32.partialorder %v248, 0.0
      %vm321 = vcmp.ge.f32.partialorder %v249, 0.0
      %vm322 = vcmp.ge.f32.partialorder %v250, 0.0
      %vm323 = vcmp.ge.f32.partialorder %v251, 0.0
      %vm324 = vcmp.ge.f32.partialorder %v252, 0.0
      %vm325 = vcmp.ge.f32.partialorder %v253, 0.0
      %vm326 = vcmp.ge.f32.partialorder %v254, 0.0
      %vm327 = vcmp.ge.f32.partialorder %v255, 0.0
      %vm328 = vcmp.ge.f32.partialorder %v256, 0.0
      %vm329 = vcmp.ge.f32.partialorder %v257, 0.0
      %vm330 = vcmp.ge.f32.partialorder %v258, 0.0
      %vm331 = vcmp.ge.f32.partialorder %v259, 0.0
      %vm332 = vcmp.ge.f32.partialorder %v260, 0.0
      %vm333 = vcmp.ge.f32.partialorder %v261, 0.0
      %vm334 = vcmp.ge.f32.partialorder %v262, 0.0
      %vm335 = vcmp.ge.f32.partialorder %v263, 0.0
      %vm336 = vcmp.ge.f32.partialorder %v264, 0.0
      %vm337 = vcmp.ge.f32.partialorder %v265, 0.0
      %vm338 = vcmp.ge.f32.partialorder %v266, 0.0
      %vm339 = vcmp.ge.f32.partialorder %v267, 0.0
      %vm340 = vcmp.ge.f32.partialorder %v268, 0.0
      %vm341 = vcmp.ge.f32.partialorder %v269, 0.0
      %vm342 = vcmp.ge.f32.partialorder %v270, 0.0
      %vm343 = vcmp.ge.f32.partialorder %v271, 0.0
      %vm344 = vcmp.ge.f32.partialorder %v272, 0.0
      %vm345 = vcmp.ge.f32.partialorder %v273, 0.0
      %vm346 = vcmp.ge.f32.partialorder %v274, 0.0
      %vm347 = vcmp.ge.f32.partialorder %v275, 0.0
      %vm348 = vcmp.ge.f32.partialorder %v276, 0.0
      %vm349 = vcmp.ge.f32.partialorder %v277, 0.0
      %vm350 = vcmp.ge.f32.partialorder %v278, 0.0
      %vm351 = vcmp.ge.f32.partialorder %v279, 0.0
      %vm352 = vcmp.ge.f32.partialorder %v280, 0.0
      %vm353 = vcmp.ge.f32.partialorder %v281, 0.0
      %v354 = vmul.f32 %v210, 0.2
      %v355 = vmul.f32 %v211, 0.2
      %v356 = vmul.f32 %v212, 0.2
      %v357 = vmul.f32 %v213, 0.2
      %v358 = vmul.f32 %v214, 0.2
      %v359 = vmul.f32 %v215, 0.2
      %v360 = vmul.f32 %v216, 0.2
      %v361 = vmul.f32 %v217, 0.2
      %v362 = vmul.f32 %v218, 0.2
      %v363 = vmul.f32 %v219, 0.2
      %v364 = vmul.f32 %v220, 0.2
      %v365 = vmul.f32 %v221, 0.2
      %v366 = vmul.f32 %v222, 0.2
      %v367 = vmul.f32 %v223, 0.2
      %v368 = vmul.f32 %v224, 0.2
      %v369 = vmul.f32 %v225, 0.2
      %v370 = vmul.f32 %v226, 0.2
      %v371 = vmul.f32 %v227, 0.2
      %v372 = vmul.f32 %v228, 0.2
      %v373 = vmul.f32 %v229, 0.2
      %v374 = vmul.f32 %v230, 0.2
      %v375 = vmul.f32 %v231, 0.2
      %v376 = vmul.f32 %v232, 0.2
      %v377 = vmul.f32 %v233, 0.2
      %v378 = vmul.f32 %v234, 0.2
      %v379 = vmul.f32 %v235, 0.2
      %v380 = vmul.f32 %v236, 0.2
      %v381 = vmul.f32 %v237, 0.2
      %v382 = vmul.f32 %v238, 0.2
      %v383 = vmul.f32 %v239, 0.2
      %v384 = vmul.f32 %v240, 0.2
      %v385 = vmul.f32 %v241, 0.2
      %v386 = vmul.f32 %v242, 0.2
      %v387 = vmul.f32 %v243, 0.2
      %v388 = vmul.f32 %v244, 0.2
      %v389 = vmul.f32 %v245, 0.2
      %v390 = vmul.f32 %v246, 0.2
      %v391 = vmul.f32 %v247, 0.2
      %v392 = vmul.f32 %v248, 0.2
      %v393 = vmul.f32 %v249, 0.2
      %v394 = vmul.f32 %v250, 0.2
      %v395 = vmul.f32 %v251, 0.2
      %v396 = vmul.f32 %v252, 0.2
      %v397 = vmul.f32 %v253, 0.2
      %v398 = vmul.f32 %v254, 0.2
      %v399 = vmul.f32 %v255, 0.2
      %v400 = vmul.f32 %v256, 0.2
      %v401 = vmul.f32 %v257, 0.2
      %v402 = vmul.f32 %v258, 0.2
      %v403 = vmul.f32 %v259, 0.2
      %v404 = vmul.f32 %v260, 0.2
      %v405 = vmul.f32 %v261, 0.2
      %v406 = vmul.f32 %v262, 0.2
      %v407 = vmul.f32 %v263, 0.2
      %v408 = vmul.f32 %v264, 0.2
      %v409 = vmul.f32 %v265, 0.2
      %v410 = vmul.f32 %v266, 0.2
      %v411 = vmul.f32 %v267, 0.2
      %v412 = vmul.f32 %v268, 0.2
      %v413 = vmul.f32 %v269, 0.2
      %v414 = vmul.f32 %v270, 0.2
      %v415 = vmul.f32 %v271, 0.2
      %v416 = vmul.f32 %v272, 0.2
      %v417 = vmul.f32 %v273, 0.2
      %v418 = vmul.f32 %v274, 0.2
      %v419 = vmul.f32 %v275, 0.2
      %v420 = vmul.f32 %v276, 0.2
      %v421 = vmul.f32 %v277, 0.2
      %v422 = vmul.f32 %v278, 0.2
      %v423 = vmul.f32 %v279, 0.2
      %v424 = vmul.f32 %v280, 0.2
      %v425 = vmul.f32 %v281, 0.2
      %v426 = vsel %vm282, %v210, %v354
      %v427 = vsel %vm283, %v211, %v355
      %v428 = vsel %vm284, %v212, %v356
      %v429 = vsel %vm285, %v213, %v357
      %v430 = vsel %vm286, %v214, %v358
      %v431 = vsel %vm287, %v215, %v359
      %v432 = vsel %vm288, %v216, %v360
      %v433 = vsel %vm289, %v217, %v361
      %v434 = vsel %vm290, %v218, %v362
      %v435 = vsel %vm291, %v219, %v363
      %v436 = vsel %vm292, %v220, %v364
      %v437 = vsel %vm293, %v221, %v365
      %v438 = vsel %vm294, %v222, %v366
      %v439 = vsel %vm295, %v223, %v367
      %v440 = vsel %vm296, %v224, %v368
      %v441 = vsel %vm297, %v225, %v369
      %v442 = vsel %vm298, %v226, %v370
      %v443 = vsel %vm299, %v227, %v371
      %v444 = vsel %vm300, %v228, %v372
      %v445 = vsel %vm301, %v229, %v373
      %v446 = vsel %vm302, %v230, %v374
      %v447 = vsel %vm303, %v231, %v375
      %v448 = vsel %vm304, %v232, %v376
      %v449 = vsel %vm305, %v233, %v377
      %v450 = vsel %vm306, %v234, %v378
      %v451 = vsel %vm307, %v235, %v379
      %v452 = vsel %vm308, %v236, %v380
      %v453 = vsel %vm309, %v237, %v381
      %v454 = vsel %vm310, %v238, %v382
      %v455 = vsel %vm311, %v239, %v383
      %v456 = vsel %vm312, %v240, %v384
      %v457 = vsel %vm313, %v241, %v385
      %v458 = vsel %vm314, %v242, %v386
      %v459 = vsel %vm315, %v243, %v387
      %v460 = vsel %vm316, %v244, %v388
      %v461 = vsel %vm317, %v245, %v389
      %v462 = vsel %vm318, %v246, %v390
      %v463 = vsel %vm319, %v247, %v391
      %v464 = vsel %vm320, %v248, %v392
      %v465 = vsel %vm321, %v249, %v393
      %v466 = vsel %vm322, %v250, %v394
      %v467 = vsel %vm323, %v251, %v395
      %v468 = vsel %vm324, %v252, %v396
      %v469 = vsel %vm325, %v253, %v397
      %v470 = vsel %vm326, %v254, %v398
      %v471 = vsel %vm327, %v255, %v399
      %v472 = vsel %vm328, %v256, %v400
      %v473 = vsel %vm329, %v257, %v401
      %v474 = vsel %vm330, %v258, %v402
      %v475 = vsel %vm331, %v259, %v403
      %v476 = vsel %vm332, %v260, %v404
      %v477 = vsel %vm333, %v261, %v405
      %v478 = vsel %vm334, %v262, %v406
      %v479 = vsel %vm335, %v263, %v407
      %v480 = vsel %vm336, %v264, %v408
      %v481 = vsel %vm337, %v265, %v409
      %v482 = vsel %vm338, %v266, %v410
      %v483 = vsel %vm339, %v267, %v411
      %v484 = vsel %vm340, %v268, %v412
      %v485 = vsel %vm341, %v269, %v413
      %v486 = vsel %vm342, %v270, %v414
      %v487 = vsel %vm343, %v271, %v415
      %v488 = vsel %vm344, %v272, %v416
      %v489 = vsel %vm345, %v273, %v417
      %v490 = vsel %vm346, %v274, %v418
      %v491 = vsel %vm347, %v275, %v419
      %v492 = vsel %vm348, %v276, %v420
      %v493 = vsel %vm349, %v277, %v421
      %v494 = vsel %vm350, %v278, %v422
      %v495 = vsel %vm351, %v279, %v423
      %v496 = vsel %vm352, %v280, %v424
      %v497 = vsel %vm353, %v281, %v425
      %v498 = vpack.c.bf16 %v427, %v426
      %v499 = vpack.c.bf16 %v429, %v428
      %v500 = vpack.c.bf16 %v431, %v430
      %v501 = vpack.c.bf16 %v433, %v432
      %v502 = vpack.c.bf16 %v435, %v434
      %v503 = vpack.c.bf16 %v437, %v436
      %v504 = vpack.c.bf16 %v439, %v438
      %v505 = vpack.c.bf16 %v441, %v440
      %v506 = vpack.c.bf16 %v443, %v442
      %v507 = vpack.c.bf16 %v445, %v444
      %v508 = vpack.c.bf16 %v447, %v446
      %v509 = vpack.c.bf16 %v449, %v448
      %v510 = vpack.c.bf16 %v451, %v450
      %v511 = vpack.c.bf16 %v453, %v452
      %v512 = vpack.c.bf16 %v455, %v454
      %v513 = vpack.c.bf16 %v457, %v456
      %v514 = vpack.c.bf16 %v459, %v458
      %v515 = vpack.c.bf16 %v461, %v460
      %v516 = vpack.c.bf16 %v463, %v462
      %v517 = vpack.c.bf16 %v465, %v464
      %v518 = vpack.c.bf16 %v467, %v466
      %v519 = vpack.c.bf16 %v469, %v468
      %v520 = vpack.c.bf16 %v471, %v470
      %v521 = vpack.c.bf16 %v473, %v472
      %v522 = vpack.c.bf16 %v475, %v474
      %v523 = vpack.c.bf16 %v477, %v476
      %v524 = vpack.c.bf16 %v479, %v478
      %v525 = vpack.c.bf16 %v481, %v480
      %v526 = vpack.c.bf16 %v483, %v482
      %v527 = vpack.c.bf16 %v485, %v484
      %v528 = vpack.c.bf16 %v487, %v486
      %v529 = vpack.c.bf16 %v489, %v488
      %v530 = vpack.c.bf16 %v491, %v490
      %v531 = vpack.c.bf16 %v493, %v492
      %v532 = vpack.c.bf16 %v495, %v494
      %v533 = vpack.c.bf16 %v497, %v496
      %v542 = vunpack.c.l.b16 %v498
      %v543 = vunpack.c.h.b16 %v498
      %v544 = vunpack.c.l.b16 %v499
      %v545 = vunpack.c.h.b16 %v499
      %v546 = vunpack.c.l.b16 %v500
      %v547 = vunpack.c.h.b16 %v500
      %v548 = vunpack.c.l.b16 %v501
      %v549 = vunpack.c.h.b16 %v501
      %v550 = vunpack.c.l.b16 %v502
      %v551 = vunpack.c.h.b16 %v502
      %v552 = vunpack.c.l.b16 %v503
      %v553 = vunpack.c.h.b16 %v503
      %v554 = vunpack.c.l.b16 %v504
      %v555 = vunpack.c.h.b16 %v504
      %v556 = vunpack.c.l.b16 %v505
      %v557 = vunpack.c.h.b16 %v505
      %v558 = vpack.c.b16 %v542, %v542
      %v559 = vpack.c.b16 %v543, %v543
      %v560 = vpack.c.b16 %v544, %v544
      %v561 = vpack.c.b16 %v545, %v545
      %v562 = vpack.c.b16 %v546, %v546
      %v563 = vpack.c.b16 %v547, %v547
      %v564 = vpack.c.b16 %v548, %v548
      %v565 = vpack.c.b16 %v549, %v549
      %v566 = vpack.c.b16 %v550, %v550
      %v567 = vpack.c.b16 %v551, %v551
      %v568 = vpack.c.b16 %v552, %v552
      %v569 = vpack.c.b16 %v553, %v553
      %v570 = vpack.c.b16 %v554, %v554
      %v571 = vpack.c.b16 %v555, %v555
      %v572 = vpack.c.b16 %v556, %v556
      %v573 = vpack.c.b16 %v557, %v557
      %vm574 = vsmask.f32 3328
      %vm575 = vsmask.f32 7440
      %vm576 = vmor %vm574, %vm575
      %v578 = vshrl.u32 %v558, 16
      %v580 = vrot.slane %v578, 4
      %v581 = vshll.u32 %v558, 16
      %v583 = vrot.slane %v581, 5
      %v584 = vor.u32 %v580, %v583
      %v585 = vrot.slane %v584, 4
      %v587 = vshll.u32 %v559, 16
      %v589 = vrot.slane %v587, 5
      %v590 = vsel %vm576, %v585, %v589
      %v592 = vshrl.u32 %v560, 16
      %v594 = vrot.slane %v592, 4
      %v595 = vshll.u32 %v560, 16
      %v597 = vrot.slane %v595, 5
      %v598 = vor.u32 %v594, %v597
      %v599 = vrot.slane %v598, 4
      %v601 = vshll.u32 %v561, 16
      %v603 = vrot.slane %v601, 5
      %v604 = vsel %vm576, %v599, %v603
      %v606 = vshrl.u32 %v562, 16
      %v608 = vrot.slane %v606, 4
      %v609 = vshll.u32 %v562, 16
      %v611 = vrot.slane %v609, 5
      %v612 = vor.u32 %v608, %v611
      %v613 = vrot.slane %v612, 4
      %v615 = vshll.u32 %v563, 16
      %v617 = vrot.slane %v615, 5
      %v618 = vsel %vm576, %v613, %v617
      %v620 = vshrl.u32 %v564, 16
      %v622 = vrot.slane %v620, 4
      %v623 = vshll.u32 %v564, 16
      %v625 = vrot.slane %v623, 5
      %v626 = vor.u32 %v622, %v625
      %v627 = vrot.slane %v626, 4
      %v629 = vshll.u32 %v565, 16
      %v631 = vrot.slane %v629, 5
      %v632 = vsel %vm576, %v627, %v631
      %v634 = vshrl.u32 %v566, 16
      %v636 = vrot.slane %v634, 4
      %v637 = vshll.u32 %v566, 16
      %v639 = vrot.slane %v637, 5
      %v640 = vor.u32 %v636, %v639
      %v641 = vrot.slane %v640, 4
      %v643 = vshll.u32 %v567, 16
      %v645 = vrot.slane %v643, 5
      %v646 = vsel %vm576, %v641, %v645
      %v648 = vshrl.u32 %v568, 16
      %v650 = vrot.slane %v648, 4
      %v651 = vshll.u32 %v568, 16
      %v653 = vrot.slane %v651, 5
      %v654 = vor.u32 %v650, %v653
      %v655 = vrot.slane %v654, 4
      %v657 = vshll.u32 %v569, 16
      %v659 = vrot.slane %v657, 5
      %v660 = vsel %vm576, %v655, %v659
      %v662 = vshrl.u32 %v570, 16
      %v664 = vrot.slane %v662, 4
      %v665 = vshll.u32 %v570, 16
      %v667 = vrot.slane %v665, 5
      %v668 = vor.u32 %v664, %v667
      %v669 = vrot.slane %v668, 4
      %v671 = vshll.u32 %v571, 16
      %v673 = vrot.slane %v671, 5
      %v674 = vsel %vm576, %v669, %v673
      %v676 = vshrl.u32 %v572, 16
      %v678 = vrot.slane %v676, 4
      %v679 = vshll.u32 %v572, 16
      %v681 = vrot.slane %v679, 5
      %v682 = vor.u32 %v678, %v681
      %v683 = vrot.slane %v682, 4
      %v685 = vshll.u32 %v573, 16
      %v687 = vrot.slane %v685, 5
      %v688 = vsel %vm576, %v683, %v687
      %v697 = vunpack.c.l.b16 %v507
      %v698 = vunpack.c.h.b16 %v507
      %v699 = vunpack.c.l.b16 %v508
      %v700 = vunpack.c.h.b16 %v508
      %v701 = vunpack.c.l.b16 %v509
      %v702 = vunpack.c.h.b16 %v509
      %v703 = vunpack.c.l.b16 %v510
      %v704 = vunpack.c.h.b16 %v510
      %v705 = vunpack.c.l.b16 %v511
      %v706 = vunpack.c.h.b16 %v511
      %v707 = vunpack.c.l.b16 %v512
      %v708 = vunpack.c.h.b16 %v512
      %v709 = vunpack.c.l.b16 %v513
      %v710 = vunpack.c.h.b16 %v513
      %v711 = vunpack.c.l.b16 %v514
      %v712 = vunpack.c.h.b16 %v514
      %v713 = vpack.c.b16 %v697, %v697
      %v714 = vpack.c.b16 %v698, %v698
      %v715 = vpack.c.b16 %v699, %v699
      %v716 = vpack.c.b16 %v700, %v700
      %v717 = vpack.c.b16 %v701, %v701
      %v718 = vpack.c.b16 %v702, %v702
      %v719 = vpack.c.b16 %v703, %v703
      %v720 = vpack.c.b16 %v704, %v704
      %v721 = vpack.c.b16 %v705, %v705
      %v722 = vpack.c.b16 %v706, %v706
      %v723 = vpack.c.b16 %v707, %v707
      %v724 = vpack.c.b16 %v708, %v708
      %v725 = vpack.c.b16 %v709, %v709
      %v726 = vpack.c.b16 %v710, %v710
      %v727 = vpack.c.b16 %v711, %v711
      %v728 = vpack.c.b16 %v712, %v712
      %v730 = vshrl.u32 %v713, 16
      %v732 = vrot.slane %v730, 4
      %v733 = vshll.u32 %v713, 16
      %v735 = vrot.slane %v733, 5
      %v736 = vor.u32 %v732, %v735
      %v737 = vrot.slane %v736, 4
      %v739 = vshll.u32 %v714, 16
      %v741 = vrot.slane %v739, 5
      %v742 = vsel %vm576, %v737, %v741
      %v744 = vshrl.u32 %v715, 16
      %v746 = vrot.slane %v744, 4
      %v747 = vshll.u32 %v715, 16
      %v749 = vrot.slane %v747, 5
      %v750 = vor.u32 %v746, %v749
      %v751 = vrot.slane %v750, 4
      %v753 = vshll.u32 %v716, 16
      %v755 = vrot.slane %v753, 5
      %v756 = vsel %vm576, %v751, %v755
      %v758 = vshrl.u32 %v717, 16
      %v760 = vrot.slane %v758, 4
      %v761 = vshll.u32 %v717, 16
      %v763 = vrot.slane %v761, 5
      %v764 = vor.u32 %v760, %v763
      %v765 = vrot.slane %v764, 4
      %v767 = vshll.u32 %v718, 16
      %v769 = vrot.slane %v767, 5
      %v770 = vsel %vm576, %v765, %v769
      %v772 = vshrl.u32 %v719, 16
      %v774 = vrot.slane %v772, 4
      %v775 = vshll.u32 %v719, 16
      %v777 = vrot.slane %v775, 5
      %v778 = vor.u32 %v774, %v777
      %v779 = vrot.slane %v778, 4
      %v781 = vshll.u32 %v720, 16
      %v783 = vrot.slane %v781, 5
      %v784 = vsel %vm576, %v779, %v783
      %v786 = vshrl.u32 %v721, 16
      %v788 = vrot.slane %v786, 4
      %v789 = vshll.u32 %v721, 16
      %v791 = vrot.slane %v789, 5
      %v792 = vor.u32 %v788, %v791
      %v793 = vrot.slane %v792, 4
      %v795 = vshll.u32 %v722, 16
      %v797 = vrot.slane %v795, 5
      %v798 = vsel %vm576, %v793, %v797
      %v800 = vshrl.u32 %v723, 16
      %v802 = vrot.slane %v800, 4
      %v803 = vshll.u32 %v723, 16
      %v805 = vrot.slane %v803, 5
      %v806 = vor.u32 %v802, %v805
      %v807 = vrot.slane %v806, 4
      %v809 = vshll.u32 %v724, 16
      %v811 = vrot.slane %v809, 5
      %v812 = vsel %vm576, %v807, %v811
      %v814 = vshrl.u32 %v725, 16
      %v816 = vrot.slane %v814, 4
      %v817 = vshll.u32 %v725, 16
      %v819 = vrot.slane %v817, 5
      %v820 = vor.u32 %v816, %v819
      %v821 = vrot.slane %v820, 4
      %v823 = vshll.u32 %v726, 16
      %v825 = vrot.slane %v823, 5
      %v826 = vsel %vm576, %v821, %v825
      %v828 = vshrl.u32 %v727, 16
      %v830 = vrot.slane %v828, 4
      %v831 = vshll.u32 %v727, 16
      %v833 = vrot.slane %v831, 5
      %v834 = vor.u32 %v830, %v833
      %v835 = vrot.slane %v834, 4
      %v837 = vshll.u32 %v728, 16
      %v839 = vrot.slane %v837, 5
      %v840 = vsel %vm576, %v835, %v839
      %v849 = vunpack.c.l.b16 %v516
      %v850 = vunpack.c.h.b16 %v516
      %v851 = vunpack.c.l.b16 %v517
      %v852 = vunpack.c.h.b16 %v517
      %v853 = vunpack.c.l.b16 %v518
      %v854 = vunpack.c.h.b16 %v518
      %v855 = vunpack.c.l.b16 %v519
      %v856 = vunpack.c.h.b16 %v519
      %v857 = vunpack.c.l.b16 %v520
      %v858 = vunpack.c.h.b16 %v520
      %v859 = vunpack.c.l.b16 %v521
      %v860 = vunpack.c.h.b16 %v521
      %v861 = vunpack.c.l.b16 %v522
      %v862 = vunpack.c.h.b16 %v522
      %v863 = vunpack.c.l.b16 %v523
      %v864 = vunpack.c.h.b16 %v523
      %v865 = vpack.c.b16 %v849, %v849
      %v866 = vpack.c.b16 %v850, %v850
      %v867 = vpack.c.b16 %v851, %v851
      %v868 = vpack.c.b16 %v852, %v852
      %v869 = vpack.c.b16 %v853, %v853
      %v870 = vpack.c.b16 %v854, %v854
      %v871 = vpack.c.b16 %v855, %v855
      %v872 = vpack.c.b16 %v856, %v856
      %v873 = vpack.c.b16 %v857, %v857
      %v874 = vpack.c.b16 %v858, %v858
      %v875 = vpack.c.b16 %v859, %v859
      %v876 = vpack.c.b16 %v860, %v860
      %v877 = vpack.c.b16 %v861, %v861
      %v878 = vpack.c.b16 %v862, %v862
      %v879 = vpack.c.b16 %v863, %v863
      %v880 = vpack.c.b16 %v864, %v864
      %v882 = vshrl.u32 %v865, 16
      %v884 = vrot.slane %v882, 4
      %v885 = vshll.u32 %v865, 16
      %v887 = vrot.slane %v885, 5
      %v888 = vor.u32 %v884, %v887
      %v889 = vrot.slane %v888, 4
      %v891 = vshll.u32 %v866, 16
      %v893 = vrot.slane %v891, 5
      %v894 = vsel %vm576, %v889, %v893
      %v896 = vshrl.u32 %v867, 16
      %v898 = vrot.slane %v896, 4
      %v899 = vshll.u32 %v867, 16
      %v901 = vrot.slane %v899, 5
      %v902 = vor.u32 %v898, %v901
      %v903 = vrot.slane %v902, 4
      %v905 = vshll.u32 %v868, 16
      %v907 = vrot.slane %v905, 5
      %v908 = vsel %vm576, %v903, %v907
      %v910 = vshrl.u32 %v869, 16
      %v912 = vrot.slane %v910, 4
      %v913 = vshll.u32 %v869, 16
      %v915 = vrot.slane %v913, 5
      %v916 = vor.u32 %v912, %v915
      %v917 = vrot.slane %v916, 4
      %v919 = vshll.u32 %v870, 16
      %v921 = vrot.slane %v919, 5
      %v922 = vsel %vm576, %v917, %v921
      %v924 = vshrl.u32 %v871, 16
      %v926 = vrot.slane %v924, 4
      %v927 = vshll.u32 %v871, 16
      %v929 = vrot.slane %v927, 5
      %v930 = vor.u32 %v926, %v929
      %v931 = vrot.slane %v930, 4
      %v933 = vshll.u32 %v872, 16
      %v935 = vrot.slane %v933, 5
      %v936 = vsel %vm576, %v931, %v935
      %v938 = vshrl.u32 %v873, 16
      %v940 = vrot.slane %v938, 4
      %v941 = vshll.u32 %v873, 16
      %v943 = vrot.slane %v941, 5
      %v944 = vor.u32 %v940, %v943
      %v945 = vrot.slane %v944, 4
      %v947 = vshll.u32 %v874, 16
      %v949 = vrot.slane %v947, 5
      %v950 = vsel %vm576, %v945, %v949
      %v952 = vshrl.u32 %v875, 16
      %v954 = vrot.slane %v952, 4
      %v955 = vshll.u32 %v875, 16
      %v957 = vrot.slane %v955, 5
      %v958 = vor.u32 %v954, %v957
      %v959 = vrot.slane %v958, 4
      %v961 = vshll.u32 %v876, 16
      %v963 = vrot.slane %v961, 5
      %v964 = vsel %vm576, %v959, %v963
      %v966 = vshrl.u32 %v877, 16
      %v968 = vrot.slane %v966, 4
      %v969 = vshll.u32 %v877, 16
      %v971 = vrot.slane %v969, 5
      %v972 = vor.u32 %v968, %v971
      %v973 = vrot.slane %v972, 4
      %v975 = vshll.u32 %v878, 16
      %v977 = vrot.slane %v975, 5
      %v978 = vsel %vm576, %v973, %v977
      %v980 = vshrl.u32 %v879, 16
      %v982 = vrot.slane %v980, 4
      %v983 = vshll.u32 %v879, 16
      %v985 = vrot.slane %v983, 5
      %v986 = vor.u32 %v982, %v985
      %v987 = vrot.slane %v986, 4
      %v989 = vshll.u32 %v880, 16
      %v991 = vrot.slane %v989, 5
      %v992 = vsel %vm576, %v987, %v991
      %v1001 = vunpack.c.l.b16 %v525
      %v1002 = vunpack.c.h.b16 %v525
      %v1003 = vunpack.c.l.b16 %v526
      %v1004 = vunpack.c.h.b16 %v526
      %v1005 = vunpack.c.l.b16 %v527
      %v1006 = vunpack.c.h.b16 %v527
      %v1007 = vunpack.c.l.b16 %v528
      %v1008 = vunpack.c.h.b16 %v528
      %v1009 = vunpack.c.l.b16 %v529
      %v1010 = vunpack.c.h.b16 %v529
      %v1011 = vunpack.c.l.b16 %v530
      %v1012 = vunpack.c.h.b16 %v530
      %v1013 = vunpack.c.l.b16 %v531
      %v1014 = vunpack.c.h.b16 %v531
      %v1015 = vunpack.c.l.b16 %v532
      %v1016 = vunpack.c.h.b16 %v532
      %v1017 = vpack.c.b16 %v1001, %v1001
      %v1018 = vpack.c.b16 %v1002, %v1002
      %v1019 = vpack.c.b16 %v1003, %v1003
      %v1020 = vpack.c.b16 %v1004, %v1004
      %v1021 = vpack.c.b16 %v1005, %v1005
      %v1022 = vpack.c.b16 %v1006, %v1006
      %v1023 = vpack.c.b16 %v1007, %v1007
      %v1024 = vpack.c.b16 %v1008, %v1008
      %v1025 = vpack.c.b16 %v1009, %v1009
      %v1026 = vpack.c.b16 %v1010, %v1010
      %v1027 = vpack.c.b16 %v1011, %v1011
      %v1028 = vpack.c.b16 %v1012, %v1012
      %v1029 = vpack.c.b16 %v1013, %v1013
      %v1030 = vpack.c.b16 %v1014, %v1014
      %v1031 = vpack.c.b16 %v1015, %v1015
      %v1032 = vpack.c.b16 %v1016, %v1016
      %v1034 = vshrl.u32 %v1017, 16
      %v1036 = vrot.slane %v1034, 4
      %v1037 = vshll.u32 %v1017, 16
      %v1039 = vrot.slane %v1037, 5
      %v1040 = vor.u32 %v1036, %v1039
      %v1041 = vrot.slane %v1040, 4
      %v1043 = vshll.u32 %v1018, 16
      %v1045 = vrot.slane %v1043, 5
      %v1046 = vsel %vm576, %v1041, %v1045
      %v1048 = vshrl.u32 %v1019, 16
      %v1050 = vrot.slane %v1048, 4
      %v1051 = vshll.u32 %v1019, 16
      %v1053 = vrot.slane %v1051, 5
      %v1054 = vor.u32 %v1050, %v1053
      %v1055 = vrot.slane %v1054, 4
      %v1057 = vshll.u32 %v1020, 16
      %v1059 = vrot.slane %v1057, 5
      %v1060 = vsel %vm576, %v1055, %v1059
      %v1062 = vshrl.u32 %v1021, 16
      %v1064 = vrot.slane %v1062, 4
      %v1065 = vshll.u32 %v1021, 16
      %v1067 = vrot.slane %v1065, 5
      %v1068 = vor.u32 %v1064, %v1067
      %v1069 = vrot.slane %v1068, 4
      %v1071 = vshll.u32 %v1022, 16
      %v1073 = vrot.slane %v1071, 5
      %v1074 = vsel %vm576, %v1069, %v1073
      %v1076 = vshrl.u32 %v1023, 16
      %v1078 = vrot.slane %v1076, 4
      %v1079 = vshll.u32 %v1023, 16
      %v1081 = vrot.slane %v1079, 5
      %v1082 = vor.u32 %v1078, %v1081
      %v1083 = vrot.slane %v1082, 4
      %v1085 = vshll.u32 %v1024, 16
      %v1087 = vrot.slane %v1085, 5
      %v1088 = vsel %vm576, %v1083, %v1087
      %v1090 = vshrl.u32 %v1025, 16
      %v1092 = vrot.slane %v1090, 4
      %v1093 = vshll.u32 %v1025, 16
      %v1095 = vrot.slane %v1093, 5
      %v1096 = vor.u32 %v1092, %v1095
      %v1097 = vrot.slane %v1096, 4
      %v1099 = vshll.u32 %v1026, 16
      %v1101 = vrot.slane %v1099, 5
      %v1102 = vsel %vm576, %v1097, %v1101
      %v1104 = vshrl.u32 %v1027, 16
      %v1106 = vrot.slane %v1104, 4
      %v1107 = vshll.u32 %v1027, 16
      %v1109 = vrot.slane %v1107, 5
      %v1110 = vor.u32 %v1106, %v1109
      %v1111 = vrot.slane %v1110, 4
      %v1113 = vshll.u32 %v1028, 16
      %v1115 = vrot.slane %v1113, 5
      %v1116 = vsel %vm576, %v1111, %v1115
      %v1118 = vshrl.u32 %v1029, 16
      %v1120 = vrot.slane %v1118, 4
      %v1121 = vshll.u32 %v1029, 16
      %v1123 = vrot.slane %v1121, 5
      %v1124 = vor.u32 %v1120, %v1123
      %v1125 = vrot.slane %v1124, 4
      %v1127 = vshll.u32 %v1030, 16
      %v1129 = vrot.slane %v1127, 5
      %v1130 = vsel %vm576, %v1125, %v1129
      %v1132 = vshrl.u32 %v1031, 16
      %v1134 = vrot.slane %v1132, 4
      %v1135 = vshll.u32 %v1031, 16
      %v1137 = vrot.slane %v1135, 5
      %v1138 = vor.u32 %v1134, %v1137
      %v1139 = vrot.slane %v1138, 4
      %v1141 = vshll.u32 %v1032, 16
      %v1143 = vrot.slane %v1141, 5
      %v1144 = vsel %vm576, %v1139, %v1143
      %v1146 = vunpack.c.l.b16 %v506
      %v1147 = vunpack.c.h.b16 %v506
      %v1148 = vpack.c.b16 %v1146, %v1146
      %v1149 = vpack.c.b16 %v1147, %v1147
      %v1151 = vshrl.u32 %v1148, 16
      %v1153 = vrot.slane %v1151, 4
      %v1154 = vshll.u32 %v1148, 16
      %v1156 = vrot.slane %v1154, 5
      %v1157 = vor.u32 %v1153, %v1156
      %v1158 = vrot.slane %v1157, 4
      %v1160 = vshll.u32 %v1149, 16
      %v1162 = vrot.slane %v1160, 5
      %v1163 = vsel %vm576, %v1158, %v1162
      %v1165 = vunpack.c.l.b16 %v515
      %v1166 = vunpack.c.h.b16 %v515
      %v1167 = vpack.c.b16 %v1165, %v1165
      %v1168 = vpack.c.b16 %v1166, %v1166
      %v1170 = vshrl.u32 %v1167, 16
      %v1172 = vrot.slane %v1170, 4
      %v1173 = vshll.u32 %v1167, 16
      %v1175 = vrot.slane %v1173, 5
      %v1176 = vor.u32 %v1172, %v1175
      %v1177 = vrot.slane %v1176, 4
      %v1179 = vshll.u32 %v1168, 16
      %v1181 = vrot.slane %v1179, 5
      %v1182 = vsel %vm576, %v1177, %v1181
      %v1184 = vunpack.c.l.b16 %v524
      %v1185 = vunpack.c.h.b16 %v524
      %v1186 = vpack.c.b16 %v1184, %v1184
      %v1187 = vpack.c.b16 %v1185, %v1185
      %v1189 = vshrl.u32 %v1186, 16
      %v1191 = vrot.slane %v1189, 4
      %v1192 = vshll.u32 %v1186, 16
      %v1194 = vrot.slane %v1192, 5
      %v1195 = vor.u32 %v1191, %v1194
      %v1196 = vrot.slane %v1195, 4
      %v1198 = vshll.u32 %v1187, 16
      %v1200 = vrot.slane %v1198, 5
      %v1201 = vsel %vm576, %v1196, %v1200
      %v1203 = vunpack.c.l.b16 %v533
      %v1204 = vunpack.c.h.b16 %v533
      %v1205 = vpack.c.b16 %v1203, %v1203
      %v1206 = vpack.c.b16 %v1204, %v1204
      %v1208 = vshrl.u32 %v1205, 16
      %v1210 = vrot.slane %v1208, 4
      %v1211 = vshll.u32 %v1205, 16
      %v1213 = vrot.slane %v1211, 5
      %v1214 = vor.u32 %v1210, %v1213
      %v1215 = vrot.slane %v1214, 4
      %v1217 = vshll.u32 %v1206, 16
      %v1219 = vrot.slane %v1217, 5
      %v1220 = vsel %vm576, %v1215, %v1219
      %v1221 = vpack.c.b16 %v544, %v542
      %v1222 = vpack.c.b16 %v548, %v546
      %v1223 = vpack.c.b16 %v552, %v550
      %v1224 = vpack.c.b16 %v556, %v554
      %v1225 = vpack.c.b16 %v699, %v697
      %v1226 = vpack.c.b16 %v703, %v701
      %v1227 = vpack.c.b16 %v707, %v705
      %v1228 = vpack.c.b16 %v711, %v709
      %1229 = vrot.lane.b32.xlu0 %v1225, 4
      %v1230 = vpop.permute.xlu0 %1229
      %1231 = vrot.lane.b32.xlu0 %v1226, 4
      %v1232 = vpop.permute.xlu0 %1231
      %1233 = vrot.lane.b32.xlu0 %v1227, 4
      %v1234 = vpop.permute.xlu0 %1233
      %1235 = vrot.lane.b32.xlu0 %v1228, 4
      %v1236 = vpop.permute.xlu0 %1235
      %v1237 = vunpack.c.l.b16 %v590
      %v1238 = vunpack.c.l.b16 %v604
      %v1239 = vunpack.c.l.b16 %v618
      %v1240 = vunpack.c.l.b16 %v632
      %v1241 = vunpack.c.l.b16 %v646
      %v1242 = vunpack.c.l.b16 %v660
      %v1243 = vunpack.c.l.b16 %v674
      %v1244 = vunpack.c.l.b16 %v688
      %v1245 = vpack.c.b16 %v1238, %v1237
      %v1246 = vpack.c.b16 %v1240, %v1239
      %v1247 = vpack.c.b16 %v1242, %v1241
      %v1248 = vpack.c.b16 %v1244, %v1243
      %1249 = vrot.lane.b32.xlu0 %v1245, 8
      %v1250 = vpop.permute.xlu0 %1249
      %1251 = vrot.lane.b32.xlu0 %v1246, 8
      %v1252 = vpop.permute.xlu0 %1251
      %1253 = vrot.lane.b32.xlu0 %v1247, 8
      %v1254 = vpop.permute.xlu0 %1253
      %1255 = vrot.lane.b32.xlu0 %v1248, 8
      %v1256 = vpop.permute.xlu0 %1255
      %v1257 = vunpack.c.l.b16 %v742
      %v1258 = vunpack.c.l.b16 %v756
      %v1259 = vunpack.c.l.b16 %v770
      %v1260 = vunpack.c.l.b16 %v784
      %v1261 = vunpack.c.l.b16 %v798
      %v1262 = vunpack.c.l.b16 %v812
      %v1263 = vunpack.c.l.b16 %v826
      %v1264 = vunpack.c.l.b16 %v840
      %v1265 = vpack.c.b16 %v1258, %v1257
      %v1266 = vpack.c.b16 %v1260, %v1259
      %v1267 = vpack.c.b16 %v1262, %v1261
      %v1268 = vpack.c.b16 %v1264, %v1263
      %1269 = vrot.lane.b32.xlu0 %v1265, 12
      %v1270 = vpop.permute.xlu0 %1269
      %1271 = vrot.lane.b32.xlu0 %v1266, 12
      %v1272 = vpop.permute.xlu0 %1271
      %1273 = vrot.lane.b32.xlu0 %v1267, 12
      %v1274 = vpop.permute.xlu0 %1273
      %1275 = vrot.lane.b32.xlu0 %v1268, 12
      %v1276 = vpop.permute.xlu0 %1275
      %v1277 = vpack.c.b16 %v851, %v849
      %v1278 = vpack.c.b16 %v855, %v853
      %v1279 = vpack.c.b16 %v859, %v857
      %v1280 = vpack.c.b16 %v863, %v861
      %1281 = vrot.lane.b32.xlu0 %v1277, 16
      %v1282 = vpop.permute.xlu0 %1281
      %1283 = vrot.lane.b32.xlu0 %v1278, 16
      %v1284 = vpop.permute.xlu0 %1283
      %1285 = vrot.lane.b32.xlu0 %v1279, 16
      %v1286 = vpop.permute.xlu0 %1285
      %1287 = vrot.lane.b32.xlu0 %v1280, 16
      %v1288 = vpop.permute.xlu0 %1287
      %v1289 = vpack.c.b16 %v1003, %v1001
      %v1290 = vpack.c.b16 %v1007, %v1005
      %v1291 = vpack.c.b16 %v1011, %v1009
      %v1292 = vpack.c.b16 %v1015, %v1013
      %1293 = vrot.lane.b32.xlu0 %v1289, 20
      %v1294 = vpop.permute.xlu0 %1293
      %1295 = vrot.lane.b32.xlu0 %v1290, 20
      %v1296 = vpop.permute.xlu0 %1295
      %1297 = vrot.lane.b32.xlu0 %v1291, 20
      %v1298 = vpop.permute.xlu0 %1297
      %1299 = vrot.lane.b32.xlu0 %v1292, 20
      %v1300 = vpop.permute.xlu0 %1299
      %v1301 = vunpack.c.l.b16 %v894
      %v1302 = vunpack.c.l.b16 %v908
      %v1303 = vunpack.c.l.b16 %v922
      %v1304 = vunpack.c.l.b16 %v936
      %v1305 = vunpack.c.l.b16 %v950
      %v1306 = vunpack.c.l.b16 %v964
      %v1307 = vunpack.c.l.b16 %v978
      %v1308 = vunpack.c.l.b16 %v992
      %v1309 = vpack.c.b16 %v1302, %v1301
      %v1310 = vpack.c.b16 %v1304, %v1303
      %v1311 = vpack.c.b16 %v1306, %v1305
      %v1312 = vpack.c.b16 %v1308, %v1307
      %1313 = vrot.lane.b32.xlu0 %v1309, 24
      %v1314 = vpop.permute.xlu0 %1313
      %1315 = vrot.lane.b32.xlu0 %v1310, 24
      %v1316 = vpop.permute.xlu0 %1315
      %1317 = vrot.lane.b32.xlu0 %v1311, 24
      %v1318 = vpop.permute.xlu0 %1317
      %1319 = vrot.lane.b32.xlu0 %v1312, 24
      %v1320 = vpop.permute.xlu0 %1319
      %v1321 = vunpack.c.l.b16 %v1046
      %v1322 = vunpack.c.l.b16 %v1060
      %v1323 = vunpack.c.l.b16 %v1074
      %v1324 = vunpack.c.l.b16 %v1088
      %v1325 = vunpack.c.l.b16 %v1102
      %v1326 = vunpack.c.l.b16 %v1116
      %v1327 = vunpack.c.l.b16 %v1130
      %v1328 = vunpack.c.l.b16 %v1144
      %v1329 = vpack.c.b16 %v1322, %v1321
      %v1330 = vpack.c.b16 %v1324, %v1323
      %v1331 = vpack.c.b16 %v1326, %v1325
      %v1332 = vpack.c.b16 %v1328, %v1327
      %1333 = vrot.lane.b32.xlu0 %v1329, 28
      %v1334 = vpop.permute.xlu0 %1333
      %1335 = vrot.lane.b32.xlu0 %v1330, 28
      %v1336 = vpop.permute.xlu0 %1335
      %1337 = vrot.lane.b32.xlu0 %v1331, 28
      %v1338 = vpop.permute.xlu0 %1337
      %1339 = vrot.lane.b32.xlu0 %v1332, 28
      %v1340 = vpop.permute.xlu0 %1339
      %v1341 = vpack.c.b16 %v546, %v544
      %v1342 = vpack.c.b16 %v550, %v548
      %v1343 = vpack.c.b16 %v554, %v552
      %v1344 = vpack.c.b16 %v1146, %v556
      %1345 = vrot.lane.b32.xlu0 %v1341, 32
      %v1346 = vpop.permute.xlu0 %1345
      %1347 = vrot.lane.b32.xlu0 %v1342, 32
      %v1348 = vpop.permute.xlu0 %1347
      %1349 = vrot.lane.b32.xlu0 %v1343, 32
      %v1350 = vpop.permute.xlu0 %1349
      %1351 = vrot.lane.b32.xlu0 %v1344, 32
      %v1352 = vpop.permute.xlu0 %1351
      %v1353 = vpack.c.b16 %v701, %v699
      %v1354 = vpack.c.b16 %v705, %v703
      %v1355 = vpack.c.b16 %v709, %v707
      %v1356 = vpack.c.b16 %v1165, %v711
      %1357 = vrot.lane.b32.xlu0 %v1353, 36
      %v1358 = vpop.permute.xlu0 %1357
      %1359 = vrot.lane.b32.xlu0 %v1354, 36
      %v1360 = vpop.permute.xlu0 %1359
      %1361 = vrot.lane.b32.xlu0 %v1355, 36
      %v1362 = vpop.permute.xlu0 %1361
      %1363 = vrot.lane.b32.xlu0 %v1356, 36
      %v1364 = vpop.permute.xlu0 %1363
      %v1365 = vunpack.c.l.b16 %v1163
      %v1366 = vpack.c.b16 %v1239, %v1238
      %v1367 = vpack.c.b16 %v1241, %v1240
      %v1368 = vpack.c.b16 %v1243, %v1242
      %v1369 = vpack.c.b16 %v1365, %v1244
      %1370 = vrot.lane.b32.xlu0 %v1366, 40
      %v1371 = vpop.permute.xlu0 %1370
      %1372 = vrot.lane.b32.xlu0 %v1367, 40
      %v1373 = vpop.permute.xlu0 %1372
      %1374 = vrot.lane.b32.xlu0 %v1368, 40
      %v1375 = vpop.permute.xlu0 %1374
      %1376 = vrot.lane.b32.xlu0 %v1369, 40
      %v1377 = vpop.permute.xlu0 %1376
      %v1378 = vunpack.c.l.b16 %v1182
      %v1379 = vpack.c.b16 %v1259, %v1258
      %v1380 = vpack.c.b16 %v1261, %v1260
      %v1381 = vpack.c.b16 %v1263, %v1262
      %v1382 = vpack.c.b16 %v1378, %v1264
      %1383 = vrot.lane.b32.xlu0 %v1379, 44
      %v1384 = vpop.permute.xlu0 %1383
      %1385 = vrot.lane.b32.xlu0 %v1380, 44
      %v1386 = vpop.permute.xlu0 %1385
      %1387 = vrot.lane.b32.xlu0 %v1381, 44
      %v1388 = vpop.permute.xlu0 %1387
      %1389 = vrot.lane.b32.xlu0 %v1382, 44
      %v1390 = vpop.permute.xlu0 %1389
      %v1391 = vpack.c.b16 %v853, %v851
      %v1392 = vpack.c.b16 %v857, %v855
      %v1393 = vpack.c.b16 %v861, %v859
      %v1394 = vpack.c.b16 %v1184, %v863
      %1395 = vrot.lane.b32.xlu0 %v1391, 48
      %v1396 = vpop.permute.xlu0 %1395
      %1397 = vrot.lane.b32.xlu0 %v1392, 48
      %v1398 = vpop.permute.xlu0 %1397
      %1399 = vrot.lane.b32.xlu0 %v1393, 48
      %v1400 = vpop.permute.xlu0 %1399
      %1401 = vrot.lane.b32.xlu0 %v1394, 48
      %v1402 = vpop.permute.xlu0 %1401
      %v1403 = vpack.c.b16 %v1005, %v1003
      %v1404 = vpack.c.b16 %v1009, %v1007
      %v1405 = vpack.c.b16 %v1013, %v1011
      %v1406 = vpack.c.b16 %v1203, %v1015
      %1407 = vrot.lane.b32.xlu0 %v1403, 52
      %v1408 = vpop.permute.xlu0 %1407
      %1409 = vrot.lane.b32.xlu0 %v1404, 52
      %v1410 = vpop.permute.xlu0 %1409
      %1411 = vrot.lane.b32.xlu0 %v1405, 52
      %v1412 = vpop.permute.xlu0 %1411
      %1413 = vrot.lane.b32.xlu0 %v1406, 52
      %v1414 = vpop.permute.xlu0 %1413
      %v1415 = vunpack.c.l.b16 %v1201
      %v1416 = vpack.c.b16 %v1303, %v1302
      %v1417 = vpack.c.b16 %v1305, %v1304
      %v1418 = vpack.c.b16 %v1307, %v1306
      %v1419 = vpack.c.b16 %v1415, %v1308
      %1420 = vrot.lane.b32.xlu0 %v1416, 56
      %v1421 = vpop.permute.xlu0 %1420
      %1422 = vrot.lane.b32.xlu0 %v1417, 56
      %v1423 = vpop.permute.xlu0 %1422
      %1424 = vrot.lane.b32.xlu0 %v1418, 56
      %v1425 = vpop.permute.xlu0 %1424
      %1426 = vrot.lane.b32.xlu0 %v1419, 56
      %v1427 = vpop.permute.xlu0 %1426
      %v1428 = vunpack.c.l.b16 %v1220
      %v1429 = vpack.c.b16 %v1323, %v1322
      %v1430 = vpack.c.b16 %v1325, %v1324
      %v1431 = vpack.c.b16 %v1327, %v1326
      %v1432 = vpack.c.b16 %v1428, %v1328
      %1433 = vrot.lane.b32.xlu0 %v1429, 60
      %v1434 = vpop.permute.xlu0 %1433
      %1435 = vrot.lane.b32.xlu0 %v1430, 60
      %v1436 = vpop.permute.xlu0 %1435
      %1437 = vrot.lane.b32.xlu0 %v1431, 60
      %v1438 = vpop.permute.xlu0 %1437
      %1439 = vrot.lane.b32.xlu0 %v1432, 60
      %v1440 = vpop.permute.xlu0 %1439
      %vm1441 = vcmask 31744
      %v1444 = vsel %vm1441, %v1221, %v1230
      %v1447 = vsel %vm1441, %v1222, %v1232
      %v1450 = vsel %vm1441, %v1223, %v1234
      %v1453 = vsel %vm1441, %v1224, %v1236
      %vm1454 = vcmask 64512
      %v1456 = vsel %vm1454, %v1444, %v1250
      %v1458 = vsel %vm1454, %v1447, %v1252
      %v1460 = vsel %vm1454, %v1450, %v1254
      %v1462 = vsel %vm1454, %v1453, %v1256
      %vm1463 = vcmask 97280
      %v1465 = vsel %vm1463, %v1456, %v1270
      %v1467 = vsel %vm1463, %v1458, %v1272
      %v1469 = vsel %vm1463, %v1460, %v1274
      %v1471 = vsel %vm1463, %v1462, %v1276
      %vm1472 = vcmask 130048
      %v1474 = vsel %vm1472, %v1465, %v1282
      %v1476 = vsel %vm1472, %v1467, %v1284
      %v1478 = vsel %vm1472, %v1469, %v1286
      %v1480 = vsel %vm1472, %v1471, %v1288
      %vm1481 = vcmask 162816
      %v1483 = vsel %vm1481, %v1474, %v1294
      %v1485 = vsel %vm1481, %v1476, %v1296
      %v1487 = vsel %vm1481, %v1478, %v1298
      %v1489 = vsel %vm1481, %v1480, %v1300
      %vm1490 = vcmask 195584
      %v1492 = vsel %vm1490, %v1483, %v1314
      %v1494 = vsel %vm1490, %v1485, %v1316
      %v1496 = vsel %vm1490, %v1487, %v1318
      %v1498 = vsel %vm1490, %v1489, %v1320
      %vm1499 = vcmask 228352
      %v1501 = vsel %vm1499, %v1492, %v1334
      %v1503 = vsel %vm1499, %v1494, %v1336
      %v1505 = vsel %vm1499, %v1496, %v1338
      %v1507 = vsel %vm1499, %v1498, %v1340
      %vm1508 = vcmask 261120
      %v1510 = vsel %vm1508, %v1501, %v1346
      %v1512 = vsel %vm1508, %v1503, %v1348
      %v1514 = vsel %vm1508, %v1505, %v1350
      %v1516 = vsel %vm1508, %v1507, %v1352
      %vm1517 = vcmask 293888
      %v1519 = vsel %vm1517, %v1510, %v1358
      %v1521 = vsel %vm1517, %v1512, %v1360
      %v1523 = vsel %vm1517, %v1514, %v1362
      %v1525 = vsel %vm1517, %v1516, %v1364
      %vm1526 = vcmask 326656
      %v1528 = vsel %vm1526, %v1519, %v1371
      %v1530 = vsel %vm1526, %v1521, %v1373
      %v1532 = vsel %vm1526, %v1523, %v1375
      %v1534 = vsel %vm1526, %v1525, %v1377
      %vm1535 = vcmask 359424
      %v1537 = vsel %vm1535, %v1528, %v1384
      %v1539 = vsel %vm1535, %v1530, %v1386
      %v1541 = vsel %vm1535, %v1532, %v1388
      %v1543 = vsel %vm1535, %v1534, %v1390
      %vm1544 = vcmask 392192
      %v1546 = vsel %vm1544, %v1537, %v1396
      %v1548 = vsel %vm1544, %v1539, %v1398
      %v1550 = vsel %vm1544, %v1541, %v1400
      %v1552 = vsel %vm1544, %v1543, %v1402
      %vm1553 = vcmask 424960
      %v1555 = vsel %vm1553, %v1546, %v1408
      %v1557 = vsel %vm1553, %v1548, %v1410
      %v1559 = vsel %vm1553, %v1550, %v1412
      %v1561 = vsel %vm1553, %v1552, %v1414
      %vm1562 = vcmask 457728
      %v1564 = vsel %vm1562, %v1555, %v1421
      %v1566 = vsel %vm1562, %v1557, %v1423
      %v1568 = vsel %vm1562, %v1559, %v1425
      %v1570 = vsel %vm1562, %v1561, %v1427
      %vm1571 = vcmask 490496
      %v1573 = vsel %vm1571, %v1564, %v1434
      %v1575 = vsel %vm1571, %v1566, %v1436
      %v1577 = vsel %vm1571, %v1568, %v1438
      %v1579 = vsel %vm1571, %v1570, %v1440
      %v1580 = vld [vmem:[%s1] sm:$0xf]
      %v1581 = vld [vmem:[%s1 + $0x4] sm:$0xf]
      %v1582 = vld [vmem:[%s1 + $0x8] sm:$0xf]
      %v1583 = vld [vmem:[%s1 + $0xc] sm:$0xf]
      %v1584 = vld [vmem:[%s1 + $0x10] sm:$0xf]
      %v1585 = vld [vmem:[%s1 + $0x14] sm:$0xf]
      %v1586 = vld [vmem:[%s1 + $0x18] sm:$0xf]
      %v1587 = vld [vmem:[%s1 + $0x1c] sm:$0xf]
      %v1596 = vunpack.c.l.b16 %v1580
      %v1597 = vunpack.c.l.b16 %v1581
      %v1598 = vunpack.c.l.b16 %v1582
      %v1599 = vunpack.c.l.b16 %v1583
      %v1600 = vunpack.c.l.b16 %v1584
      %v1601 = vunpack.c.l.b16 %v1585
      %v1602 = vunpack.c.l.b16 %v1586
      %v1603 = vunpack.c.l.b16 %v1587
      %v1604 = vpack.c.b16 %v1597, %v1596
      %v1605 = vpack.c.b16 %v1599, %v1598
      %v1606 = vpack.c.b16 %v1601, %v1600
      %v1607 = vpack.c.b16 %v1603, %v1602
      %vm1612 = vcmask 523264
      %v1613 = vsel %vm1612, %v1573, 0
      %v1615 = vsel %vm1612, %v1575, 0
      %v1617 = vsel %vm1612, %v1577, 0
      %v1619 = vsel %vm1612, %v1579, 0
      %1621 = vmatprep.subr.bf16.mxu0 0
      %1622 = vmatpush1.bf16.msra.mxu0 %v1604
      %1623 = vmatprep.subr.bf16.mxu0 0
      %1624 = vmatpush1.bf16.msra.mxu0 %v1605
      %1625 = vmatprep.subr.bf16.mxu0 0
      %1626 = vmatpush1.bf16.msra.mxu0 %v1606
      %1627 = vmatprep.subr.bf16.mxu0 0
      %1628 = vmatpush1.bf16.msra.mxu0 %v1607
      %1629 = vmatprep.subr.bf16.mxu0 0
      %1630 = vmatpush1.bf16.msra.mxu0 0
      %1631 = vmatprep.subr.bf16.mxu0 0
      %1632 = vmatpush1.bf16.msra.mxu0 0
      %1633 = vmatprep.subr.bf16.mxu0 0
      %1634 = vmatpush1.bf16.msra.mxu0 0
      %1635 = vmatprep.subr.bf16.mxu0 0
      %1636 = vmatpush1.bf16.msra.mxu0 0
      %1637 = vmatprep.subr.bf16.mxu0 0
      %1638 = vmatpush1.bf16.msra.mxu0 0
      %1639 = vmatprep.subr.bf16.mxu0 0
      %1640 = vmatpush1.bf16.msra.mxu0 0
      %1641 = vmatprep.subr.bf16.mxu0 0
      %1642 = vmatpush1.bf16.msra.mxu0 0
      %1643 = vmatprep.subr.bf16.mxu0 0
      %1644 = vmatpush1.bf16.msra.mxu0 0
      %1645 = vmatprep.subr.bf16.mxu0 0
      %1646 = vmatpush1.bf16.msra.mxu0 0
      %1647 = vmatprep.subr.bf16.mxu0 0
      %1648 = vmatpush1.bf16.msra.mxu0 0
      %1649 = vmatprep.subr.bf16.mxu0 0
      %1650 = vmatpush1.bf16.msra.mxu0 0
      %1651 = vmatprep.subr.bf16.mxu0 0
      %1652 = vmatpush1.bf16.msra.mxu0 0
      %1653 = vmatprep.mubr.bf16.mxu0 0
      %1654 = vmatmul.mubr.bf16.gmra.mrb[0].mxu0 %v1613
      %v1655 = vpop.f32.mrb[0].mxu0
      %v1656 = vadd.f32 0.0, %v1655
      %v1657 = vpop.f32.mrb[0].mxu0
      %v1658 = vpop.f32.mrb[0].mxu0
      %v1659 = vadd.f32 0.0, %v1658
      %v1660 = vpop.f32.mrb[0].mxu0
      %1661 = vmatprep.mubr.bf16.mxu0 0
      %1662 = vmatmul.mubr.bf16.gmra.mrb[0].mxu0 %v1615
      %v1663 = vpop.f32.mrb[0].mxu0
      %v1664 = vadd.f32 0.0, %v1663
      %v1665 = vpop.f32.mrb[0].mxu0
      %v1666 = vpop.f32.mrb[0].mxu0
      %v1667 = vadd.f32 0.0, %v1666
      %v1668 = vpop.f32.mrb[0].mxu0
      %1669 = vmatprep.mubr.bf16.mxu0 0
      %1670 = vmatmul.mubr.bf16.gmra.mrb[0].mxu0 %v1617
      %v1671 = vpop.f32.mrb[0].mxu0
      %v1672 = vadd.f32 0.0, %v1671
      %v1673 = vpop.f32.mrb[0].mxu0
      %v1674 = vpop.f32.mrb[0].mxu0
      %v1675 = vadd.f32 0.0, %v1674
      %v1676 = vpop.f32.mrb[0].mxu0
      %1677 = vmatprep.mubr.bf16.mxu0 0
      %1678 = vmatmul.mubr.bf16.gmra.mrb[0].mxu0 %v1619
      %v1679 = vpop.f32.mrb[0].mxu0
      %v1680 = vadd.f32 0.0, %v1679
      %v1681 = vpop.f32.mrb[0].mxu0
      %v1682 = vpop.f32.mrb[0].mxu0
      %v1683 = vadd.f32 0.0, %v1682
      %v1684 = vpop.f32.mrb[0].mxu0
      %1685 = vdwg.mxu0
      %v1686 = vmax.f32 %v1656, 0.0
      %v1687 = vmax.f32 %v1659, 0.0
      %v1688 = vmax.f32 %v1664, 0.0
      %v1689 = vmax.f32 %v1667, 0.0
      %v1690 = vmax.f32 %v1672, 0.0
      %v1691 = vmax.f32 %v1675, 0.0
      %v1692 = vmax.f32 %v1680, 0.0
      %v1693 = vmax.f32 %v1683, 0.0
      %v1694 = vpack.c.bf16 %v1687, %v1686
      %v1695 = vpack.c.bf16 %v1689, %v1688
      %v1696 = vpack.c.bf16 %v1691, %v1690
      %v1697 = vpack.c.bf16 %v1693, %v1692
      %vm1698 = vcmask 60416
      %1699 = vst.msk [vmem:[#allocation2] sm:$0xf] %vm1698, 0
      %vm1700 = vcmask 57344
      %1701 = vst.msk [vmem:[#allocation2 + $0x4] sm:$0x1] %vm1700, 0
      %s1702 = scalar_lea.vmem [#allocation2], 72
      %1703 = vst.msk [vmem:[%s1702] sm:$0xf] %vm1698, 0
      %1704 = vst.msk [vmem:[%s1702 + $0x4] sm:$0x1] %vm1700, 0
      %vm1705 = vcmask 57344
      %vm1706 = vsmask.f32 256
      %vm1707 = vmand %vm1705, %vm1706
      %v1708 = vld [vmem:[#allocation2] sm:$0x1]
      %v1709 = vsel %vm1707, 0, %v1708
      %1710 = vst [vmem:[#allocation2] sm:$0x1] %v1709
      %v1711 = vld [vmem:[#allocation2 + $0x8] sm:$0x1]
      %v1712 = vsel %vm1707, 0, %v1711
      %1713 = vst [vmem:[#allocation2 + $0x8] sm:$0x1] %v1712
      %v1714 = vld [vmem:[#allocation2 + $0x10] sm:$0x1]
      %v1715 = vsel %vm1707, 0, %v1714
      %1716 = vst [vmem:[#allocation2 + $0x10] sm:$0x1] %v1715
      %v1717 = vld [vmem:[#allocation2 + $0x18] sm:$0x1]
      %v1718 = vsel %vm1707, 0, %v1717
      %1719 = vst [vmem:[#allocation2 + $0x18] sm:$0x1] %v1718
      %v1720 = vld [vmem:[#allocation2 + $0x20] sm:$0x1]
      %v1721 = vsel %vm1707, 0, %v1720
      %1722 = vst [vmem:[#allocation2 + $0x20] sm:$0x1] %v1721
      %v1723 = vld [vmem:[#allocation2 + $0x28] sm:$0x1]
      %v1724 = vsel %vm1707, 0, %v1723
      %1725 = vst [vmem:[#allocation2 + $0x28] sm:$0x1] %v1724
      %v1726 = vld [vmem:[#allocation2 + $0x30] sm:$0x1]
      %v1727 = vsel %vm1707, 0, %v1726
      %1728 = vst [vmem:[#allocation2 + $0x30] sm:$0x1] %v1727
      %v1729 = vld [vmem:[#allocation2 + $0x38] sm:$0x1]
      %v1730 = vsel %vm1707, 0, %v1729
      %1731 = vst [vmem:[#allocation2 + $0x38] sm:$0x1] %v1730
      %v1732 = vld [vmem:[#allocation2 + $0x40] sm:$0x1]
      %v1733 = vsel %vm1707, 0, %v1732
      %1734 = vst [vmem:[#allocation2 + $0x40] sm:$0x1] %v1733
      %v1735 = vld [vmem:[#allocation2 + $0x48] sm:$0x1]
      %v1736 = vsel %vm1707, 0, %v1735
      %1737 = vst [vmem:[#allocation2 + $0x48] sm:$0x1] %v1736
      %vm1738 = vsmask.f32 7938
      %vm1739 = vmand %vm1705, %vm1738
      %v1740 = vld [vmem:[#allocation2 + $0x4] sm:$0x1]
      %v1741 = vsel %vm1739, 0, %v1740
      %1742 = vst [vmem:[#allocation2 + $0x4] sm:$0x1] %v1741
      %v1743 = vld [vmem:[#allocation2 + $0xc] sm:$0x1]
      %v1744 = vsel %vm1739, 0, %v1743
      %1745 = vst [vmem:[#allocation2 + $0xc] sm:$0x1] %v1744
      %v1746 = vld [vmem:[#allocation2 + $0x14] sm:$0x1]
      %v1747 = vsel %vm1739, 0, %v1746
      %1748 = vst [vmem:[#allocation2 + $0x14] sm:$0x1] %v1747
      %v1749 = vld [vmem:[#allocation2 + $0x1c] sm:$0x1]
      %v1750 = vsel %vm1739, 0, %v1749
      %1751 = vst [vmem:[#allocation2 + $0x1c] sm:$0x1] %v1750
      %v1752 = vld [vmem:[#allocation2 + $0x24] sm:$0x1]
      %v1753 = vsel %vm1739, 0, %v1752
      %1754 = vst [vmem:[#allocation2 + $0x24] sm:$0x1] %v1753
      %v1755 = vld [vmem:[#allocation2 + $0x2c] sm:$0x1]
      %v1756 = vsel %vm1739, 0, %v1755
      %1757 = vst [vmem:[#allocation2 + $0x2c] sm:$0x1] %v1756
      %v1758 = vld [vmem:[#allocation2 + $0x34] sm:$0x1]
      %v1759 = vsel %vm1739, 0, %v1758
      %1760 = vst [vmem:[#allocation2 + $0x34] sm:$0x1] %v1759
      %v1761 = vld [vmem:[#allocation2 + $0x3c] sm:$0x1]
      %v1762 = vsel %vm1739, 0, %v1761
      %1763 = vst [vmem:[#allocation2 + $0x3c] sm:$0x1] %v1762
      %v1764 = vld [vmem:[#allocation2 + $0x44] sm:$0x1]
      %v1765 = vsel %vm1739, 0, %v1764
      %1766 = vst [vmem:[#allocation2 + $0x44] sm:$0x1] %v1765
      %v1767 = vld [vmem:[#allocation2 + $0x4c] sm:$0x1]
      %v1768 = vsel %vm1739, 0, %v1767
      %1769 = vst [vmem:[#allocation2 + $0x4c] sm:$0x1] %v1768
      %v1774 = vunpack.c.l.b16 %v1694
      %v1775 = vunpack.c.h.b16 %v1694
      %v1776 = vunpack.c.l.b16 %v1695
      %v1777 = vunpack.c.h.b16 %v1695
      %v1778 = vunpack.c.l.b16 %v1696
      %v1779 = vunpack.c.h.b16 %v1696
      %v1780 = vunpack.c.l.b16 %v1697
      %v1781 = vunpack.c.h.b16 %v1697
      %v1782 = vpack.c.b16 %v1774, %v1774
      %v1783 = vpack.c.b16 %v1775, %v1775
      %v1784 = vpack.c.b16 %v1776, %v1776
      %v1785 = vpack.c.b16 %v1777, %v1777
      %v1786 = vpack.c.b16 %v1778, %v1778
      %v1787 = vpack.c.b16 %v1779, %v1779
      %v1788 = vpack.c.b16 %v1780, %v1780
      %v1789 = vpack.c.b16 %v1781, %v1781
      %v1791 = vshrl.u32 %v1782, 16
      %v1793 = vrot.slane %v1791, 7
      %v1794 = vshll.u32 %v1782, 16
      %v1796 = vor.u32 %v1793, %v1794
      %v1797 = vrot.slane %v1793, 4
      %v1799 = vshrl.u32 %v1783, 16
      %v1801 = vrot.slane %v1799, 7
      %v1802 = vshll.u32 %v1783, 16
      %v1804 = vor.u32 %v1801, %v1802
      %v1805 = vrot.slane %v1801, 4
      %v1807 = vshrl.u32 %v1784, 16
      %v1809 = vrot.slane %v1807, 7
      %v1810 = vshll.u32 %v1784, 16
      %v1812 = vor.u32 %v1809, %v1810
      %v1813 = vrot.slane %v1809, 4
      %v1815 = vshrl.u32 %v1785, 16
      %v1817 = vrot.slane %v1815, 7
      %v1818 = vshll.u32 %v1785, 16
      %v1820 = vor.u32 %v1817, %v1818
      %v1821 = vrot.slane %v1817, 4
      %v1823 = vshrl.u32 %v1786, 16
      %v1825 = vrot.slane %v1823, 7
      %v1826 = vshll.u32 %v1786, 16
      %v1828 = vor.u32 %v1825, %v1826
      %v1829 = vrot.slane %v1825, 4
      %v1831 = vshrl.u32 %v1787, 16
      %v1833 = vrot.slane %v1831, 7
      %v1834 = vshll.u32 %v1787, 16
      %v1836 = vor.u32 %v1833, %v1834
      %v1837 = vrot.slane %v1833, 4
      %v1839 = vshrl.u32 %v1788, 16
      %v1841 = vrot.slane %v1839, 7
      %v1842 = vshll.u32 %v1788, 16
      %v1844 = vor.u32 %v1841, %v1842
      %v1845 = vrot.slane %v1841, 4
      %v1847 = vshrl.u32 %v1789, 16
      %v1849 = vrot.slane %v1847, 7
      %v1850 = vshll.u32 %v1789, 16
      %v1852 = vor.u32 %v1849, %v1850
      %v1853 = vrot.slane %v1849, 4
      %s1870 = scalar_lea.vmem [#allocation2], 8
      %vm1871 = vcmask 60416
      %vm1872 = vmand %vm1871, %vm1738
      %v1873 = vld [vmem:[%s1870] sm:$0xf]
      %v1874 = vsel %vm1872, %v1796, %v1873
      %1875 = vst [vmem:[%s1870] sm:$0xf] %v1874
      %v1876 = vld [vmem:[%s1870 + $0x4] sm:$0x1]
      %v1877 = vsel %vm1707, %v1797, %v1876
      %1878 = vst [vmem:[%s1870 + $0x4] sm:$0x1] %v1877
      %v1879 = vld [vmem:[%s1870 + $0x8] sm:$0xf]
      %v1880 = vsel %vm1872, %v1804, %v1879
      %1881 = vst [vmem:[%s1870 + $0x8] sm:$0xf] %v1880
      %v1882 = vld [vmem:[%s1870 + $0xc] sm:$0x1]
      %v1883 = vsel %vm1707, %v1805, %v1882
      %1884 = vst [vmem:[%s1870 + $0xc] sm:$0x1] %v1883
      %v1885 = vld [vmem:[%s1870 + $0x10] sm:$0xf]
      %v1886 = vsel %vm1872, %v1812, %v1885
      %1887 = vst [vmem:[%s1870 + $0x10] sm:$0xf] %v1886
      %v1888 = vld [vmem:[%s1870 + $0x14] sm:$0x1]
      %v1889 = vsel %vm1707, %v1813, %v1888
      %1890 = vst [vmem:[%s1870 + $0x14] sm:$0x1] %v1889
      %v1891 = vld [vmem:[%s1870 + $0x18] sm:$0xf]
      %v1892 = vsel %vm1872, %v1820, %v1891
      %1893 = vst [vmem:[%s1870 + $0x18] sm:$0xf] %v1892
      %v1894 = vld [vmem:[%s1870 + $0x1c] sm:$0x1]
      %v1895 = vsel %vm1707, %v1821, %v1894
      %1896 = vst [vmem:[%s1870 + $0x1c] sm:$0x1] %v1895
      %v1897 = vld [vmem:[%s1870 + $0x20] sm:$0xf]
      %v1898 = vsel %vm1872, %v1828, %v1897
      %1899 = vst [vmem:[%s1870 + $0x20] sm:$0xf] %v1898
      %v1900 = vld [vmem:[%s1870 + $0x24] sm:$0x1]
      %v1901 = vsel %vm1707, %v1829, %v1900
      %1902 = vst [vmem:[%s1870 + $0x24] sm:$0x1] %v1901
      %v1903 = vld [vmem:[%s1870 + $0x28] sm:$0xf]
      %v1904 = vsel %vm1872, %v1836, %v1903
      %1905 = vst [vmem:[%s1870 + $0x28] sm:$0xf] %v1904
      %v1906 = vld [vmem:[%s1870 + $0x2c] sm:$0x1]
      %v1907 = vsel %vm1707, %v1837, %v1906
      %1908 = vst [vmem:[%s1870 + $0x2c] sm:$0x1] %v1907
      %v1909 = vld [vmem:[%s1870 + $0x30] sm:$0xf]
      %v1910 = vsel %vm1872, %v1844, %v1909
      %1911 = vst [vmem:[%s1870 + $0x30] sm:$0xf] %v1910
      %v1912 = vld [vmem:[%s1870 + $0x34] sm:$0x1]
      %v1913 = vsel %vm1707, %v1845, %v1912
      %1914 = vst [vmem:[%s1870 + $0x34] sm:$0x1] %v1913
      %v1915 = vld [vmem:[%s1870 + $0x38] sm:$0xf]
      %v1916 = vsel %vm1872, %v1852, %v1915
      %1917 = vst [vmem:[%s1870 + $0x38] sm:$0xf] %v1916
      %v1918 = vld [vmem:[%s1870 + $0x3c] sm:$0x1]
      %v1919 = vsel %vm1707, %v1853, %v1918
      %1920 = vst [vmem:[%s1870 + $0x3c] sm:$0x1] %v1919
      %v1921 = vld [vmem:[#allocation2] sm:$0xf]
      %v1922 = vld [vmem:[#allocation2 + $0x8] sm:$0xf]
      %v1923 = vld [vmem:[#allocation2 + $0x10] sm:$0xf]
      %v1924 = vld [vmem:[#allocation2 + $0x18] sm:$0xf]
      %v1925 = vld [vmem:[#allocation2 + $0x20] sm:$0xf]
      %v1926 = vld [vmem:[#allocation2 + $0x28] sm:$0xf]
      %v1927 = vld [vmem:[#allocation2 + $0x30] sm:$0xf]
      %v1928 = vld [vmem:[#allocation2 + $0x38] sm:$0xf]
      %v1929 = vld [vmem:[#allocation2 + $0x4] sm:$0x1]
      %v1930 = vld [vmem:[#allocation2 + $0xc] sm:$0x1]
      %v1931 = vld [vmem:[#allocation2 + $0x14] sm:$0x1]
      %v1932 = vld [vmem:[#allocation2 + $0x1c] sm:$0x1]
      %v1933 = vld [vmem:[#allocation2 + $0x24] sm:$0x1]
      %v1934 = vld [vmem:[#allocation2 + $0x2c] sm:$0x1]
      %v1935 = vld [vmem:[#allocation2 + $0x34] sm:$0x1]
      %v1936 = vld [vmem:[#allocation2 + $0x3c] sm:$0x1]
      %v1938 = vshrl.u32 %v1921, 16
      %v1940 = vrot.slane %v1938, 4
      %v1941 = vshll.u32 %v1921, 16
      %v1943 = vrot.slane %v1941, 5
      %v1944 = vor.u32 %v1940, %v1943
      %v1945 = vrot.slane %v1944, 4
      %v1947 = vshll.u32 %v1929, 16
      %v1949 = vrot.slane %v1947, 5
      %v1950 = vsel %vm576, %v1945, %v1949
      %v1952 = vshrl.u32 %v1922, 16
      %v1954 = vrot.slane %v1952, 4
      %v1955 = vshll.u32 %v1922, 16
      %v1957 = vrot.slane %v1955, 5
      %v1958 = vor.u32 %v1954, %v1957
      %v1959 = vrot.slane %v1958, 4
      %v1961 = vshll.u32 %v1930, 16
      %v1963 = vrot.slane %v1961, 5
      %v1964 = vsel %vm576, %v1959, %v1963
      %v1966 = vshrl.u32 %v1923, 16
      %v1968 = vrot.slane %v1966, 4
      %v1969 = vshll.u32 %v1923, 16
      %v1971 = vrot.slane %v1969, 5
      %v1972 = vor.u32 %v1968, %v1971
      %v1973 = vrot.slane %v1972, 4
      %v1975 = vshll.u32 %v1931, 16
      %v1977 = vrot.slane %v1975, 5
      %v1978 = vsel %vm576, %v1973, %v1977
      %v1980 = vshrl.u32 %v1924, 16
      %v1982 = vrot.slane %v1980, 4
      %v1983 = vshll.u32 %v1924, 16
      %v1985 = vrot.slane %v1983, 5
      %v1986 = vor.u32 %v1982, %v1985
      %v1987 = vrot.slane %v1986, 4
      %v1989 = vshll.u32 %v1932, 16
      %v1991 = vrot.slane %v1989, 5
      %v1992 = vsel %vm576, %v1987, %v1991
      %v1994 = vshrl.u32 %v1925, 16
      %v1996 = vrot.slane %v1994, 4
      %v1997 = vshll.u32 %v1925, 16
      %v1999 = vrot.slane %v1997, 5
      %v2000 = vor.u32 %v1996, %v1999
      %v2001 = vrot.slane %v2000, 4
      %v2003 = vshll.u32 %v1933, 16
      %v2005 = vrot.slane %v2003, 5
      %v2006 = vsel %vm576, %v2001, %v2005
      %v2008 = vshrl.u32 %v1926, 16
      %v2010 = vrot.slane %v2008, 4
      %v2011 = vshll.u32 %v1926, 16
      %v2013 = vrot.slane %v2011, 5
      %v2014 = vor.u32 %v2010, %v2013
      %v2015 = vrot.slane %v2014, 4
      %v2017 = vshll.u32 %v1934, 16
      %v2019 = vrot.slane %v2017, 5
      %v2020 = vsel %vm576, %v2015, %v2019
      %v2022 = vshrl.u32 %v1927, 16
      %v2024 = vrot.slane %v2022, 4
      %v2025 = vshll.u32 %v1927, 16
      %v2027 = vrot.slane %v2025, 5
      %v2028 = vor.u32 %v2024, %v2027
      %v2029 = vrot.slane %v2028, 4
      %v2031 = vshll.u32 %v1935, 16
      %v2033 = vrot.slane %v2031, 5
      %v2034 = vsel %vm576, %v2029, %v2033
      %v2036 = vshrl.u32 %v1928, 16
      %v2038 = vrot.slane %v2036, 4
      %v2039 = vshll.u32 %v1928, 16
      %v2041 = vrot.slane %v2039, 5
      %v2042 = vor.u32 %v2038, %v2041
      %v2043 = vrot.slane %v2042, 4
      %v2045 = vshll.u32 %v1936, 16
      %v2047 = vrot.slane %v2045, 5
      %v2048 = vsel %vm576, %v2043, %v2047
      %v2049 = vld [vmem:[#allocation2] sm:$0xe]
      %v2050 = vld [vmem:[#allocation2 + $0x8] sm:$0xe]
      %v2051 = vld [vmem:[#allocation2 + $0x10] sm:$0xe]
      %v2052 = vld [vmem:[#allocation2 + $0x18] sm:$0xe]
      %v2053 = vld [vmem:[#allocation2 + $0x20] sm:$0xe]
      %v2054 = vld [vmem:[#allocation2 + $0x28] sm:$0xe]
      %v2055 = vld [vmem:[#allocation2 + $0x30] sm:$0xe]
      %v2056 = vld [vmem:[#allocation2 + $0x38] sm:$0xe]
      %vm2073 = vcmask 1042432
      %vm2074 = vcmask 1046532
      %vm2075 = vmor %vm2073, %vm2074
      %v2076 = vrot.slane %v2049, 5
      %v2077 = vrot.slane %v2076, 4
      %v2078 = vrot.slane %v1929, 5
      %v2079 = vsel %vm2075, %v2077, %v2078
      %v2080 = vrot.slane %v2050, 5
      %v2081 = vrot.slane %v2080, 4
      %v2082 = vrot.slane %v1930, 5
      %v2083 = vsel %vm2075, %v2081, %v2082
      %v2084 = vrot.slane %v2051, 5
      %v2085 = vrot.slane %v2084, 4
      %v2086 = vrot.slane %v1931, 5
      %v2087 = vsel %vm2075, %v2085, %v2086
      %v2088 = vrot.slane %v2052, 5
      %v2089 = vrot.slane %v2088, 4
      %v2090 = vrot.slane %v1932, 5
      %v2091 = vsel %vm2075, %v2089, %v2090
      %v2092 = vrot.slane %v2053, 5
      %v2093 = vrot.slane %v2092, 4
      %v2094 = vrot.slane %v1933, 5
      %v2095 = vsel %vm2075, %v2093, %v2094
      %v2096 = vrot.slane %v2054, 5
      %v2097 = vrot.slane %v2096, 4
      %v2098 = vrot.slane %v1934, 5
      %v2099 = vsel %vm2075, %v2097, %v2098
      %v2100 = vrot.slane %v2055, 5
      %v2101 = vrot.slane %v2100, 4
      %v2102 = vrot.slane %v1935, 5
      %v2103 = vsel %vm2075, %v2101, %v2102
      %v2104 = vrot.slane %v2056, 5
      %v2105 = vrot.slane %v2104, 4
      %v2106 = vrot.slane %v1936, 5
      %v2107 = vsel %vm2075, %v2105, %v2106
      %v2108 = vld [vmem:[%s1870] sm:$0xf]
      %v2109 = vld [vmem:[%s1870 + $0x8] sm:$0xf]
      %v2110 = vld [vmem:[%s1870 + $0x10] sm:$0xf]
      %v2111 = vld [vmem:[%s1870 + $0x18] sm:$0xf]
      %v2112 = vld [vmem:[%s1870 + $0x20] sm:$0xf]
      %v2113 = vld [vmem:[%s1870 + $0x28] sm:$0xf]
      %v2114 = vld [vmem:[%s1870 + $0x30] sm:$0xf]
      %v2115 = vld [vmem:[%s1870 + $0x38] sm:$0xf]
      %v2116 = vld [vmem:[%s1870 + $0x4] sm:$0x1]
      %v2117 = vld [vmem:[%s1870 + $0xc] sm:$0x1]
      %v2118 = vld [vmem:[%s1870 + $0x14] sm:$0x1]
      %v2119 = vld [vmem:[%s1870 + $0x1c] sm:$0x1]
      %v2120 = vld [vmem:[%s1870 + $0x24] sm:$0x1]
      %v2121 = vld [vmem:[%s1870 + $0x2c] sm:$0x1]
      %v2122 = vld [vmem:[%s1870 + $0x34] sm:$0x1]
      %v2123 = vld [vmem:[%s1870 + $0x3c] sm:$0x1]
      %v2125 = vshrl.u32 %v2108, 16
      %v2127 = vrot.slane %v2125, 4
      %v2128 = vshll.u32 %v2108, 16
      %v2130 = vrot.slane %v2128, 5
      %v2131 = vor.u32 %v2127, %v2130
      %v2132 = vrot.slane %v2131, 4
      %v2134 = vshll.u32 %v2116, 16
      %v2136 = vrot.slane %v2134, 5
      %v2137 = vsel %vm576, %v2132, %v2136
      %v2139 = vshrl.u32 %v2109, 16
      %v2141 = vrot.slane %v2139, 4
      %v2142 = vshll.u32 %v2109, 16
      %v2144 = vrot.slane %v2142, 5
      %v2145 = vor.u32 %v2141, %v2144
      %v2146 = vrot.slane %v2145, 4
      %v2148 = vshll.u32 %v2117, 16
      %v2150 = vrot.slane %v2148, 5
      %v2151 = vsel %vm576, %v2146, %v2150
      %v2153 = vshrl.u32 %v2110, 16
      %v2155 = vrot.slane %v2153, 4
      %v2156 = vshll.u32 %v2110, 16
      %v2158 = vrot.slane %v2156, 5
      %v2159 = vor.u32 %v2155, %v2158
      %v2160 = vrot.slane %v2159, 4
      %v2162 = vshll.u32 %v2118, 16
      %v2164 = vrot.slane %v2162, 5
      %v2165 = vsel %vm576, %v2160, %v2164
      %v2167 = vshrl.u32 %v2111, 16
      %v2169 = vrot.slane %v2167, 4
      %v2170 = vshll.u32 %v2111, 16
      %v2172 = vrot.slane %v2170, 5
      %v2173 = vor.u32 %v2169, %v2172
      %v2174 = vrot.slane %v2173, 4
      %v2176 = vshll.u32 %v2119, 16
      %v2178 = vrot.slane %v2176, 5
      %v2179 = vsel %vm576, %v2174, %v2178
      %v2181 = vshrl.u32 %v2112, 16
      %v2183 = vrot.slane %v2181, 4
      %v2184 = vshll.u32 %v2112, 16
      %v2186 = vrot.slane %v2184, 5
      %v2187 = vor.u32 %v2183, %v2186
      %v2188 = vrot.slane %v2187, 4
      %v2190 = vshll.u32 %v2120, 16
      %v2192 = vrot.slane %v2190, 5
      %v2193 = vsel %vm576, %v2188, %v2192
      %v2195 = vshrl.u32 %v2113, 16
      %v2197 = vrot.slane %v2195, 4
      %v2198 = vshll.u32 %v2113, 16
      %v2200 = vrot.slane %v2198, 5
      %v2201 = vor.u32 %v2197, %v2200
      %v2202 = vrot.slane %v2201, 4
      %v2204 = vshll.u32 %v2121, 16
      %v2206 = vrot.slane %v2204, 5
      %v2207 = vsel %vm576, %v2202, %v2206
      %v2209 = vshrl.u32 %v2114, 16
      %v2211 = vrot.slane %v2209, 4
      %v2212 = vshll.u32 %v2114, 16
      %v2214 = vrot.slane %v2212, 5
      %v2215 = vor.u32 %v2211, %v2214
      %v2216 = vrot.slane %v2215, 4
      %v2218 = vshll.u32 %v2122, 16
      %v2220 = vrot.slane %v2218, 5
      %v2221 = vsel %vm576, %v2216, %v2220
      %v2223 = vshrl.u32 %v2115, 16
      %v2225 = vrot.slane %v2223, 4
      %v2226 = vshll.u32 %v2115, 16
      %v2228 = vrot.slane %v2226, 5
      %v2229 = vor.u32 %v2225, %v2228
      %v2230 = vrot.slane %v2229, 4
      %v2232 = vshll.u32 %v2123, 16
      %v2234 = vrot.slane %v2232, 5
      %v2235 = vsel %vm576, %v2230, %v2234
      %v2236 = vld [vmem:[%s1870] sm:$0xe]
      %v2237 = vld [vmem:[%s1870 + $0x8] sm:$0xe]
      %v2238 = vld [vmem:[%s1870 + $0x10] sm:$0xe]
      %v2239 = vld [vmem:[%s1870 + $0x18] sm:$0xe]
      %v2240 = vld [vmem:[%s1870 + $0x20] sm:$0xe]
      %v2241 = vld [vmem:[%s1870 + $0x28] sm:$0xe]
      %v2242 = vld [vmem:[%s1870 + $0x30] sm:$0xe]
      %v2243 = vld [vmem:[%s1870 + $0x38] sm:$0xe]
      %v2260 = vrot.slane %v2236, 5
      %v2261 = vrot.slane %v2260, 4
      %v2262 = vrot.slane %v2116, 5
      %v2263 = vsel %vm2075, %v2261, %v2262
      %v2264 = vrot.slane %v2237, 5
      %v2265 = vrot.slane %v2264, 4
      %v2266 = vrot.slane %v2117, 5
      %v2267 = vsel %vm2075, %v2265, %v2266
      %v2268 = vrot.slane %v2238, 5
      %v2269 = vrot.slane %v2268, 4
      %v2270 = vrot.slane %v2118, 5
      %v2271 = vsel %vm2075, %v2269, %v2270
      %v2272 = vrot.slane %v2239, 5
      %v2273 = vrot.slane %v2272, 4
      %v2274 = vrot.slane %v2119, 5
      %v2275 = vsel %vm2075, %v2273, %v2274
      %v2276 = vrot.slane %v2240, 5
      %v2277 = vrot.slane %v2276, 4
      %v2278 = vrot.slane %v2120, 5
      %v2279 = vsel %vm2075, %v2277, %v2278
      %v2280 = vrot.slane %v2241, 5
      %v2281 = vrot.slane %v2280, 4
      %v2282 = vrot.slane %v2121, 5
      %v2283 = vsel %vm2075, %v2281, %v2282
      %v2284 = vrot.slane %v2242, 5
      %v2285 = vrot.slane %v2284, 4
      %v2286 = vrot.slane %v2122, 5
      %v2287 = vsel %vm2075, %v2285, %v2286
      %v2288 = vrot.slane %v2243, 5
      %v2289 = vrot.slane %v2288, 4
      %v2290 = vrot.slane %v2123, 5
      %v2291 = vsel %vm2075, %v2289, %v2290
      %s2292 = scalar_lea.vmem [#allocation2], 16
      %v2293 = vld [vmem:[%s2292] sm:$0xf]
      %v2294 = vld [vmem:[%s2292 + $0x8] sm:$0xf]
      %v2295 = vld [vmem:[%s2292 + $0x10] sm:$0xf]
      %v2296 = vld [vmem:[%s2292 + $0x18] sm:$0xf]
      %v2297 = vld [vmem:[%s2292 + $0x20] sm:$0xf]
      %v2298 = vld [vmem:[%s2292 + $0x28] sm:$0xf]
      %v2299 = vld [vmem:[%s2292 + $0x30] sm:$0xf]
      %v2300 = vld [vmem:[%s2292 + $0x38] sm:$0xf]
      %v2301 = vld [vmem:[%s2292 + $0x4] sm:$0x1]
      %v2302 = vld [vmem:[%s2292 + $0xc] sm:$0x1]
      %v2303 = vld [vmem:[%s2292 + $0x14] sm:$0x1]
      %v2304 = vld [vmem:[%s2292 + $0x1c] sm:$0x1]
      %v2305 = vld [vmem:[%s2292 + $0x24] sm:$0x1]
      %v2306 = vld [vmem:[%s2292 + $0x2c] sm:$0x1]
      %v2307 = vld [vmem:[%s2292 + $0x34] sm:$0x1]
      %v2308 = vld [vmem:[%s2292 + $0x3c] sm:$0x1]
      %v2310 = vshrl.u32 %v2293, 16
      %v2312 = vrot.slane %v2310, 4
      %v2313 = vshll.u32 %v2293, 16
      %v2315 = vrot.slane %v2313, 5
      %v2316 = vor.u32 %v2312, %v2315
      %v2317 = vrot.slane %v2316, 4
      %v2319 = vshll.u32 %v2301, 16
      %v2321 = vrot.slane %v2319, 5
      %v2322 = vsel %vm576, %v2317, %v2321
      %v2324 = vshrl.u32 %v2294, 16
      %v2326 = vrot.slane %v2324, 4
      %v2327 = vshll.u32 %v2294, 16
      %v2329 = vrot.slane %v2327, 5
      %v2330 = vor.u32 %v2326, %v2329
      %v2331 = vrot.slane %v2330, 4
      %v2333 = vshll.u32 %v2302, 16
      %v2335 = vrot.slane %v2333, 5
      %v2336 = vsel %vm576, %v2331, %v2335
      %v2338 = vshrl.u32 %v2295, 16
      %v2340 = vrot.slane %v2338, 4
      %v2341 = vshll.u32 %v2295, 16
      %v2343 = vrot.slane %v2341, 5
      %v2344 = vor.u32 %v2340, %v2343
      %v2345 = vrot.slane %v2344, 4
      %v2347 = vshll.u32 %v2303, 16
      %v2349 = vrot.slane %v2347, 5
      %v2350 = vsel %vm576, %v2345, %v2349
      %v2352 = vshrl.u32 %v2296, 16
      %v2354 = vrot.slane %v2352, 4
      %v2355 = vshll.u32 %v2296, 16
      %v2357 = vrot.slane %v2355, 5
      %v2358 = vor.u32 %v2354, %v2357
      %v2359 = vrot.slane %v2358, 4
      %v2361 = vshll.u32 %v2304, 16
      %v2363 = vrot.slane %v2361, 5
      %v2364 = vsel %vm576, %v2359, %v2363
      %v2366 = vshrl.u32 %v2297, 16
      %v2368 = vrot.slane %v2366, 4
      %v2369 = vshll.u32 %v2297, 16
      %v2371 = vrot.slane %v2369, 5
      %v2372 = vor.u32 %v2368, %v2371
      %v2373 = vrot.slane %v2372, 4
      %v2375 = vshll.u32 %v2305, 16
      %v2377 = vrot.slane %v2375, 5
      %v2378 = vsel %vm576, %v2373, %v2377
      %v2380 = vshrl.u32 %v2298, 16
      %v2382 = vrot.slane %v2380, 4
      %v2383 = vshll.u32 %v2298, 16
      %v2385 = vrot.slane %v2383, 5
      %v2386 = vor.u32 %v2382, %v2385
      %v2387 = vrot.slane %v2386, 4
      %v2389 = vshll.u32 %v2306, 16
      %v2391 = vrot.slane %v2389, 5
      %v2392 = vsel %vm576, %v2387, %v2391
      %v2394 = vshrl.u32 %v2299, 16
      %v2396 = vrot.slane %v2394, 4
      %v2397 = vshll.u32 %v2299, 16
      %v2399 = vrot.slane %v2397, 5
      %v2400 = vor.u32 %v2396, %v2399
      %v2401 = vrot.slane %v2400, 4
      %v2403 = vshll.u32 %v2307, 16
      %v2405 = vrot.slane %v2403, 5
      %v2406 = vsel %vm576, %v2401, %v2405
      %v2408 = vshrl.u32 %v2300, 16
      %v2410 = vrot.slane %v2408, 4
      %v2411 = vshll.u32 %v2300, 16
      %v2413 = vrot.slane %v2411, 5
      %v2414 = vor.u32 %v2410, %v2413
      %v2415 = vrot.slane %v2414, 4
      %v2417 = vshll.u32 %v2308, 16
      %v2419 = vrot.slane %v2417, 5
      %v2420 = vsel %vm576, %v2415, %v2419
      %v2421 = vld [vmem:[%s2292] sm:$0xe]
      %v2422 = vld [vmem:[%s2292 + $0x8] sm:$0xe]
      %v2423 = vld [vmem:[%s2292 + $0x10] sm:$0xe]
      %v2424 = vld [vmem:[%s2292 + $0x18] sm:$0xe]
      %v2425 = vld [vmem:[%s2292 + $0x20] sm:$0xe]
      %v2426 = vld [vmem:[%s2292 + $0x28] sm:$0xe]
      %v2427 = vld [vmem:[%s2292 + $0x30] sm:$0xe]
      %v2428 = vld [vmem:[%s2292 + $0x38] sm:$0xe]
      %v2445 = vrot.slane %v2421, 5
      %v2446 = vrot.slane %v2445, 4
      %v2447 = vrot.slane %v2301, 5
      %v2448 = vsel %vm2075, %v2446, %v2447
      %v2449 = vrot.slane %v2422, 5
      %v2450 = vrot.slane %v2449, 4
      %v2451 = vrot.slane %v2302, 5
      %v2452 = vsel %vm2075, %v2450, %v2451
      %v2453 = vrot.slane %v2423, 5
      %v2454 = vrot.slane %v2453, 4
      %v2455 = vrot.slane %v2303, 5
      %v2456 = vsel %vm2075, %v2454, %v2455
      %v2457 = vrot.slane %v2424, 5
      %v2458 = vrot.slane %v2457, 4
      %v2459 = vrot.slane %v2304, 5
      %v2460 = vsel %vm2075, %v2458, %v2459
      %v2461 = vrot.slane %v2425, 5
      %v2462 = vrot.slane %v2461, 4
      %v2463 = vrot.slane %v2305, 5
      %v2464 = vsel %vm2075, %v2462, %v2463
      %v2465 = vrot.slane %v2426, 5
      %v2466 = vrot.slane %v2465, 4
      %v2467 = vrot.slane %v2306, 5
      %v2468 = vsel %vm2075, %v2466, %v2467
      %v2469 = vrot.slane %v2427, 5
      %v2470 = vrot.slane %v2469, 4
      %v2471 = vrot.slane %v2307, 5
      %v2472 = vsel %vm2075, %v2470, %v2471
      %v2473 = vrot.slane %v2428, 5
      %v2474 = vrot.slane %v2473, 4
      %v2475 = vrot.slane %v2308, 5
      %v2476 = vsel %vm2075, %v2474, %v2475
      %v2477 = vunpack.c.l.b16 %v2137
      %v2478 = vunpack.c.l.b16 %v2151
      %v2479 = vunpack.c.l.b16 %v2165
      %v2480 = vunpack.c.l.b16 %v2179
      %v2481 = vunpack.c.l.b16 %v2193
      %v2482 = vunpack.c.l.b16 %v2207
      %v2483 = vunpack.c.l.b16 %v2221
      %v2484 = vunpack.c.l.b16 %v2235
      %v2485 = vpack.c.b16 %v2478, %v2477
      %v2486 = vpack.c.b16 %v2480, %v2479
      %v2487 = vpack.c.b16 %v2482, %v2481
      %v2488 = vpack.c.b16 %v2484, %v2483
      %v2497 = vunpack.c.l.b16 %v2108
      %v2498 = vunpack.c.l.b16 %v2109
      %v2499 = vunpack.c.l.b16 %v2110
      %v2500 = vunpack.c.l.b16 %v2111
      %v2501 = vunpack.c.l.b16 %v2112
      %v2502 = vunpack.c.l.b16 %v2113
      %v2503 = vunpack.c.l.b16 %v2114
      %v2504 = vunpack.c.l.b16 %v2115
      %v2505 = vpack.c.b16 %v2498, %v2497
      %v2506 = vpack.c.b16 %v2500, %v2499
      %v2507 = vpack.c.b16 %v2502, %v2501
      %v2508 = vpack.c.b16 %v2504, %v2503
      %2509 = vrot.lane.b32.xlu0 %v2505, 8
      %v2510 = vpop.permute.xlu0 %2509
      %2511 = vrot.lane.b32.xlu0 %v2506, 8
      %v2512 = vpop.permute.xlu0 %2511
      %2513 = vrot.lane.b32.xlu0 %v2507, 8
      %v2514 = vpop.permute.xlu0 %2513
      %2515 = vrot.lane.b32.xlu0 %v2508, 8
      %v2516 = vpop.permute.xlu0 %2515
      %v2517 = vunpack.c.l.b16 %v1950
      %v2518 = vunpack.c.l.b16 %v1964
      %v2519 = vunpack.c.l.b16 %v1978
      %v2520 = vunpack.c.l.b16 %v1992
      %v2521 = vunpack.c.l.b16 %v2006
      %v2522 = vunpack.c.l.b16 %v2020
      %v2523 = vunpack.c.l.b16 %v2034
      %v2524 = vunpack.c.l.b16 %v2048
      %v2525 = vpack.c.b16 %v2518, %v2517
      %v2526 = vpack.c.b16 %v2520, %v2519
      %v2527 = vpack.c.b16 %v2522, %v2521
      %v2528 = vpack.c.b16 %v2524, %v2523
      %2529 = vrot.lane.b32.xlu0 %v2525, 16
      %v2530 = vpop.permute.xlu0 %2529
      %2531 = vrot.lane.b32.xlu0 %v2526, 16
      %v2532 = vpop.permute.xlu0 %2531
      %2533 = vrot.lane.b32.xlu0 %v2527, 16
      %v2534 = vpop.permute.xlu0 %2533
      %2535 = vrot.lane.b32.xlu0 %v2528, 16
      %v2536 = vpop.permute.xlu0 %2535
      %v2545 = vunpack.c.l.b16 %v1921
      %v2546 = vunpack.c.l.b16 %v1922
      %v2547 = vunpack.c.l.b16 %v1923
      %v2548 = vunpack.c.l.b16 %v1924
      %v2549 = vunpack.c.l.b16 %v1925
      %v2550 = vunpack.c.l.b16 %v1926
      %v2551 = vunpack.c.l.b16 %v1927
      %v2552 = vunpack.c.l.b16 %v1928
      %v2553 = vpack.c.b16 %v2546, %v2545
      %v2554 = vpack.c.b16 %v2548, %v2547
      %v2555 = vpack.c.b16 %v2550, %v2549
      %v2556 = vpack.c.b16 %v2552, %v2551
      %2557 = vrot.lane.b32.xlu0 %v2553, 24
      %v2558 = vpop.permute.xlu0 %2557
      %2559 = vrot.lane.b32.xlu0 %v2554, 24
      %v2560 = vpop.permute.xlu0 %2559
      %2561 = vrot.lane.b32.xlu0 %v2555, 24
      %v2562 = vpop.permute.xlu0 %2561
      %2563 = vrot.lane.b32.xlu0 %v2556, 24
      %v2564 = vpop.permute.xlu0 %2563
      %v2567 = vsel %vm1454, %v2485, %v2510
      %v2570 = vsel %vm1454, %v2486, %v2512
      %v2573 = vsel %vm1454, %v2487, %v2514
      %v2576 = vsel %vm1454, %v2488, %v2516
      %v2578 = vsel %vm1472, %v2567, %v2530
      %v2580 = vsel %vm1472, %v2570, %v2532
      %v2582 = vsel %vm1472, %v2573, %v2534
      %v2584 = vsel %vm1472, %v2576, %v2536
      %v2586 = vsel %vm1490, %v2578, %v2558
      %v2588 = vsel %vm1490, %v2580, %v2560
      %v2590 = vsel %vm1490, %v2582, %v2562
      %v2592 = vsel %vm1490, %v2584, %v2564
      %v2593 = vld [vmem:[%s2] sm:$0xf]
      %v2594 = vld [vmem:[%s2 + $0x4] sm:$0xf]
      %v2595 = vld [vmem:[%s2 + $0x8] sm:$0xf]
      %v2596 = vld [vmem:[%s2 + $0xc] sm:$0xf]
      %v2601 = vunpack.c.l.b16 %v2593
      %v2602 = vunpack.c.l.b16 %v2594
      %v2603 = vunpack.c.l.b16 %v2595
      %v2604 = vunpack.c.l.b16 %v2596
      %v2605 = vpack.c.b16 %v2602, %v2601
      %v2606 = vpack.c.b16 %v2604, %v2603
      %v2609 = vsel %vm1508, %v2586, 0
      %v2611 = vsel %vm1508, %v2588, 0
      %v2613 = vsel %vm1508, %v2590, 0
      %v2615 = vsel %vm1508, %v2592, 0
      %2617 = vmatprep.subr.bf16.mxu0 0
      %2618 = vmatpush1.bf16.msra.mxu0 %v2605
      %2619 = vmatprep.subr.bf16.mxu0 0
      %2620 = vmatpush1.bf16.msra.mxu0 %v2606
      %2621 = vmatprep.subr.bf16.mxu0 0
      %2622 = vmatpush1.bf16.msra.mxu0 0
      %2623 = vmatprep.subr.bf16.mxu0 0
      %2624 = vmatpush1.bf16.msra.mxu0 0
      %2625 = vmatprep.subr.bf16.mxu0 0
      %2626 = vmatpush1.bf16.msra.mxu0 0
      %2627 = vmatprep.subr.bf16.mxu0 0
      %2628 = vmatpush1.bf16.msra.mxu0 0
      %2629 = vmatprep.subr.bf16.mxu0 0
      %2630 = vmatpush1.bf16.msra.mxu0 0
      %2631 = vmatprep.subr.bf16.mxu0 0
      %2632 = vmatpush1.bf16.msra.mxu0 0
      %2633 = vmatprep.subr.bf16.mxu0 0
      %2634 = vmatpush1.bf16.msra.mxu0 0
      %2635 = vmatprep.subr.bf16.mxu0 0
      %2636 = vmatpush1.bf16.msra.mxu0 0
      %2637 = vmatprep.subr.bf16.mxu0 0
      %2638 = vmatpush1.bf16.msra.mxu0 0
      %2639 = vmatprep.subr.bf16.mxu0 0
      %2640 = vmatpush1.bf16.msra.mxu0 0
      %2641 = vmatprep.subr.bf16.mxu0 0
      %2642 = vmatpush1.bf16.msra.mxu0 0
      %2643 = vmatprep.subr.bf16.mxu0 0
      %2644 = vmatpush1.bf16.msra.mxu0 0
      %2645 = vmatprep.subr.bf16.mxu0 0
      %2646 = vmatpush1.bf16.msra.mxu0 0
      %2647 = vmatprep.subr.bf16.mxu0 0
      %2648 = vmatpush1.bf16.msra.mxu0 0
      %2649 = vmatprep.mubr.bf16.mxu0 0
      %2650 = vmatmul.mubr.bf16.gmra.mrb[0].mxu0 %v2609
      %v2651 = vpop.f32.mrb[0].mxu0
      %v2652 = vadd.f32 0.0, %v2651
      %v2653 = vpop.f32.mrb[0].mxu0
      %v2654 = vpop.f32.mrb[0].mxu0
      %v2655 = vadd.f32 0.0, %v2654
      %v2656 = vpop.f32.mrb[0].mxu0
      %2657 = vmatprep.mubr.bf16.mxu0 0
      %2658 = vmatmul.mubr.bf16.gmra.mrb[0].mxu0 %v2611
      %v2659 = vpop.f32.mrb[0].mxu0
      %v2660 = vadd.f32 0.0, %v2659
      %v2661 = vpop.f32.mrb[0].mxu0
      %v2662 = vpop.f32.mrb[0].mxu0
      %v2663 = vadd.f32 0.0, %v2662
      %v2664 = vpop.f32.mrb[0].mxu0
      %2665 = vmatprep.mubr.bf16.mxu0 0
      %2666 = vmatmul.mubr.bf16.gmra.mrb[0].mxu0 %v2613
      %v2667 = vpop.f32.mrb[0].mxu0
      %v2668 = vadd.f32 0.0, %v2667
      %v2669 = vpop.f32.mrb[0].mxu0
      %v2670 = vpop.f32.mrb[0].mxu0
      %v2671 = vadd.f32 0.0, %v2670
      %v2672 = vpop.f32.mrb[0].mxu0
      %2673 = vmatprep.mubr.bf16.mxu0 0
      %2674 = vmatmul.mubr.bf16.gmra.mrb[0].mxu0 %v2615
      %v2675 = vpop.f32.mrb[0].mxu0
      %v2676 = vadd.f32 0.0, %v2675
      %v2677 = vpop.f32.mrb[0].mxu0
      %v2678 = vpop.f32.mrb[0].mxu0
      %v2679 = vadd.f32 0.0, %v2678
      %v2680 = vpop.f32.mrb[0].mxu0
      %2681 = vdwg.mxu0
      %v2682 = vpack.c.bf16 %v2652, %v2652
      %v2683 = vpack.c.bf16 %v2655, %v2655
      %v2684 = vpack.c.bf16 %v2660, %v2660
      %v2685 = vpack.c.bf16 %v2663, %v2663
      %v2686 = vpack.c.bf16 %v2668, %v2668
      %v2687 = vpack.c.bf16 %v2671, %v2671
      %v2688 = vpack.c.bf16 %v2676, %v2676
      %v2689 = vpack.c.bf16 %v2679, %v2679
      %vm2690 = vcmask 27648
      %2691 = vst.msk [vmem:[%s204] sm:$0xf] %vm2690, %v2682
      %2692 = vst.msk [vmem:[%s204 + $0x4] sm:$0xf] %vm2690, %v2683
      %2693 = vst.msk [vmem:[%s204 + $0x8] sm:$0xf] %vm2690, %v2684
      %2694 = vst.msk [vmem:[%s204 + $0xc] sm:$0xf] %vm2690, %v2685
      %2695 = vst.msk [vmem:[%s204 + $0x10] sm:$0xf] %vm2690, %v2686
      %2696 = vst.msk [vmem:[%s204 + $0x14] sm:$0xf] %vm2690, %v2687
      %2697 = vst.msk [vmem:[%s204 + $0x18] sm:$0xf] %vm2690, %v2688
      %2698 = vst.msk [vmem:[%s204 + $0x1c] sm:$0xf] %vm2690, %v2689
      %v2699 = vsel %vm1441, %v2652, 0.0
      %v2700 = vsel %vm1441, %v2655, 0.0
      %v2701 = vadd.f32 %v2699, %v2700
      %v2702 = vsel %vm1441, %v2660, 0.0
      %v2703 = vadd.f32 %v2701, %v2702
      %v2704 = vsel %vm1441, %v2663, 0.0
      %v2705 = vadd.f32 %v2703, %v2704
      %v2706 = vsel %vm1441, %v2668, 0.0
      %v2707 = vadd.f32 %v2705, %v2706
      %v2708 = vsel %vm1441, %v2671, 0.0
      %v2709 = vadd.f32 %v2707, %v2708
      %v2710 = vsel %vm1441, %v2676, 0.0
      %v2711 = vadd.f32 %v2709, %v2710
      %v2712 = vsel %vm1441, %v2679, 0.0
      %v2713 = vadd.f32 %v2711, %v2712
      %v2714 = vrot.slane %v2713, 4
      %v2715 = vadd.f32 %v2713, %v2714
      %v2716 = vrot.slane %v2715, 2
      %v2717 = vadd.f32 %v2715, %v2716
      %v2718 = vrot.slane %v2717, 1
      %v2719 = vadd.f32 %v2717, %v2718
      %v2720 = vadd.f32 %v2719, 0.0
      %v2721 = vmul.f32 %v2652, %v2652
      %v2722 = vmul.f32 %v2655, %v2655
      %v2723 = vmul.f32 %v2660, %v2660
      %v2724 = vmul.f32 %v2663, %v2663
      %v2725 = vmul.f32 %v2668, %v2668
      %v2726 = vmul.f32 %v2671, %v2671
      %v2727 = vmul.f32 %v2676, %v2676
      %v2728 = vmul.f32 %v2679, %v2679
      %v2729 = vsel %vm1441, %v2721, 0.0
      %v2730 = vsel %vm1441, %v2722, 0.0
      %v2731 = vadd.f32 %v2729, %v2730
      %v2732 = vsel %vm1441, %v2723, 0.0
      %v2733 = vadd.f32 %v2731, %v2732
      %v2734 = vsel %vm1441, %v2724, 0.0
      %v2735 = vadd.f32 %v2733, %v2734
      %v2736 = vsel %vm1441, %v2725, 0.0
      %v2737 = vadd.f32 %v2735, %v2736
      %v2738 = vsel %vm1441, %v2726, 0.0
      %v2739 = vadd.f32 %v2737, %v2738
      %v2740 = vsel %vm1441, %v2727, 0.0
      %v2741 = vadd.f32 %v2739, %v2740
      %v2742 = vsel %vm1441, %v2728, 0.0
      %v2743 = vadd.f32 %v2741, %v2742
      %v2744 = vrot.slane %v2743, 4
      %v2745 = vadd.f32 %v2743, %v2744
      %v2746 = vrot.slane %v2745, 2
      %v2747 = vadd.f32 %v2745, %v2746
      %v2748 = vrot.slane %v2747, 1
      %v2749 = vadd.f32 %v2747, %v2748
      %v2750 = vadd.f32 %v2749, 0.0
      %v2751 = vunpack.c.l.b16 %v2263
      %v2752 = vunpack.c.l.b16 %v2267
      %v2753 = vunpack.c.l.b16 %v2271
      %v2754 = vunpack.c.l.b16 %v2275
      %v2755 = vunpack.c.l.b16 %v2279
      %v2756 = vunpack.c.l.b16 %v2283
      %v2757 = vunpack.c.l.b16 %v2287
      %v2758 = vunpack.c.l.b16 %v2291
      %v2759 = vpack.c.b16 %v2752, %v2751
      %v2760 = vpack.c.b16 %v2754, %v2753
      %v2761 = vpack.c.b16 %v2756, %v2755
      %v2762 = vpack.c.b16 %v2758, %v2757
      %2763 = vrot.lane.b32.xlu0 %v2485, 8
      %v2764 = vpop.permute.xlu0 %2763
      %2765 = vrot.lane.b32.xlu0 %v2486, 8
      %v2766 = vpop.permute.xlu0 %2765
      %2767 = vrot.lane.b32.xlu0 %v2487, 8
      %v2768 = vpop.permute.xlu0 %2767
      %2769 = vrot.lane.b32.xlu0 %v2488, 8
      %v2770 = vpop.permute.xlu0 %2769
      %v2771 = vunpack.c.l.b16 %v2079
      %v2772 = vunpack.c.l.b16 %v2083
      %v2773 = vunpack.c.l.b16 %v2087
      %v2774 = vunpack.c.l.b16 %v2091
      %v2775 = vunpack.c.l.b16 %v2095
      %v2776 = vunpack.c.l.b16 %v2099
      %v2777 = vunpack.c.l.b16 %v2103
      %v2778 = vunpack.c.l.b16 %v2107
      %v2779 = vpack.c.b16 %v2772, %v2771
      %v2780 = vpack.c.b16 %v2774, %v2773
      %v2781 = vpack.c.b16 %v2776, %v2775
      %v2782 = vpack.c.b16 %v2778, %v2777
      %2783 = vrot.lane.b32.xlu0 %v2779, 16
      %v2784 = vpop.permute.xlu0 %2783
      %2785 = vrot.lane.b32.xlu0 %v2780, 16
      %v2786 = vpop.permute.xlu0 %2785
      %2787 = vrot.lane.b32.xlu0 %v2781, 16
      %v2788 = vpop.permute.xlu0 %2787
      %2789 = vrot.lane.b32.xlu0 %v2782, 16
      %v2790 = vpop.permute.xlu0 %2789
      %2791 = vrot.lane.b32.xlu0 %v2525, 24
      %v2792 = vpop.permute.xlu0 %2791
      %2793 = vrot.lane.b32.xlu0 %v2526, 24
      %v2794 = vpop.permute.xlu0 %2793
      %2795 = vrot.lane.b32.xlu0 %v2527, 24
      %v2796 = vpop.permute.xlu0 %2795
      %2797 = vrot.lane.b32.xlu0 %v2528, 24
      %v2798 = vpop.permute.xlu0 %2797
      %v2801 = vsel %vm1454, %v2759, %v2764
      %v2804 = vsel %vm1454, %v2760, %v2766
      %v2807 = vsel %vm1454, %v2761, %v2768
      %v2810 = vsel %vm1454, %v2762, %v2770
      %v2812 = vsel %vm1472, %v2801, %v2784
      %v2814 = vsel %vm1472, %v2804, %v2786
      %v2816 = vsel %vm1472, %v2807, %v2788
      %v2818 = vsel %vm1472, %v2810, %v2790
      %v2820 = vsel %vm1490, %v2812, %v2792
      %v2822 = vsel %vm1490, %v2814, %v2794
      %v2824 = vsel %vm1490, %v2816, %v2796
      %v2826 = vsel %vm1490, %v2818, %v2798
      %s2827 = scalar_lea.vmem %s2, 16
      %v2828 = vld [vmem:[%s2827] sm:$0xf]
      %v2829 = vld [vmem:[%s2827 + $0x4] sm:$0xf]
      %v2830 = vld [vmem:[%s2827 + $0x8] sm:$0xf]
      %v2831 = vld [vmem:[%s2827 + $0xc] sm:$0xf]
      %v2836 = vunpack.c.l.b16 %v2828
      %v2837 = vunpack.c.l.b16 %v2829
      %v2838 = vunpack.c.l.b16 %v2830
      %v2839 = vunpack.c.l.b16 %v2831
      %v2840 = vpack.c.b16 %v2837, %v2836
      %v2841 = vpack.c.b16 %v2839, %v2838
      %v2844 = vsel %vm1508, %v2820, 0
      %v2846 = vsel %vm1508, %v2822, 0
      %v2848 = vsel %vm1508, %v2824, 0
      %v2850 = vsel %vm1508, %v2826, 0
      %2852 = vmatprep.subr.bf16.mxu0 0
      %2853 = vmatpush1.bf16.msra.mxu0 %v2840
      %2854 = vmatprep.subr.bf16.mxu0 0
      %2855 = vmatpush1.bf16.msra.mxu0 %v2841
      %2856 = vmatprep.subr.bf16.mxu0 0
      %2857 = vmatpush1.bf16.msra.mxu0 0
      %2858 = vmatprep.subr.bf16.mxu0 0
      %2859 = vmatpush1.bf16.msra.mxu0 0
      %2860 = vmatprep.subr.bf16.mxu0 0
      %2861 = vmatpush1.bf16.msra.mxu0 0
      %2862 = vmatprep.subr.bf16.mxu0 0
      %2863 = vmatpush1.bf16.msra.mxu0 0
      %2864 = vmatprep.subr.bf16.mxu0 0
      %2865 = vmatpush1.bf16.msra.mxu0 0
      %2866 = vmatprep.subr.bf16.mxu0 0
      %2867 = vmatpush1.bf16.msra.mxu0 0
      %2868 = vmatprep.subr.bf16.mxu0 0
      %2869 = vmatpush1.bf16.msra.mxu0 0
      %2870 = vmatprep.subr.bf16.mxu0 0
      %2871 = vmatpush1.bf16.msra.mxu0 0
      %2872 = vmatprep.subr.bf16.mxu0 0
      %2873 = vmatpush1.bf16.msra.mxu0 0
      %2874 = vmatprep.subr.bf16.mxu0 0
      %2875 = vmatpush1.bf16.msra.mxu0 0
      %2876 = vmatprep.subr.bf16.mxu0 0
      %2877 = vmatpush1.bf16.msra.mxu0 0
      %2878 = vmatprep.subr.bf16.mxu0 0
      %2879 = vmatpush1.bf16.msra.mxu0 0
      %2880 = vmatprep.subr.bf16.mxu0 0
      %2881 = vmatpush1.bf16.msra.mxu0 0
      %2882 = vmatprep.subr.bf16.mxu0 0
      %2883 = vmatpush1.bf16.msra.mxu0 0
      %2884 = vmatprep.mubr.bf16.mxu0 0
      %2885 = vmatmul.mubr.bf16.gmra.mrb[0].mxu0 %v2844
      %v2886 = vpop.f32.mrb[0].mxu0
      %v2887 = vadd.f32 0.0, %v2886
      %v2888 = vpop.f32.mrb[0].mxu0
      %v2889 = vpop.f32.mrb[0].mxu0
      %v2890 = vadd.f32 0.0, %v2889
      %v2891 = vpop.f32.mrb[0].mxu0
      %2892 = vmatprep.mubr.bf16.mxu0 0
      %2893 = vmatmul.mubr.bf16.gmra.mrb[0].mxu0 %v2846
      %v2894 = vpop.f32.mrb[0].mxu0
      %v2895 = vadd.f32 0.0, %v2894
      %v2896 = vpop.f32.mrb[0].mxu0
      %v2897 = vpop.f32.mrb[0].mxu0
      %v2898 = vadd.f32 0.0, %v2897
      %v2899 = vpop.f32.mrb[0].mxu0
      %2900 = vmatprep.mubr.bf16.mxu0 0
      %2901 = vmatmul.mubr.bf16.gmra.mrb[0].mxu0 %v2848
      %v2902 = vpop.f32.mrb[0].mxu0
      %v2903 = vadd.f32 0.0, %v2902
      %v2904 = vpop.f32.mrb[0].mxu0
      %v2905 = vpop.f32.mrb[0].mxu0
      %v2906 = vadd.f32 0.0, %v2905
      %v2907 = vpop.f32.mrb[0].mxu0
      %2908 = vmatprep.mubr.bf16.mxu0 0
      %2909 = vmatmul.mubr.bf16.gmra.mrb[0].mxu0 %v2850
      %v2910 = vpop.f32.mrb[0].mxu0
      %v2911 = vadd.f32 0.0, %v2910
      %v2912 = vpop.f32.mrb[0].mxu0
      %v2913 = vpop.f32.mrb[0].mxu0
      %v2914 = vadd.f32 0.0, %v2913
      %v2915 = vpop.f32.mrb[0].mxu0
      %2916 = vdwg.mxu0
      %v2917 = vpack.c.bf16 %v2887, %v2887
      %v2918 = vpack.c.bf16 %v2890, %v2890
      %v2919 = vpack.c.bf16 %v2895, %v2895
      %v2920 = vpack.c.bf16 %v2898, %v2898
      %v2921 = vpack.c.bf16 %v2903, %v2903
      %v2922 = vpack.c.bf16 %v2906, %v2906
      %v2923 = vpack.c.bf16 %v2911, %v2911
      %v2924 = vpack.c.bf16 %v2914, %v2914
      %s2925 = scalar_lea.vmem %s204, 32
      %2926 = vst.msk [vmem:[%s2925] sm:$0xf] %vm2690, %v2917
      %2927 = vst.msk [vmem:[%s2925 + $0x4] sm:$0xf] %vm2690, %v2918
      %2928 = vst.msk [vmem:[%s2925 + $0x8] sm:$0xf] %vm2690, %v2919
      %2929 = vst.msk [vmem:[%s2925 + $0xc] sm:$0xf] %vm2690, %v2920
      %2930 = vst.msk [vmem:[%s2925 + $0x10] sm:$0xf] %vm2690, %v2921
      %2931 = vst.msk [vmem:[%s2925 + $0x14] sm:$0xf] %vm2690, %v2922
      %2932 = vst.msk [vmem:[%s2925 + $0x18] sm:$0xf] %vm2690, %v2923
      %2933 = vst.msk [vmem:[%s2925 + $0x1c] sm:$0xf] %vm2690, %v2924
      %v2934 = vsel %vm1441, %v2887, 0.0
      %v2935 = vsel %vm1441, %v2890, 0.0
      %v2936 = vadd.f32 %v2934, %v2935
      %v2937 = vsel %vm1441, %v2895, 0.0
      %v2938 = vadd.f32 %v2936, %v2937
      %v2939 = vsel %vm1441, %v2898, 0.0
      %v2940 = vadd.f32 %v2938, %v2939
      %v2941 = vsel %vm1441, %v2903, 0.0
      %v2942 = vadd.f32 %v2940, %v2941
      %v2943 = vsel %vm1441, %v2906, 0.0
      %v2944 = vadd.f32 %v2942, %v2943
      %v2945 = vsel %vm1441, %v2911, 0.0
      %v2946 = vadd.f32 %v2944, %v2945
      %v2947 = vsel %vm1441, %v2914, 0.0
      %v2948 = vadd.f32 %v2946, %v2947
      %v2949 = vrot.slane %v2948, 4
      %v2950 = vadd.f32 %v2948, %v2949
      %v2951 = vrot.slane %v2950, 2
      %v2952 = vadd.f32 %v2950, %v2951
      %v2953 = vrot.slane %v2952, 1
      %v2954 = vadd.f32 %v2952, %v2953
      %v2955 = vadd.f32 %v2720, %v2954
      %v2956 = vmul.f32 %v2887, %v2887
      %v2957 = vmul.f32 %v2890, %v2890
      %v2958 = vmul.f32 %v2895, %v2895
      %v2959 = vmul.f32 %v2898, %v2898
      %v2960 = vmul.f32 %v2903, %v2903
      %v2961 = vmul.f32 %v2906, %v2906
      %v2962 = vmul.f32 %v2911, %v2911
      %v2963 = vmul.f32 %v2914, %v2914
      %v2964 = vsel %vm1441, %v2956, 0.0
      %v2965 = vsel %vm1441, %v2957, 0.0
      %v2966 = vadd.f32 %v2964, %v2965
      %v2967 = vsel %vm1441, %v2958, 0.0
      %v2968 = vadd.f32 %v2966, %v2967
      %v2969 = vsel %vm1441, %v2959, 0.0
      %v2970 = vadd.f32 %v2968, %v2969
      %v2971 = vsel %vm1441, %v2960, 0.0
      %v2972 = vadd.f32 %v2970, %v2971
      %v2973 = vsel %vm1441, %v2961, 0.0
      %v2974 = vadd.f32 %v2972, %v2973
      %v2975 = vsel %vm1441, %v2962, 0.0
      %v2976 = vadd.f32 %v2974, %v2975
      %v2977 = vsel %vm1441, %v2963, 0.0
      %v2978 = vadd.f32 %v2976, %v2977
      %v2979 = vrot.slane %v2978, 4
      %v2980 = vadd.f32 %v2978, %v2979
      %v2981 = vrot.slane %v2980, 2
      %v2982 = vadd.f32 %v2980, %v2981
      %v2983 = vrot.slane %v2982, 1
      %v2984 = vadd.f32 %v2982, %v2983
      %v2985 = vadd.f32 %v2750, %v2984
      %v2986 = vunpack.c.l.b16 %v2322
      %v2987 = vunpack.c.l.b16 %v2336
      %v2988 = vunpack.c.l.b16 %v2350
      %v2989 = vunpack.c.l.b16 %v2364
      %v2990 = vunpack.c.l.b16 %v2378
      %v2991 = vunpack.c.l.b16 %v2392
      %v2992 = vunpack.c.l.b16 %v2406
      %v2993 = vunpack.c.l.b16 %v2420
      %v2994 = vpack.c.b16 %v2987, %v2986
      %v2995 = vpack.c.b16 %v2989, %v2988
      %v2996 = vpack.c.b16 %v2991, %v2990
      %v2997 = vpack.c.b16 %v2993, %v2992
      %v3006 = vunpack.c.l.b16 %v2293
      %v3007 = vunpack.c.l.b16 %v2294
      %v3008 = vunpack.c.l.b16 %v2295
      %v3009 = vunpack.c.l.b16 %v2296
      %v3010 = vunpack.c.l.b16 %v2297
      %v3011 = vunpack.c.l.b16 %v2298
      %v3012 = vunpack.c.l.b16 %v2299
      %v3013 = vunpack.c.l.b16 %v2300
      %v3014 = vpack.c.b16 %v3007, %v3006
      %v3015 = vpack.c.b16 %v3009, %v3008
      %v3016 = vpack.c.b16 %v3011, %v3010
      %v3017 = vpack.c.b16 %v3013, %v3012
      %3018 = vrot.lane.b32.xlu0 %v3014, 8
      %v3019 = vpop.permute.xlu0 %3018
      %3020 = vrot.lane.b32.xlu0 %v3015, 8
      %v3021 = vpop.permute.xlu0 %3020
      %3022 = vrot.lane.b32.xlu0 %v3016, 8
      %v3023 = vpop.permute.xlu0 %3022
      %3024 = vrot.lane.b32.xlu0 %v3017, 8
      %v3025 = vpop.permute.xlu0 %3024
      %3026 = vrot.lane.b32.xlu0 %v2485, 16
      %v3027 = vpop.permute.xlu0 %3026
      %3028 = vrot.lane.b32.xlu0 %v2486, 16
      %v3029 = vpop.permute.xlu0 %3028
      %3030 = vrot.lane.b32.xlu0 %v2487, 16
      %v3031 = vpop.permute.xlu0 %3030
      %3032 = vrot.lane.b32.xlu0 %v2488, 16
      %v3033 = vpop.permute.xlu0 %3032
      %3034 = vrot.lane.b32.xlu0 %v2505, 24
      %v3035 = vpop.permute.xlu0 %3034
      %3036 = vrot.lane.b32.xlu0 %v2506, 24
      %v3037 = vpop.permute.xlu0 %3036
      %3038 = vrot.lane.b32.xlu0 %v2507, 24
      %v3039 = vpop.permute.xlu0 %3038
      %3040 = vrot.lane.b32.xlu0 %v2508, 24
      %v3041 = vpop.permute.xlu0 %3040
      %v3044 = vsel %vm1454, %v2994, %v3019
      %v3047 = vsel %vm1454, %v2995, %v3021
      %v3050 = vsel %vm1454, %v2996, %v3023
      %v3053 = vsel %vm1454, %v2997, %v3025
      %v3055 = vsel %vm1472, %v3044, %v3027
      %v3057 = vsel %vm1472, %v3047, %v3029
      %v3059 = vsel %vm1472, %v3050, %v3031
      %v3061 = vsel %vm1472, %v3053, %v3033
      %v3063 = vsel %vm1490, %v3055, %v3035
      %v3065 = vsel %vm1490, %v3057, %v3037
      %v3067 = vsel %vm1490, %v3059, %v3039
      %v3069 = vsel %vm1490, %v3061, %v3041
      %s3070 = scalar_lea.vmem %s2, 32
      %v3071 = vld [vmem:[%s3070] sm:$0xf]
      %v3072 = vld [vmem:[%s3070 + $0x4] sm:$0xf]
      %v3073 = vld [vmem:[%s3070 + $0x8] sm:$0xf]
      %v3074 = vld [vmem:[%s3070 + $0xc] sm:$0xf]
      %v3079 = vunpack.c.l.b16 %v3071
      %v3080 = vunpack.c.l.b16 %v3072
      %v3081 = vunpack.c.l.b16 %v3073
      %v3082 = vunpack.c.l.b16 %v3074
      %v3083 = vpack.c.b16 %v3080, %v3079
      %v3084 = vpack.c.b16 %v3082, %v3081
      %v3087 = vsel %vm1508, %v3063, 0
      %v3089 = vsel %vm1508, %v3065, 0
      %v3091 = vsel %vm1508, %v3067, 0
      %v3093 = vsel %vm1508, %v3069, 0
      %3095 = vmatprep.subr.bf16.mxu0 0
      %3096 = vmatpush1.bf16.msra.mxu0 %v3083
      %3097 = vmatprep.subr.bf16.mxu0 0
      %3098 = vmatpush1.bf16.msra.mxu0 %v3084
      %3099 = vmatprep.subr.bf16.mxu0 0
      %3100 = vmatpush1.bf16.msra.mxu0 0
      %3101 = vmatprep.subr.bf16.mxu0 0
      %3102 = vmatpush1.bf16.msra.mxu0 0
      %3103 = vmatprep.subr.bf16.mxu0 0
      %3104 = vmatpush1.bf16.msra.mxu0 0
      %3105 = vmatprep.subr.bf16.mxu0 0
      %3106 = vmatpush1.bf16.msra.mxu0 0
      %3107 = vmatprep.subr.bf16.mxu0 0
      %3108 = vmatpush1.bf16.msra.mxu0 0
      %3109 = vmatprep.subr.bf16.mxu0 0
      %3110 = vmatpush1.bf16.msra.mxu0 0
      %3111 = vmatprep.subr.bf16.mxu0 0
      %3112 = vmatpush1.bf16.msra.mxu0 0
      %3113 = vmatprep.subr.bf16.mxu0 0
      %3114 = vmatpush1.bf16.msra.mxu0 0
      %3115 = vmatprep.subr.bf16.mxu0 0
      %3116 = vmatpush1.bf16.msra.mxu0 0
      %3117 = vmatprep.subr.bf16.mxu0 0
      %3118 = vmatpush1.bf16.msra.mxu0 0
      %3119 = vmatprep.subr.bf16.mxu0 0
      %3120 = vmatpush1.bf16.msra.mxu0 0
      %3121 = vmatprep.subr.bf16.mxu0 0
      %3122 = vmatpush1.bf16.msra.mxu0 0
      %3123 = vmatprep.subr.bf16.mxu0 0
      %3124 = vmatpush1.bf16.msra.mxu0 0
      %3125 = vmatprep.subr.bf16.mxu0 0
      %3126 = vmatpush1.bf16.msra.mxu0 0
      %3127 = vmatprep.mubr.bf16.mxu0 0
      %3128 = vmatmul.mubr.bf16.gmra.mrb[0].mxu0 %v3087
      %v3129 = vpop.f32.mrb[0].mxu0
      %v3130 = vadd.f32 0.0, %v3129
      %v3131 = vpop.f32.mrb[0].mxu0
      %v3132 = vpop.f32.mrb[0].mxu0
      %v3133 = vadd.f32 0.0, %v3132
      %v3134 = vpop.f32.mrb[0].mxu0
      %3135 = vmatprep.mubr.bf16.mxu0 0
      %3136 = vmatmul.mubr.bf16.gmra.mrb[0].mxu0 %v3089
      %v3137 = vpop.f32.mrb[0].mxu0
      %v3138 = vadd.f32 0.0, %v3137
      %v3139 = vpop.f32.mrb[0].mxu0
      %v3140 = vpop.f32.mrb[0].mxu0
      %v3141 = vadd.f32 0.0, %v3140
      %v3142 = vpop.f32.mrb[0].mxu0
      %3143 = vmatprep.mubr.bf16.mxu0 0
      %3144 = vmatmul.mubr.bf16.gmra.mrb[0].mxu0 %v3091
      %v3145 = vpop.f32.mrb[0].mxu0
      %v3146 = vadd.f32 0.0, %v3145
      %v3147 = vpop.f32.mrb[0].mxu0
      %v3148 = vpop.f32.mrb[0].mxu0
      %v3149 = vadd.f32 0.0, %v3148
      %v3150 = vpop.f32.mrb[0].mxu0
      %3151 = vmatprep.mubr.bf16.mxu0 0
      %3152 = vmatmul.mubr.bf16.gmra.mrb[0].mxu0 %v3093
      %v3153 = vpop.f32.mrb[0].mxu0
      %v3154 = vadd.f32 0.0, %v3153
      %v3155 = vpop.f32.mrb[0].mxu0
      %v3156 = vpop.f32.mrb[0].mxu0
      %v3157 = vadd.f32 0.0, %v3156
      %v3158 = vpop.f32.mrb[0].mxu0
      %3159 = vdwg.mxu0
      %v3160 = vpack.c.bf16 %v3130, %v3130
      %v3161 = vpack.c.bf16 %v3133, %v3133
      %v3162 = vpack.c.bf16 %v3138, %v3138
      %v3163 = vpack.c.bf16 %v3141, %v3141
      %v3164 = vpack.c.bf16 %v3146, %v3146
      %v3165 = vpack.c.bf16 %v3149, %v3149
      %v3166 = vpack.c.bf16 %v3154, %v3154
      %v3167 = vpack.c.bf16 %v3157, %v3157
      %s3168 = scalar_lea.vmem %s204, 64
      %3169 = vst.msk [vmem:[%s3168] sm:$0xf] %vm2690, %v3160
      %3170 = vst.msk [vmem:[%s3168 + $0x4] sm:$0xf] %vm2690, %v3161
      %3171 = vst.msk [vmem:[%s3168 + $0x8] sm:$0xf] %vm2690, %v3162
      %3172 = vst.msk [vmem:[%s3168 + $0xc] sm:$0xf] %vm2690, %v3163
      %3173 = vst.msk [vmem:[%s3168 + $0x10] sm:$0xf] %vm2690, %v3164
      %3174 = vst.msk [vmem:[%s3168 + $0x14] sm:$0xf] %vm2690, %v3165
      %3175 = vst.msk [vmem:[%s3168 + $0x18] sm:$0xf] %vm2690, %v3166
      %3176 = vst.msk [vmem:[%s3168 + $0x1c] sm:$0xf] %vm2690, %v3167
      %v3177 = vsel %vm1441, %v3130, 0.0
      %v3178 = vsel %vm1441, %v3133, 0.0
      %v3179 = vadd.f32 %v3177, %v3178
      %v3180 = vsel %vm1441, %v3138, 0.0
      %v3181 = vadd.f32 %v3179, %v3180
      %v3182 = vsel %vm1441, %v3141, 0.0
      %v3183 = vadd.f32 %v3181, %v3182
      %v3184 = vsel %vm1441, %v3146, 0.0
      %v3185 = vadd.f32 %v3183, %v3184
      %v3186 = vsel %vm1441, %v3149, 0.0
      %v3187 = vadd.f32 %v3185, %v3186
      %v3188 = vsel %vm1441, %v3154, 0.0
      %v3189 = vadd.f32 %v3187, %v3188
      %v3190 = vsel %vm1441, %v3157, 0.0
      %v3191 = vadd.f32 %v3189, %v3190
      %v3192 = vrot.slane %v3191, 4
      %v3193 = vadd.f32 %v3191, %v3192
      %v3194 = vrot.slane %v3193, 2
      %v3195 = vadd.f32 %v3193, %v3194
      %v3196 = vrot.slane %v3195, 1
      %v3197 = vadd.f32 %v3195, %v3196
      %v3198 = vadd.f32 %v2955, %v3197
      %v3199 = vmul.f32 %v3130, %v3130
      %v3200 = vmul.f32 %v3133, %v3133
      %v3201 = vmul.f32 %v3138, %v3138
      %v3202 = vmul.f32 %v3141, %v3141
      %v3203 = vmul.f32 %v3146, %v3146
      %v3204 = vmul.f32 %v3149, %v3149
      %v3205 = vmul.f32 %v3154, %v3154
      %v3206 = vmul.f32 %v3157, %v3157
      %v3207 = vsel %vm1441, %v3199, 0.0
      %v3208 = vsel %vm1441, %v3200, 0.0
      %v3209 = vadd.f32 %v3207, %v3208
      %v3210 = vsel %vm1441, %v3201, 0.0
      %v3211 = vadd.f32 %v3209, %v3210
      %v3212 = vsel %vm1441, %v3202, 0.0
      %v3213 = vadd.f32 %v3211, %v3212
      %v3214 = vsel %vm1441, %v3203, 0.0
      %v3215 = vadd.f32 %v3213, %v3214
      %v3216 = vsel %vm1441, %v3204, 0.0
      %v3217 = vadd.f32 %v3215, %v3216
      %v3218 = vsel %vm1441, %v3205, 0.0
      %v3219 = vadd.f32 %v3217, %v3218
      %v3220 = vsel %vm1441, %v3206, 0.0
      %v3221 = vadd.f32 %v3219, %v3220
      %v3222 = vrot.slane %v3221, 4
      %v3223 = vadd.f32 %v3221, %v3222
      %v3224 = vrot.slane %v3223, 2
      %v3225 = vadd.f32 %v3223, %v3224
      %v3226 = vrot.slane %v3225, 1
      %v3227 = vadd.f32 %v3225, %v3226
      %v3228 = vadd.f32 %v2985, %v3227
      %v3229 = vunpack.c.l.b16 %v2448
      %v3230 = vunpack.c.l.b16 %v2452
      %v3231 = vunpack.c.l.b16 %v2456
      %v3232 = vunpack.c.l.b16 %v2460
      %v3233 = vunpack.c.l.b16 %v2464
      %v3234 = vunpack.c.l.b16 %v2468
      %v3235 = vunpack.c.l.b16 %v2472
      %v3236 = vunpack.c.l.b16 %v2476
      %v3237 = vpack.c.b16 %v3230, %v3229
      %v3238 = vpack.c.b16 %v3232, %v3231
      %v3239 = vpack.c.b16 %v3234, %v3233
      %v3240 = vpack.c.b16 %v3236, %v3235
      %3241 = vrot.lane.b32.xlu0 %v2994, 8
      %v3242 = vpop.permute.xlu0 %3241
      %3243 = vrot.lane.b32.xlu0 %v2995, 8
      %v3244 = vpop.permute.xlu0 %3243
      %3245 = vrot.lane.b32.xlu0 %v2996, 8
      %v3246 = vpop.permute.xlu0 %3245
      %3247 = vrot.lane.b32.xlu0 %v2997, 8
      %v3248 = vpop.permute.xlu0 %3247
      %3249 = vrot.lane.b32.xlu0 %v2759, 16
      %v3250 = vpop.permute.xlu0 %3249
      %3251 = vrot.lane.b32.xlu0 %v2760, 16
      %v3252 = vpop.permute.xlu0 %3251
      %3253 = vrot.lane.b32.xlu0 %v2761, 16
      %v3254 = vpop.permute.xlu0 %3253
      %3255 = vrot.lane.b32.xlu0 %v2762, 16
      %v3256 = vpop.permute.xlu0 %3255
      %3257 = vrot.lane.b32.xlu0 %v2485, 24
      %v3258 = vpop.permute.xlu0 %3257
      %3259 = vrot.lane.b32.xlu0 %v2486, 24
      %v3260 = vpop.permute.xlu0 %3259
      %3261 = vrot.lane.b32.xlu0 %v2487, 24
      %v3262 = vpop.permute.xlu0 %3261
      %3263 = vrot.lane.b32.xlu0 %v2488, 24
      %v3264 = vpop.permute.xlu0 %3263
      %v3267 = vsel %vm1454, %v3237, %v3242
      %v3270 = vsel %vm1454, %v3238, %v3244
      %v3273 = vsel %vm1454, %v3239, %v3246
      %v3276 = vsel %vm1454, %v3240, %v3248
      %v3278 = vsel %vm1472, %v3267, %v3250
      %v3280 = vsel %vm1472, %v3270, %v3252
      %v3282 = vsel %vm1472, %v3273, %v3254
      %v3284 = vsel %vm1472, %v3276, %v3256
      %v3286 = vsel %vm1490, %v3278, %v3258
      %v3288 = vsel %vm1490, %v3280, %v3260
      %v3290 = vsel %vm1490, %v3282, %v3262
      %v3292 = vsel %vm1490, %v3284, %v3264
      %s3293 = scalar_lea.vmem %s2, 48
      %v3294 = vld [vmem:[%s3293] sm:$0xf]
      %v3295 = vld [vmem:[%s3293 + $0x4] sm:$0xf]
      %v3296 = vld [vmem:[%s3293 + $0x8] sm:$0xf]
      %v3297 = vld [vmem:[%s3293 + $0xc] sm:$0xf]
      %v3302 = vunpack.c.l.b16 %v3294
      %v3303 = vunpack.c.l.b16 %v3295
      %v3304 = vunpack.c.l.b16 %v3296
      %v3305 = vunpack.c.l.b16 %v3297
      %v3306 = vpack.c.b16 %v3303, %v3302
      %v3307 = vpack.c.b16 %v3305, %v3304
      %v3310 = vsel %vm1508, %v3286, 0
      %v3312 = vsel %vm1508, %v3288, 0
      %v3314 = vsel %vm1508, %v3290, 0
      %v3316 = vsel %vm1508, %v3292, 0
      %3318 = vmatprep.subr.bf16.mxu0 0
      %3319 = vmatpush1.bf16.msra.mxu0 %v3306
      %3320 = vmatprep.subr.bf16.mxu0 0
      %3321 = vmatpush1.bf16.msra.mxu0 %v3307
      %3322 = vmatprep.subr.bf16.mxu0 0
      %3323 = vmatpush1.bf16.msra.mxu0 0
      %3324 = vmatprep.subr.bf16.mxu0 0
      %3325 = vmatpush1.bf16.msra.mxu0 0
      %3326 = vmatprep.subr.bf16.mxu0 0
      %3327 = vmatpush1.bf16.msra.mxu0 0
      %3328 = vmatprep.subr.bf16.mxu0 0
      %3329 = vmatpush1.bf16.msra.mxu0 0
      %3330 = vmatprep.subr.bf16.mxu0 0
      %3331 = vmatpush1.bf16.msra.mxu0 0
      %3332 = vmatprep.subr.bf16.mxu0 0
      %3333 = vmatpush1.bf16.msra.mxu0 0
      %3334 = vmatprep.subr.bf16.mxu0 0
      %3335 = vmatpush1.bf16.msra.mxu0 0
      %3336 = vmatprep.subr.bf16.mxu0 0
      %3337 = vmatpush1.bf16.msra.mxu0 0
      %3338 = vmatprep.subr.bf16.mxu0 0
      %3339 = vmatpush1.bf16.msra.mxu0 0
      %3340 = vmatprep.subr.bf16.mxu0 0
      %3341 = vmatpush1.bf16.msra.mxu0 0
      %3342 = vmatprep.subr.bf16.mxu0 0
      %3343 = vmatpush1.bf16.msra.mxu0 0
      %3344 = vmatprep.subr.bf16.mxu0 0
      %3345 = vmatpush1.bf16.msra.mxu0 0
      %3346 = vmatprep.subr.bf16.mxu0 0
      %3347 = vmatpush1.bf16.msra.mxu0 0
      %3348 = vmatprep.subr.bf16.mxu0 0
      %3349 = vmatpush1.bf16.msra.mxu0 0
      %3350 = vmatprep.mubr.bf16.mxu0 0
      %3351 = vmatmul.mubr.bf16.gmra.mrb[0].mxu0 %v3310
      %v3352 = vpop.f32.mrb[0].mxu0
      %v3353 = vadd.f32 0.0, %v3352
      %v3354 = vpop.f32.mrb[0].mxu0
      %v3355 = vpop.f32.mrb[0].mxu0
      %v3356 = vadd.f32 0.0, %v3355
      %v3357 = vpop.f32.mrb[0].mxu0
      %3358 = vmatprep.mubr.bf16.mxu0 0
      %3359 = vmatmul.mubr.bf16.gmra.mrb[0].mxu0 %v3312
      %v3360 = vpop.f32.mrb[0].mxu0
      %v3361 = vadd.f32 0.0, %v3360
      %v3362 = vpop.f32.mrb[0].mxu0
      %v3363 = vpop.f32.mrb[0].mxu0
      %v3364 = vadd.f32 0.0, %v3363
      %v3365 = vpop.f32.mrb[0].mxu0
      %3366 = vmatprep.mubr.bf16.mxu0 0
      %3367 = vmatmul.mubr.bf16.gmra.mrb[0].mxu0 %v3314
      %v3368 = vpop.f32.mrb[0].mxu0
      %v3369 = vadd.f32 0.0, %v3368
      %v3370 = vpop.f32.mrb[0].mxu0
      %v3371 = vpop.f32.mrb[0].mxu0
      %v3372 = vadd.f32 0.0, %v3371
      %v3373 = vpop.f32.mrb[0].mxu0
      %3374 = vmatprep.mubr.bf16.mxu0 0
      %3375 = vmatmul.mubr.bf16.gmra.mrb[0].mxu0 %v3316
      %v3376 = vpop.f32.mrb[0].mxu0
      %v3377 = vadd.f32 0.0, %v3376
      %v3378 = vpop.f32.mrb[0].mxu0
      %v3379 = vpop.f32.mrb[0].mxu0
      %v3380 = vadd.f32 0.0, %v3379
      %v3381 = vpop.f32.mrb[0].mxu0
      %3382 = vdwg.mxu0
      %v3383 = vpack.c.bf16 %v3353, %v3353
      %v3384 = vpack.c.bf16 %v3356, %v3356
      %v3385 = vpack.c.bf16 %v3361, %v3361
      %v3386 = vpack.c.bf16 %v3364, %v3364
      %v3387 = vpack.c.bf16 %v3369, %v3369
      %v3388 = vpack.c.bf16 %v3372, %v3372
      %v3389 = vpack.c.bf16 %v3377, %v3377
      %v3390 = vpack.c.bf16 %v3380, %v3380
      %s3391 = scalar_lea.vmem %s204, 96
      %3392 = vst.msk [vmem:[%s3391] sm:$0xf] %vm2690, %v3383
      %3393 = vst.msk [vmem:[%s3391 + $0x4] sm:$0xf] %vm2690, %v3384
      %3394 = vst.msk [vmem:[%s3391 + $0x8] sm:$0xf] %vm2690, %v3385
      %3395 = vst.msk [vmem:[%s3391 + $0xc] sm:$0xf] %vm2690, %v3386
      %3396 = vst.msk [vmem:[%s3391 + $0x10] sm:$0xf] %vm2690, %v3387
      %3397 = vst.msk [vmem:[%s3391 + $0x14] sm:$0xf] %vm2690, %v3388
      %3398 = vst.msk [vmem:[%s3391 + $0x18] sm:$0xf] %vm2690, %v3389
      %3399 = vst.msk [vmem:[%s3391 + $0x1c] sm:$0xf] %vm2690, %v3390
      %v3400 = vsel %vm1441, %v3353, 0.0
      %v3401 = vsel %vm1441, %v3356, 0.0
      %v3402 = vadd.f32 %v3400, %v3401
      %v3403 = vsel %vm1441, %v3361, 0.0
      %v3404 = vadd.f32 %v3402, %v3403
      %v3405 = vsel %vm1441, %v3364, 0.0
      %v3406 = vadd.f32 %v3404, %v3405
      %v3407 = vsel %vm1441, %v3369, 0.0
      %v3408 = vadd.f32 %v3406, %v3407
      %v3409 = vsel %vm1441, %v3372, 0.0
      %v3410 = vadd.f32 %v3408, %v3409
      %v3411 = vsel %vm1441, %v3377, 0.0
      %v3412 = vadd.f32 %v3410, %v3411
      %v3413 = vsel %vm1441, %v3380, 0.0
      %v3414 = vadd.f32 %v3412, %v3413
      %v3415 = vrot.slane %v3414, 4
      %v3416 = vadd.f32 %v3414, %v3415
      %v3417 = vrot.slane %v3416, 2
      %v3418 = vadd.f32 %v3416, %v3417
      %v3419 = vrot.slane %v3418, 1
      %v3420 = vadd.f32 %v3418, %v3419
      %v3421 = vadd.f32 %v3198, %v3420
      %v3422 = vmul.f32 %v3353, %v3353
      %v3423 = vmul.f32 %v3356, %v3356
      %v3424 = vmul.f32 %v3361, %v3361
      %v3425 = vmul.f32 %v3364, %v3364
      %v3426 = vmul.f32 %v3369, %v3369
      %v3427 = vmul.f32 %v3372, %v3372
      %v3428 = vmul.f32 %v3377, %v3377
      %v3429 = vmul.f32 %v3380, %v3380
      %v3430 = vsel %vm1441, %v3422, 0.0
      %v3431 = vsel %vm1441, %v3423, 0.0
      %v3432 = vadd.f32 %v3430, %v3431
      %v3433 = vsel %vm1441, %v3424, 0.0
      %v3434 = vadd.f32 %v3432, %v3433
      %v3435 = vsel %vm1441, %v3425, 0.0
      %v3436 = vadd.f32 %v3434, %v3435
      %v3437 = vsel %vm1441, %v3426, 0.0
      %v3438 = vadd.f32 %v3436, %v3437
      %v3439 = vsel %vm1441, %v3427, 0.0
      %v3440 = vadd.f32 %v3438, %v3439
      %v3441 = vsel %vm1441, %v3428, 0.0
      %v3442 = vadd.f32 %v3440, %v3441
      %v3443 = vsel %vm1441, %v3429, 0.0
      %v3444 = vadd.f32 %v3442, %v3443
      %v3445 = vrot.slane %v3444, 4
      %v3446 = vadd.f32 %v3444, %v3445
      %v3447 = vrot.slane %v3446, 2
      %v3448 = vadd.f32 %v3446, %v3447
      %v3449 = vrot.slane %v3448, 1
      %v3450 = vadd.f32 %v3448, %v3449
      %v3451 = vadd.f32 %v3228, %v3450
      %vm3452 = vcmask 1040384
      %v3453 = vsel %vm3452, %v3421, %v3451
      %vm3454 = vcmask 25600
      %3455 = vst.msk [vmem:[%s208] sm:$0x3] %vm3454, %v3453
      %p3456 = scmp.lt.s32.totalorder %s16, 1
      %s3457 = scalar_select %p3456, %s16, 1
      %s3458 = smul.addr %s3457, 32
      %s3459 = smul.addr %s3458, 4
      %s3460 = scalar_lea.vmem %s3, %s3459
      %p3461 = scmp.lt.s32.totalorder %s16, 1
      %s3462 = scalar_select %p3461, %s16, 1
      %s3463 = smul.addr %s3462, 2
      %s3464 = scalar_lea.vmem %s4, %s3463
      // Predicated region
      $region33: #{unet_skip_block_forward.2} parent=31 // pred_check
        %p3465 = pneg %p102
      $region34: #{unet_skip_block_forward.2} parent=31 // pred_check_branch
        %3467 = sbr.rel (%p3465) target = $region36
      $region35: #{unet_skip_block_forward.2} parent=31 // pred_region
        _
      $region36: #{unet_skip_block_forward.2} parent=31 // pred_fallthru
        _
      // Predicated region
      $region37: #{unet_skip_block_forward.2} parent=31 // pred_check
        %p3468 = pneg %p128
      $region38: #{unet_skip_block_forward.2} parent=31 // pred_check_branch
        %3470 = sbr.rel (%p3468) target = $region40
      $region39: #{unet_skip_block_forward.2} parent=31 // pred_region
        _
      $region40: #{unet_skip_block_forward.2} parent=31 // pred_fallthru
        _
    $region32: #{unet_skip_block_forward.2} parent=5 // pred_fallthru
      _
    %p3471 = scmp.le.s32.totalorder 2, %s11
    // Predicated region
    $region41: #{unet_skip_block_forward.2} parent=5 // pred_check
      %p3472 = pneg %p3471
    $region42: #{unet_skip_block_forward.2} parent=5 // pred_check_branch
      %3474 = sbr.rel (%p3472) target = $region44
    $region43: #{unet_skip_block_forward.2} parent=5 // pred_region
      %s3475 = ssub.s32 %s11, 2
      // Predicated region
      $region45: #{unet_skip_block_forward.2} parent=43 // pred_check
        %p3476 = pneg %p108
      $region46: #{unet_skip_block_forward.2} parent=43 // pred_check_branch
        %3478 = sbr.rel (%p3476) target = $region48
      $region47: #{unet_skip_block_forward.2} parent=43 // pred_region
        %p3479 = scmp.lt.s32.totalorder %s17, 1
        %s3480 = scalar_select %p3479, %s17, 1
        %s3481 = smul.addr %s3480, 32
        %s3482 = smul.addr %s3481, 4
        %s3483 = scalar_lea.vmem %s3, %s3482
      $region48: #{unet_skip_block_forward.2} parent=43 // pred_fallthru
        _
      // Predicated region
      $region49: #{unet_skip_block_forward.2} parent=43 // pred_check
        %p3484 = pneg %p134
      $region50: #{unet_skip_block_forward.2} parent=43 // pred_check_branch
        %3486 = sbr.rel (%p3484) target = $region52
      $region51: #{unet_skip_block_forward.2} parent=43 // pred_region
        %p3487 = scmp.lt.s32.totalorder %s17, 1
        %s3488 = scalar_select %p3487, %s17, 1
        %s3489 = smul.addr %s3488, 2
        %s3490 = scalar_lea.vmem %s4, %s3489
      $region52: #{unet_skip_block_forward.2} parent=43 // pred_fallthru
        _
    $region44: #{unet_skip_block_forward.2} parent=5 // pred_fallthru
      _
  $region6: #{unet_skip_block_forward.2} parent=0 // loop_footer
    %s15 = sadd.s32 1, %s11
  $region7: #{unet_skip_block_forward.2} parent=0 // loop_footer_branch
    %10 = sbr.rel target = $region3
  $region8: #{unet_skip_block_forward.2} parent=0 // loop_exit
    _

</llo_original>
